<compile_context>
chip_gen: v7x
topology: tpu7x:2x2x1
jax: 0.10.0
libtpu: 0.0.40
codegen_flags: <defaults>
</compile_context>

<pallas_src>
import math

import jax
import jax.numpy as jnp
from jax import lax
from jax.experimental import pallas as pl
from jax.experimental.pallas import tpu as pltpu

# ---------------- small BERT config (klue/bert-base scaled down) -------------
VOCAB = 128
MAX_POS = 32
TYPE_VOCAB = 2
HIDDEN = 32
HEADS = 2
HEAD_DIM = HIDDEN // HEADS
LAYERS = 2
INTER = 64
LN_EPS = 1e-12


# ------------------------------ fused encoder kernel -------------------------
def _layernorm(x, g, b):
    mean = jnp.mean(x, axis=-1, keepdims=True)
    var = jnp.mean(jnp.square(x - mean), axis=-1, keepdims=True)
    return (x - mean) * lax.rsqrt(var + LN_EPS) * g + b


def _gelu(x):
    return 0.5 * x * (1.0 + lax.erf(x * (1.0 / math.sqrt(2.0))))


def _encoder_kernel(h0_ref, bias_ref, sel_ref, emb_g_ref, emb_b_ref,
                    wq_ref, wk_ref, wv_ref, bq_ref, bk_ref, bv_ref,
                    woh_ref, bo_ref, ln1g_ref, ln1b_ref,
                    wi_ref, bi_ref, wo2_ref, bo2_ref, ln2g_ref, ln2b_ref,
                    poolw_ref, poolb_ref, out_ref):
    """Single grid step: whole batch (folded onto sublanes) through the full stack."""
    x = h0_ref[...]          # (T, H)   f32, T = B*S, summed embeddings
    bias = bias_ref[...]     # (T, T)   f32, block-diag batch mask + padding mask
    t = x.shape[0]

    # Embedding LayerNorm.
    h = _layernorm(x, emb_g_ref[...], emb_b_ref[...])

    scale = 1.0 / math.sqrt(HEAD_DIM)
    dn = (((1,), (1,)), ((), ()))   # contract last axis of both operands (q . k)

    for l in range(LAYERS):          # static unroll (LAYERS is tiny)
        # Accumulate attention output; start from the (broadcast) output bias.
        attn = jnp.broadcast_to(bo_ref[l], (t, HIDDEN))
        for hd in range(HEADS):
            # Per-head projections use pre-split weights -> no lane slicing.
            q = jnp.dot(h, wq_ref[l, hd],
                        preferred_element_type=jnp.float32) + bq_ref[l, hd]
            k = jnp.dot(h, wk_ref[l, hd],
                        preferred_element_type=jnp.float32) + bk_ref[l, hd]
            v = jnp.dot(h, wv_ref[l, hd],
                        preferred_element_type=jnp.float32) + bv_ref[l, hd]
            # scores / softmax fully in f32 (bias handles padding + batch blocks).
            logits = lax.dot_general(q, k, dn,
                                     preferred_element_type=jnp.float32) * scale + bias
            m = jnp.max(logits, axis=-1, keepdims=True)
            p = jnp.exp(logits - m)
            p = p * pl.reciprocal(jnp.sum(p, axis=-1, keepdims=True), approx=True)
            ctx = jnp.dot(p, v, preferred_element_type=jnp.float32)       # (T, dh)
            # Per-head slice of the output projection (host-sliced weight).
            attn = attn + jnp.dot(ctx, woh_ref[l, hd],
                                  preferred_element_type=jnp.float32)

        # residual + LayerNorm (fused)
        h = _layernorm(attn + h, ln1g_ref[l], ln1b_ref[l])

        # FFN: GELU intermediate + output projection
        inter = _gelu(jnp.dot(h, wi_ref[l],
                              preferred_element_type=jnp.float32) + bi_ref[l])
        ffn = jnp.dot(inter, wo2_ref[l],
                      preferred_element_type=jnp.float32) + bo2_ref[l]
        h = _layernorm(ffn + h, ln2g_ref[l], ln2b_ref[l])

    # Pooler: gather CLS rows with a one-hot selection matmul (no sublane extracts),
    # then tanh(W_pool @ cls + b_pool). Only (B, HIDDEN) is written back.
    cls = jnp.dot(sel_ref[...], h, preferred_element_type=jnp.float32)    # (B, H)
    pooled = jnp.tanh(jnp.dot(cls, poolw_ref[...],
                              preferred_element_type=jnp.float32) + poolb_ref[...])
    out_ref[...] = pooled


# ------------------------------ parameter init -------------------------------
def init_encoder_params(key):
    # TODO(synk): pretrained 'klue/bert-base' weights are not loaded; params are
    # synthetic deterministic initializations (dropout is identity / eval mode).
    counter = [0]

    def nk():
        counter[0] += 1
        return jax.random.fold_in(key, counter[0])

    def w(shape, std=0.02):
        return jax.random.normal(nk(), shape, jnp.float32) * std

    def zeros(shape):
        return jnp.zeros(shape, jnp.float32)

    def ones(shape):
        return jnp.ones(shape, jnp.float32)

    return {
        # embeddings (gathered / summed in plain JAX)
        "word_emb": w((VOCAB, HIDDEN)),
        "pos_emb": w((MAX_POS, HIDDEN)),
        "type_emb": w((TYPE_VOCAB, HIDDEN)),
        "emb_ln_g": ones((1, HIDDEN)),
        "emb_ln_b": zeros((1, HIDDEN)),
        # attention weights pre-split per (layer, head): no in-kernel lane slicing
        "wq": w((LAYERS, HEADS, HIDDEN, HEAD_DIM)),
        "wk": w((LAYERS, HEADS, HIDDEN, HEAD_DIM)),
        "wv": w((LAYERS, HEADS, HIDDEN, HEAD_DIM)),
        "bq": zeros((LAYERS, HEADS, 1, HEAD_DIM)),
        "bk": zeros((LAYERS, HEADS, 1, HEAD_DIM)),
        "bv": zeros((LAYERS, HEADS, 1, HEAD_DIM)),
        "wo_h": w((LAYERS, HEADS, HEAD_DIM, HIDDEN)),   # per-head rows of Wo
        "bo": zeros((LAYERS, 1, HIDDEN)),
        "ln1_g": ones((LAYERS, 1, HIDDEN)),
        "ln1_b": zeros((LAYERS, 1, HIDDEN)),
        "wi": w((LAYERS, HIDDEN, INTER)),
        "bi": zeros((LAYERS, 1, INTER)),
        "wo2": w((LAYERS, INTER, HIDDEN)),
        "bo2": zeros((LAYERS, 1, HIDDEN)),
        "ln2_g": ones((LAYERS, 1, HIDDEN)),
        "ln2_b": zeros((LAYERS, 1, HIDDEN)),
        "pool_w": w((HIDDEN, HIDDEN)),
        "pool_b": zeros((1, HIDDEN)),
    }


# ------------------------------ BERT forward ---------------------------------
def bert_forward(params, input_ids, attn_mask):
    """Returns pooler_output: (B, HIDDEN)."""
    b, s = input_ids.shape
    t = b * s

    # Embedding gather + sum (plain-JAX glue; token_type_ids = 0), batch folded
    # onto the row/sublane axis.
    word = jnp.take(params["word_emb"], input_ids, axis=0)           # (B, S, H)
    pos = params["pos_emb"][:s][None, :, :]                           # (1, S, H)
    typ = params["type_emb"][0][None, None, :]                        # (1, 1, H)
    h0 = (word + pos + typ).astype(jnp.float32).reshape(t, HIDDEN)    # (T, H)

    # Full (T, T) additive attention bias, pre-broadcast to the logits shape:
    # 0 where query/key share a batch element AND key is not padded, else -1e4
    # (matches HF BERT's extended attention mask; also blocks cross-batch attn).
    rows = jnp.arange(t)
    same_batch = (rows[:, None] // s) == (rows[None, :] // s)
    key_ok = attn_mask.astype(bool).reshape(t)[None, :]
    bias = jnp.where(same_batch & key_ok, 0.0, -10000.0).astype(jnp.float32)

    # One-hot CLS-row selector: sel @ h picks rows {0, S, 2S, ...} on the MXU.
    sel = jnp.zeros((b, t), jnp.float32).at[jnp.arange(b), jnp.arange(b) * s].set(1.0)

    def _spec(shape):
        nd = len(shape)
        return pl.BlockSpec(shape, lambda i, _n=nd: (0,) * _n)

    in_specs = [
        _spec((t, HIDDEN)),                               # h0
        _spec((t, t)),                                    # attention bias
        _spec((b, t)),                                    # CLS selector
        _spec((1, HIDDEN)), _spec((1, HIDDEN)),           # emb LN
        _spec((LAYERS, HEADS, HIDDEN, HEAD_DIM)),         # wq
        _spec((LAYERS, HEADS, HIDDEN, HEAD_DIM)),         # wk
        _spec((LAYERS, HEADS, HIDDEN, HEAD_DIM)),         # wv
        _spec((LAYERS, HEADS, 1, HEAD_DIM)),              # bq
        _spec((LAYERS, HEADS, 1, HEAD_DIM)),              # bk
        _spec((LAYERS, HEADS, 1, HEAD_DIM)),              # bv
        _spec((LAYERS, HEADS, HEAD_DIM, HIDDEN)),         # wo_h
        _spec((LAYERS, 1, HIDDEN)),                       # bo
        _spec((LAYERS, 1, HIDDEN)),                       # ln1_g
        _spec((LAYERS, 1, HIDDEN)),                       # ln1_b
        _spec((LAYERS, HIDDEN, INTER)),                   # wi
        _spec((LAYERS, 1, INTER)),                        # bi
        _spec((LAYERS, INTER, HIDDEN)),                   # wo2
        _spec((LAYERS, 1, HIDDEN)),                       # bo2
        _spec((LAYERS, 1, HIDDEN)),                       # ln2_g
        _spec((LAYERS, 1, HIDDEN)),                       # ln2_b
        _spec((HIDDEN, HIDDEN)),                          # pool_w
        _spec((1, HIDDEN)),                               # pool_b
    ]

    pooled = pl.pallas_call(
        _encoder_kernel,
        out_shape=jax.ShapeDtypeStruct((b, HIDDEN), jnp.float32),
        grid=(1,),                                        # single pipeline step
        in_specs=in_specs,
        out_specs=pl.BlockSpec((b, HIDDEN), lambda i: (0, 0)),
        compiler_params=pltpu.CompilerParams(
            dimension_semantics=("arbitrary",)),
    )(h0, bias, sel,
      params["emb_ln_g"], params["emb_ln_b"],
      params["wq"], params["wk"], params["wv"],
      params["bq"], params["bk"], params["bv"],
      params["wo_h"], params["bo"],
      params["ln1_g"], params["ln1_b"],
      params["wi"], params["bi"],
      params["wo2"], params["bo2"],
      params["ln2_g"], params["ln2_b"],
      params["pool_w"], params["pool_b"])

    return pooled


_bert_forward_jit = jax.jit(bert_forward)


# ---------------------------- KobertBiEncoder --------------------------------
class KobertBiEncoder:
    """Two independently-parameterized BERT encoders; forward picks one."""

    def __init__(self, key):
        kp, kq = jax.random.split(key)
        self.passage_params = init_encoder_params(kp)
        self.query_params = init_encoder_params(kq)

    def __call__(self, x, attn_mask, type="passage"):
        assert type in ("passage", "query"), \
            "type should be either 'passage' or 'query'"
        params = self.passage_params if type == "passage" else self.query_params
        return _bert_forward_jit(params, x, attn_mask)


# ------------------------------------ main ------------------------------------
if __name__ == "__main__":
    root = jax.random.PRNGKey(0)
    k_model, k_ids = jax.random.split(root)

    model = KobertBiEncoder(k_model)

    B, S = 2, 8
    input_ids = jax.random.randint(k_ids, (B, S), 0, VOCAB, dtype=jnp.int32)
    attn_mask = jnp.ones((B, S), jnp.int32).at[1, 6:].set(0)  # pad tail of row 1

    p_out = model(input_ids, attn_mask, type="passage")
    q_out = model(input_ids, attn_mask, type="query")
    jax.block_until_ready((p_out, q_out))

    assert p_out.shape == (B, HIDDEN) and p_out.dtype == jnp.float32
    assert q_out.shape == (B, HIDDEN) and q_out.dtype == jnp.float32
    assert bool(jnp.all(jnp.isfinite(p_out))) and bool(jnp.all(jnp.isfinite(q_out)))
    print("KERNEL_OK")
</pallas_src>

<mosaic_0001>
module attributes {stable_mosaic.version = 11 : i64} {
  func.func @_encoder_kernel(%arg0: i32, %arg1: memref<16x32xf32, #tpu.memory_space<vmem>>, %arg2: memref<16x16xf32, #tpu.memory_space<vmem>>, %arg3: memref<2x16xf32, #tpu.memory_space<vmem>>, %arg4: memref<1x32xf32, #tpu.memory_space<vmem>>, %arg5: memref<1x32xf32, #tpu.memory_space<vmem>>, %arg6: memref<2x2x32x16xf32, #tpu.memory_space<vmem>>, %arg7: memref<2x2x32x16xf32, #tpu.memory_space<vmem>>, %arg8: memref<2x2x32x16xf32, #tpu.memory_space<vmem>>, %arg9: memref<2x2x1x16xf32, #tpu.memory_space<vmem>>, %arg10: memref<2x2x1x16xf32, #tpu.memory_space<vmem>>, %arg11: memref<2x2x1x16xf32, #tpu.memory_space<vmem>>, %arg12: memref<2x2x16x32xf32, #tpu.memory_space<vmem>>, %arg13: memref<2x1x32xf32, #tpu.memory_space<vmem>>, %arg14: memref<2x1x32xf32, #tpu.memory_space<vmem>>, %arg15: memref<2x1x32xf32, #tpu.memory_space<vmem>>, %arg16: memref<2x32x64xf32, #tpu.memory_space<vmem>>, %arg17: memref<2x1x64xf32, #tpu.memory_space<vmem>>, %arg18: memref<2x64x32xf32, #tpu.memory_space<vmem>>, %arg19: memref<2x1x32xf32, #tpu.memory_space<vmem>>, %arg20: memref<2x1x32xf32, #tpu.memory_space<vmem>>, %arg21: memref<2x1x32xf32, #tpu.memory_space<vmem>>, %arg22: memref<32x32xf32, #tpu.memory_space<vmem>>, %arg23: memref<1x32xf32, #tpu.memory_space<vmem>>, %arg24: memref<2x32xf32, #tpu.memory_space<vmem>>) attributes {dimension_semantics = [#tpu.dimension_semantics<arbitrary>], iteration_bounds = array<i64: 1>, scalar_prefetch = 0 : i64, scratch_operands = 0 : i64, tpu.core_type = #tpu.core_type<tc>, window_params = [{pipeline_mode = #tpu.pipeline_mode<synchronous>, transform_indices = @transform_0, window_bounds = array<i64: 16, 32>}, {pipeline_mode = #tpu.pipeline_mode<synchronous>, transform_indices = @transform_1, window_bounds = array<i64: 16, 16>}, {pipeline_mode = #tpu.pipeline_mode<synchronous>, transform_indices = @transform_2, window_bounds = array<i64: 2, 16>}, {pipeline_mode = #tpu.pipeline_mode<synchronous>, transform_indices = @transform_3, window_bounds = array<i64: 1, 32>}, {pipeline_mode = #tpu.pipeline_mode<synchronous>, transform_indices = @transform_4, window_bounds = array<i64: 1, 32>}, {pipeline_mode = #tpu.pipeline_mode<synchronous>, transform_indices = @transform_5, window_bounds = array<i64: 2, 2, 32, 16>}, {pipeline_mode = #tpu.pipeline_mode<synchronous>, transform_indices = @transform_6, window_bounds = array<i64: 2, 2, 32, 16>}, {pipeline_mode = #tpu.pipeline_mode<synchronous>, transform_indices = @transform_7, window_bounds = array<i64: 2, 2, 32, 16>}, {pipeline_mode = #tpu.pipeline_mode<synchronous>, transform_indices = @transform_8, window_bounds = array<i64: 2, 2, 1, 16>}, {pipeline_mode = #tpu.pipeline_mode<synchronous>, transform_indices = @transform_9, window_bounds = array<i64: 2, 2, 1, 16>}, {pipeline_mode = #tpu.pipeline_mode<synchronous>, transform_indices = @transform_10, window_bounds = array<i64: 2, 2, 1, 16>}, {pipeline_mode = #tpu.pipeline_mode<synchronous>, transform_indices = @transform_11, window_bounds = array<i64: 2, 2, 16, 32>}, {pipeline_mode = #tpu.pipeline_mode<synchronous>, transform_indices = @transform_12, window_bounds = array<i64: 2, 1, 32>}, {pipeline_mode = #tpu.pipeline_mode<synchronous>, transform_indices = @transform_13, window_bounds = array<i64: 2, 1, 32>}, {pipeline_mode = #tpu.pipeline_mode<synchronous>, transform_indices = @transform_14, window_bounds = array<i64: 2, 1, 32>}, {pipeline_mode = #tpu.pipeline_mode<synchronous>, transform_indices = @transform_15, window_bounds = array<i64: 2, 32, 64>}, {pipeline_mode = #tpu.pipeline_mode<synchronous>, transform_indices = @transform_16, window_bounds = array<i64: 2, 1, 64>}, {pipeline_mode = #tpu.pipeline_mode<synchronous>, transform_indices = @transform_17, window_bounds = array<i64: 2, 64, 32>}, {pipeline_mode = #tpu.pipeline_mode<synchronous>, transform_indices = @transform_18, window_bounds = array<i64: 2, 1, 32>}, {pipeline_mode = #tpu.pipeline_mode<synchronous>, transform_indices = @transform_19, window_bounds = array<i64: 2, 1, 32>}, {pipeline_mode = #tpu.pipeline_mode<synchronous>, transform_indices = @transform_20, window_bounds = array<i64: 2, 1, 32>}, {pipeline_mode = #tpu.pipeline_mode<synchronous>, transform_indices = @transform_21, window_bounds = array<i64: 32, 32>}, {pipeline_mode = #tpu.pipeline_mode<synchronous>, transform_indices = @transform_22, window_bounds = array<i64: 1, 32>}, {pipeline_mode = #tpu.pipeline_mode<synchronous>, transform_indices = @transform_23, window_bounds = array<i64: 2, 32>}]} {
    %c0 = arith.constant 0 : index
    %c0_0 = arith.constant 0 : index
    %0 = vector.load %arg1[%c0, %c0_0] : memref<16x32xf32, #tpu.memory_space<vmem>>, vector<16x32xf32>
    %c0_1 = arith.constant 0 : index
    %c0_2 = arith.constant 0 : index
    %1 = vector.load %arg2[%c0_1, %c0_2] : memref<16x16xf32, #tpu.memory_space<vmem>>, vector<16x16xf32>
    %c0_3 = arith.constant 0 : index
    %c0_4 = arith.constant 0 : index
    %2 = vector.load %arg4[%c0_3, %c0_4] : memref<1x32xf32, #tpu.memory_space<vmem>>, vector<1x32xf32>
    %c0_5 = arith.constant 0 : index
    %c0_6 = arith.constant 0 : index
    %3 = vector.load %arg5[%c0_5, %c0_6] : memref<1x32xf32, #tpu.memory_space<vmem>>, vector<1x32xf32>
    %cst = arith.constant dense<0.000000e+00> : vector<16xf32>
    %4 = vector.multi_reduction <add>, %0, %cst [1] : vector<16x32xf32> to vector<16xf32>
    %5 = vector.shape_cast %4 : vector<16xf32> to vector<16x1xf32>
    %cst_7 = arith.constant 3.200000e+01 : f32
    %6 = vector.broadcast %cst_7 : f32 to vector<16x1xf32>
    %7 = arith.divf %5, %6 : vector<16x1xf32>
    %8 = vector.broadcast %7 : vector<16x1xf32> to vector<16x32xf32>
    %9 = arith.subf %0, %8 : vector<16x32xf32>
    %10 = arith.mulf %9, %9 : vector<16x32xf32>
    %cst_8 = arith.constant dense<0.000000e+00> : vector<16xf32>
    %11 = vector.multi_reduction <add>, %10, %cst_8 [1] : vector<16x32xf32> to vector<16xf32>
    %12 = vector.shape_cast %11 : vector<16xf32> to vector<16x1xf32>
    %cst_9 = arith.constant 3.200000e+01 : f32
    %13 = vector.broadcast %cst_9 : f32 to vector<16x1xf32>
    %14 = arith.divf %12, %13 : vector<16x1xf32>
    %15 = vector.broadcast %7 : vector<16x1xf32> to vector<16x32xf32>
    %16 = arith.subf %0, %15 : vector<16x32xf32>
    %cst_10 = arith.constant 9.99999996E-13 : f32
    %17 = vector.broadcast %cst_10 : f32 to vector<16x1xf32>
    %18 = arith.addf %14, %17 : vector<16x1xf32>
    %19 = math.rsqrt %18 : vector<16x1xf32>
    %20 = vector.broadcast %19 : vector<16x1xf32> to vector<16x32xf32>
    %21 = arith.mulf %16, %20 : vector<16x32xf32>
    %22 = vector.broadcast %2 : vector<1x32xf32> to vector<16x32xf32>
    %23 = arith.mulf %21, %22 : vector<16x32xf32>
    %24 = vector.broadcast %3 : vector<1x32xf32> to vector<16x32xf32>
    %25 = arith.addf %23, %24 : vector<16x32xf32>
    %c0_11 = arith.constant 0 : index
    %c0_12 = arith.constant 0 : index
    %c0_13 = arith.constant 0 : index
    %26 = vector.load %arg13[%c0_11, %c0_12, %c0_13] : memref<2x1x32xf32, #tpu.memory_space<vmem>>, vector<1x1x32xf32>
    %27 = vector.shape_cast %26 : vector<1x1x32xf32> to vector<1x32xf32>
    %28 = vector.shape_cast %27 : vector<1x32xf32> to vector<1x32xf32>
    %29 = vector.broadcast %28 : vector<1x32xf32> to vector<16x32xf32>
    %c0_14 = arith.constant 0 : index
    %c0_15 = arith.constant 0 : index
    %c0_16 = arith.constant 0 : index
    %c0_17 = arith.constant 0 : index
    %30 = vector.load %arg6[%c0_14, %c0_15, %c0_16, %c0_17] : memref<2x2x32x16xf32, #tpu.memory_space<vmem>>, vector<1x1x32x16xf32>
    %31 = vector.shape_cast %30 : vector<1x1x32x16xf32> to vector<32x16xf32>
    %cst_18 = arith.constant dense<0.000000e+00> : vector<16x16xf32>
    %32 = tpu.matmul %25, %31, %cst_18 {dimension_numbers = #tpu.dot_dimension_numbers<[1], [0], [0], [1], [0, 0, 1, 1], [], []>} : vector<16x32xf32>, vector<32x16xf32>, vector<16x16xf32> -> vector<16x16xf32>
    %c0_19 = arith.constant 0 : index
    %c0_20 = arith.constant 0 : index
    %c0_21 = arith.constant 0 : index
    %c0_22 = arith.constant 0 : index
    %33 = vector.load %arg9[%c0_19, %c0_20, %c0_21, %c0_22] : memref<2x2x1x16xf32, #tpu.memory_space<vmem>>, vector<1x1x1x16xf32>
    %34 = vector.shape_cast %33 : vector<1x1x1x16xf32> to vector<1x16xf32>
    %35 = vector.broadcast %34 : vector<1x16xf32> to vector<16x16xf32>
    %36 = arith.addf %32, %35 : vector<16x16xf32>
    %c0_23 = arith.constant 0 : index
    %c0_24 = arith.constant 0 : index
    %c0_25 = arith.constant 0 : index
    %c0_26 = arith.constant 0 : index
    %37 = vector.load %arg7[%c0_23, %c0_24, %c0_25, %c0_26] : memref<2x2x32x16xf32, #tpu.memory_space<vmem>>, vector<1x1x32x16xf32>
    %38 = vector.shape_cast %37 : vector<1x1x32x16xf32> to vector<32x16xf32>
    %cst_27 = arith.constant dense<0.000000e+00> : vector<16x16xf32>
    %39 = tpu.matmul %25, %38, %cst_27 {dimension_numbers = #tpu.dot_dimension_numbers<[1], [0], [0], [1], [0, 0, 1, 1], [], []>} : vector<16x32xf32>, vector<32x16xf32>, vector<16x16xf32> -> vector<16x16xf32>
    %c0_28 = arith.constant 0 : index
    %c0_29 = arith.constant 0 : index
    %c0_30 = arith.constant 0 : index
    %c0_31 = arith.constant 0 : index
    %40 = vector.load %arg10[%c0_28, %c0_29, %c0_30, %c0_31] : memref<2x2x1x16xf32, #tpu.memory_space<vmem>>, vector<1x1x1x16xf32>
    %41 = vector.shape_cast %40 : vector<1x1x1x16xf32> to vector<1x16xf32>
    %42 = vector.broadcast %41 : vector<1x16xf32> to vector<16x16xf32>
    %43 = arith.addf %39, %42 : vector<16x16xf32>
    %c0_32 = arith.constant 0 : index
    %c0_33 = arith.constant 0 : index
    %c0_34 = arith.constant 0 : index
    %c0_35 = arith.constant 0 : index
    %44 = vector.load %arg8[%c0_32, %c0_33, %c0_34, %c0_35] : memref<2x2x32x16xf32, #tpu.memory_space<vmem>>, vector<1x1x32x16xf32>
    %45 = vector.shape_cast %44 : vector<1x1x32x16xf32> to vector<32x16xf32>
    %cst_36 = arith.constant dense<0.000000e+00> : vector<16x16xf32>
    %46 = tpu.matmul %25, %45, %cst_36 {dimension_numbers = #tpu.dot_dimension_numbers<[1], [0], [0], [1], [0, 0, 1, 1], [], []>} : vector<16x32xf32>, vector<32x16xf32>, vector<16x16xf32> -> vector<16x16xf32>
    %c0_37 = arith.constant 0 : index
    %c0_38 = arith.constant 0 : index
    %c0_39 = arith.constant 0 : index
    %c0_40 = arith.constant 0 : index
    %47 = vector.load %arg11[%c0_37, %c0_38, %c0_39, %c0_40] : memref<2x2x1x16xf32, #tpu.memory_space<vmem>>, vector<1x1x1x16xf32>
    %48 = vector.shape_cast %47 : vector<1x1x1x16xf32> to vector<1x16xf32>
    %49 = vector.broadcast %48 : vector<1x16xf32> to vector<16x16xf32>
    %50 = arith.addf %46, %49 : vector<16x16xf32>
    %cst_41 = arith.constant dense<0.000000e+00> : vector<16x16xf32>
    %51 = tpu.matmul %36, %43, %cst_41 {dimension_numbers = #tpu.dot_dimension_numbers<[1], [1], [0], [0], [0, 0, 1, 0], [], []>} : vector<16x16xf32>, vector<16x16xf32>, vector<16x16xf32> -> vector<16x16xf32>
    %cst_42 = arith.constant 2.500000e-01 : f32
    %52 = vector.broadcast %cst_42 : f32 to vector<16x16xf32>
    %53 = arith.mulf %51, %52 : vector<16x16xf32>
    %54 = arith.addf %53, %1 : vector<16x16xf32>
    %cst_43 = arith.constant dense<0xFF800000> : vector<16xf32>
    %55 = vector.multi_reduction <maximumf>, %54, %cst_43 [1] : vector<16x16xf32> to vector<16xf32>
    %56 = vector.shape_cast %55 : vector<16xf32> to vector<16x1xf32>
    %57 = vector.broadcast %56 : vector<16x1xf32> to vector<16x16xf32>
    %58 = arith.subf %54, %57 : vector<16x16xf32>
    %59 = math.exp %58 : vector<16x16xf32>
    %cst_44 = arith.constant dense<0.000000e+00> : vector<16xf32>
    %60 = vector.multi_reduction <add>, %59, %cst_44 [1] : vector<16x16xf32> to vector<16xf32>
    %61 = vector.shape_cast %60 : vector<16xf32> to vector<16x1xf32>
    %62 = tpu.reciprocal %61 {approx = true} : vector<16x1xf32> -> vector<16x1xf32>
    %63 = vector.broadcast %62 : vector<16x1xf32> to vector<16x16xf32>
    %64 = arith.mulf %59, %63 : vector<16x16xf32>
    %cst_45 = arith.constant dense<0.000000e+00> : vector<16x16xf32>
    %65 = tpu.matmul %64, %50, %cst_45 {dimension_numbers = #tpu.dot_dimension_numbers<[1], [0], [0], [1], [0, 0, 1, 1], [], []>} : vector<16x16xf32>, vector<16x16xf32>, vector<16x16xf32> -> vector<16x16xf32>
    %c0_46 = arith.constant 0 : index
    %c0_47 = arith.constant 0 : index
    %c0_48 = arith.constant 0 : index
    %c0_49 = arith.constant 0 : index
    %66 = vector.load %arg12[%c0_46, %c0_47, %c0_48, %c0_49] : memref<2x2x16x32xf32, #tpu.memory_space<vmem>>, vector<1x1x16x32xf32>
    %67 = vector.shape_cast %66 : vector<1x1x16x32xf32> to vector<16x32xf32>
    %cst_50 = arith.constant dense<0.000000e+00> : vector<16x32xf32>
    %68 = tpu.matmul %65, %67, %cst_50 {dimension_numbers = #tpu.dot_dimension_numbers<[1], [0], [0], [1], [0, 0, 1, 1], [], []>} : vector<16x16xf32>, vector<16x32xf32>, vector<16x32xf32> -> vector<16x32xf32>
    %69 = arith.addf %29, %68 : vector<16x32xf32>
    %c0_51 = arith.constant 0 : index
    %c1 = arith.constant 1 : index
    %c0_52 = arith.constant 0 : index
    %c0_53 = arith.constant 0 : index
    %70 = vector.load %arg6[%c0_51, %c1, %c0_52, %c0_53] : memref<2x2x32x16xf32, #tpu.memory_space<vmem>>, vector<1x1x32x16xf32>
    %71 = vector.shape_cast %70 : vector<1x1x32x16xf32> to vector<32x16xf32>
    %cst_54 = arith.constant dense<0.000000e+00> : vector<16x16xf32>
    %72 = tpu.matmul %25, %71, %cst_54 {dimension_numbers = #tpu.dot_dimension_numbers<[1], [0], [0], [1], [0, 0, 1, 1], [], []>} : vector<16x32xf32>, vector<32x16xf32>, vector<16x16xf32> -> vector<16x16xf32>
    %c0_55 = arith.constant 0 : index
    %c1_56 = arith.constant 1 : index
    %c0_57 = arith.constant 0 : index
    %c0_58 = arith.constant 0 : index
    %73 = vector.load %arg9[%c0_55, %c1_56, %c0_57, %c0_58] : memref<2x2x1x16xf32, #tpu.memory_space<vmem>>, vector<1x1x1x16xf32>
    %74 = vector.shape_cast %73 : vector<1x1x1x16xf32> to vector<1x16xf32>
    %75 = vector.broadcast %74 : vector<1x16xf32> to vector<16x16xf32>
    %76 = arith.addf %72, %75 : vector<16x16xf32>
    %c0_59 = arith.constant 0 : index
    %c1_60 = arith.constant 1 : index
    %c0_61 = arith.constant 0 : index
    %c0_62 = arith.constant 0 : index
    %77 = vector.load %arg7[%c0_59, %c1_60, %c0_61, %c0_62] : memref<2x2x32x16xf32, #tpu.memory_space<vmem>>, vector<1x1x32x16xf32>
    %78 = vector.shape_cast %77 : vector<1x1x32x16xf32> to vector<32x16xf32>
    %cst_63 = arith.constant dense<0.000000e+00> : vector<16x16xf32>
    %79 = tpu.matmul %25, %78, %cst_63 {dimension_numbers = #tpu.dot_dimension_numbers<[1], [0], [0], [1], [0, 0, 1, 1], [], []>} : vector<16x32xf32>, vector<32x16xf32>, vector<16x16xf32> -> vector<16x16xf32>
    %c0_64 = arith.constant 0 : index
    %c1_65 = arith.constant 1 : index
    %c0_66 = arith.constant 0 : index
    %c0_67 = arith.constant 0 : index
    %80 = vector.load %arg10[%c0_64, %c1_65, %c0_66, %c0_67] : memref<2x2x1x16xf32, #tpu.memory_space<vmem>>, vector<1x1x1x16xf32>
    %81 = vector.shape_cast %80 : vector<1x1x1x16xf32> to vector<1x16xf32>
    %82 = vector.broadcast %81 : vector<1x16xf32> to vector<16x16xf32>
    %83 = arith.addf %79, %82 : vector<16x16xf32>
    %c0_68 = arith.constant 0 : index
    %c1_69 = arith.constant 1 : index
    %c0_70 = arith.constant 0 : index
    %c0_71 = arith.constant 0 : index
    %84 = vector.load %arg8[%c0_68, %c1_69, %c0_70, %c0_71] : memref<2x2x32x16xf32, #tpu.memory_space<vmem>>, vector<1x1x32x16xf32>
    %85 = vector.shape_cast %84 : vector<1x1x32x16xf32> to vector<32x16xf32>
    %cst_72 = arith.constant dense<0.000000e+00> : vector<16x16xf32>
    %86 = tpu.matmul %25, %85, %cst_72 {dimension_numbers = #tpu.dot_dimension_numbers<[1], [0], [0], [1], [0, 0, 1, 1], [], []>} : vector<16x32xf32>, vector<32x16xf32>, vector<16x16xf32> -> vector<16x16xf32>
    %c0_73 = arith.constant 0 : index
    %c1_74 = arith.constant 1 : index
    %c0_75 = arith.constant 0 : index
    %c0_76 = arith.constant 0 : index
    %87 = vector.load %arg11[%c0_73, %c1_74, %c0_75, %c0_76] : memref<2x2x1x16xf32, #tpu.memory_space<vmem>>, vector<1x1x1x16xf32>
    %88 = vector.shape_cast %87 : vector<1x1x1x16xf32> to vector<1x16xf32>
    %89 = vector.broadcast %88 : vector<1x16xf32> to vector<16x16xf32>
    %90 = arith.addf %86, %89 : vector<16x16xf32>
    %cst_77 = arith.constant dense<0.000000e+00> : vector<16x16xf32>
    %91 = tpu.matmul %76, %83, %cst_77 {dimension_numbers = #tpu.dot_dimension_numbers<[1], [1], [0], [0], [0, 0, 1, 0], [], []>} : vector<16x16xf32>, vector<16x16xf32>, vector<16x16xf32> -> vector<16x16xf32>
    %cst_78 = arith.constant 2.500000e-01 : f32
    %92 = vector.broadcast %cst_78 : f32 to vector<16x16xf32>
    %93 = arith.mulf %91, %92 : vector<16x16xf32>
    %94 = arith.addf %93, %1 : vector<16x16xf32>
    %cst_79 = arith.constant dense<0xFF800000> : vector<16xf32>
    %95 = vector.multi_reduction <maximumf>, %94, %cst_79 [1] : vector<16x16xf32> to vector<16xf32>
    %96 = vector.shape_cast %95 : vector<16xf32> to vector<16x1xf32>
    %97 = vector.broadcast %96 : vector<16x1xf32> to vector<16x16xf32>
    %98 = arith.subf %94, %97 : vector<16x16xf32>
    %99 = math.exp %98 : vector<16x16xf32>
    %cst_80 = arith.constant dense<0.000000e+00> : vector<16xf32>
    %100 = vector.multi_reduction <add>, %99, %cst_80 [1] : vector<16x16xf32> to vector<16xf32>
    %101 = vector.shape_cast %100 : vector<16xf32> to vector<16x1xf32>
    %102 = tpu.reciprocal %101 {approx = true} : vector<16x1xf32> -> vector<16x1xf32>
    %103 = vector.broadcast %102 : vector<16x1xf32> to vector<16x16xf32>
    %104 = arith.mulf %99, %103 : vector<16x16xf32>
    %cst_81 = arith.constant dense<0.000000e+00> : vector<16x16xf32>
    %105 = tpu.matmul %104, %90, %cst_81 {dimension_numbers = #tpu.dot_dimension_numbers<[1], [0], [0], [1], [0, 0, 1, 1], [], []>} : vector<16x16xf32>, vector<16x16xf32>, vector<16x16xf32> -> vector<16x16xf32>
    %c0_82 = arith.constant 0 : index
    %c1_83 = arith.constant 1 : index
    %c0_84 = arith.constant 0 : index
    %c0_85 = arith.constant 0 : index
    %106 = vector.load %arg12[%c0_82, %c1_83, %c0_84, %c0_85] : memref<2x2x16x32xf32, #tpu.memory_space<vmem>>, vector<1x1x16x32xf32>
    %107 = vector.shape_cast %106 : vector<1x1x16x32xf32> to vector<16x32xf32>
    %cst_86 = arith.constant dense<0.000000e+00> : vector<16x32xf32>
    %108 = tpu.matmul %105, %107, %cst_86 {dimension_numbers = #tpu.dot_dimension_numbers<[1], [0], [0], [1], [0, 0, 1, 1], [], []>} : vector<16x16xf32>, vector<16x32xf32>, vector<16x32xf32> -> vector<16x32xf32>
    %109 = arith.addf %69, %108 : vector<16x32xf32>
    %110 = arith.addf %109, %25 : vector<16x32xf32>
    %c0_87 = arith.constant 0 : index
    %c0_88 = arith.constant 0 : index
    %c0_89 = arith.constant 0 : index
    %111 = vector.load %arg14[%c0_87, %c0_88, %c0_89] : memref<2x1x32xf32, #tpu.memory_space<vmem>>, vector<1x1x32xf32>
    %112 = vector.shape_cast %111 : vector<1x1x32xf32> to vector<1x32xf32>
    %c0_90 = arith.constant 0 : index
    %c0_91 = arith.constant 0 : index
    %c0_92 = arith.constant 0 : index
    %113 = vector.load %arg15[%c0_90, %c0_91, %c0_92] : memref<2x1x32xf32, #tpu.memory_space<vmem>>, vector<1x1x32xf32>
    %114 = vector.shape_cast %113 : vector<1x1x32xf32> to vector<1x32xf32>
    %cst_93 = arith.constant dense<0.000000e+00> : vector<16xf32>
    %115 = vector.multi_reduction <add>, %110, %cst_93 [1] : vector<16x32xf32> to vector<16xf32>
    %116 = vector.shape_cast %115 : vector<16xf32> to vector<16x1xf32>
    %cst_94 = arith.constant 3.200000e+01 : f32
    %117 = vector.broadcast %cst_94 : f32 to vector<16x1xf32>
    %118 = arith.divf %116, %117 : vector<16x1xf32>
    %119 = vector.broadcast %118 : vector<16x1xf32> to vector<16x32xf32>
    %120 = arith.subf %110, %119 : vector<16x32xf32>
    %121 = arith.mulf %120, %120 : vector<16x32xf32>
    %cst_95 = arith.constant dense<0.000000e+00> : vector<16xf32>
    %122 = vector.multi_reduction <add>, %121, %cst_95 [1] : vector<16x32xf32> to vector<16xf32>
    %123 = vector.shape_cast %122 : vector<16xf32> to vector<16x1xf32>
    %cst_96 = arith.constant 3.200000e+01 : f32
    %124 = vector.broadcast %cst_96 : f32 to vector<16x1xf32>
    %125 = arith.divf %123, %124 : vector<16x1xf32>
    %126 = vector.broadcast %118 : vector<16x1xf32> to vector<16x32xf32>
    %127 = arith.subf %110, %126 : vector<16x32xf32>
    %cst_97 = arith.constant 9.99999996E-13 : f32
    %128 = vector.broadcast %cst_97 : f32 to vector<16x1xf32>
    %129 = arith.addf %125, %128 : vector<16x1xf32>
    %130 = math.rsqrt %129 : vector<16x1xf32>
    %131 = vector.broadcast %130 : vector<16x1xf32> to vector<16x32xf32>
    %132 = arith.mulf %127, %131 : vector<16x32xf32>
    %133 = vector.broadcast %112 : vector<1x32xf32> to vector<16x32xf32>
    %134 = arith.mulf %132, %133 : vector<16x32xf32>
    %135 = vector.broadcast %114 : vector<1x32xf32> to vector<16x32xf32>
    %136 = arith.addf %134, %135 : vector<16x32xf32>
    %c0_98 = arith.constant 0 : index
    %c0_99 = arith.constant 0 : index
    %c0_100 = arith.constant 0 : index
    %137 = vector.load %arg16[%c0_98, %c0_99, %c0_100] : memref<2x32x64xf32, #tpu.memory_space<vmem>>, vector<1x32x64xf32>
    %138 = vector.shape_cast %137 : vector<1x32x64xf32> to vector<32x64xf32>
    %cst_101 = arith.constant dense<0.000000e+00> : vector<16x64xf32>
    %139 = tpu.matmul %136, %138, %cst_101 {dimension_numbers = #tpu.dot_dimension_numbers<[1], [0], [0], [1], [0, 0, 1, 1], [], []>} : vector<16x32xf32>, vector<32x64xf32>, vector<16x64xf32> -> vector<16x64xf32>
    %c0_102 = arith.constant 0 : index
    %c0_103 = arith.constant 0 : index
    %c0_104 = arith.constant 0 : index
    %140 = vector.load %arg17[%c0_102, %c0_103, %c0_104] : memref<2x1x64xf32, #tpu.memory_space<vmem>>, vector<1x1x64xf32>
    %141 = vector.shape_cast %140 : vector<1x1x64xf32> to vector<1x64xf32>
    %142 = vector.broadcast %141 : vector<1x64xf32> to vector<16x64xf32>
    %143 = arith.addf %139, %142 : vector<16x64xf32>
    %cst_105 = arith.constant 5.000000e-01 : f32
    %144 = vector.broadcast %cst_105 : f32 to vector<16x64xf32>
    %145 = arith.mulf %144, %143 : vector<16x64xf32>
    %cst_106 = arith.constant 0.707106769 : f32
    %146 = vector.broadcast %cst_106 : f32 to vector<16x64xf32>
    %147 = arith.mulf %143, %146 : vector<16x64xf32>
    %148 = math.erf %147 : vector<16x64xf32>
    %cst_107 = arith.constant 1.000000e+00 : f32
    %149 = vector.broadcast %cst_107 : f32 to vector<16x64xf32>
    %150 = arith.addf %149, %148 : vector<16x64xf32>
    %151 = arith.mulf %145, %150 : vector<16x64xf32>
    %c0_108 = arith.constant 0 : index
    %c0_109 = arith.constant 0 : index
    %c0_110 = arith.constant 0 : index
    %152 = vector.load %arg18[%c0_108, %c0_109, %c0_110] : memref<2x64x32xf32, #tpu.memory_space<vmem>>, vector<1x64x32xf32>
    %153 = vector.shape_cast %152 : vector<1x64x32xf32> to vector<64x32xf32>
    %cst_111 = arith.constant dense<0.000000e+00> : vector<16x32xf32>
    %154 = tpu.matmul %151, %153, %cst_111 {dimension_numbers = #tpu.dot_dimension_numbers<[1], [0], [0], [1], [0, 0, 1, 1], [], []>} : vector<16x64xf32>, vector<64x32xf32>, vector<16x32xf32> -> vector<16x32xf32>
    %c0_112 = arith.constant 0 : index
    %c0_113 = arith.constant 0 : index
    %c0_114 = arith.constant 0 : index
    %155 = vector.load %arg19[%c0_112, %c0_113, %c0_114] : memref<2x1x32xf32, #tpu.memory_space<vmem>>, vector<1x1x32xf32>
    %156 = vector.shape_cast %155 : vector<1x1x32xf32> to vector<1x32xf32>
    %157 = vector.broadcast %156 : vector<1x32xf32> to vector<16x32xf32>
    %158 = arith.addf %154, %157 : vector<16x32xf32>
    %159 = arith.addf %158, %136 : vector<16x32xf32>
    %c0_115 = arith.constant 0 : index
    %c0_116 = arith.constant 0 : index
    %c0_117 = arith.constant 0 : index
    %160 = vector.load %arg20[%c0_115, %c0_116, %c0_117] : memref<2x1x32xf32, #tpu.memory_space<vmem>>, vector<1x1x32xf32>
    %161 = vector.shape_cast %160 : vector<1x1x32xf32> to vector<1x32xf32>
    %c0_118 = arith.constant 0 : index
    %c0_119 = arith.constant 0 : index
    %c0_120 = arith.constant 0 : index
    %162 = vector.load %arg21[%c0_118, %c0_119, %c0_120] : memref<2x1x32xf32, #tpu.memory_space<vmem>>, vector<1x1x32xf32>
    %163 = vector.shape_cast %162 : vector<1x1x32xf32> to vector<1x32xf32>
    %cst_121 = arith.constant dense<0.000000e+00> : vector<16xf32>
    %164 = vector.multi_reduction <add>, %159, %cst_121 [1] : vector<16x32xf32> to vector<16xf32>
    %165 = vector.shape_cast %164 : vector<16xf32> to vector<16x1xf32>
    %cst_122 = arith.constant 3.200000e+01 : f32
    %166 = vector.broadcast %cst_122 : f32 to vector<16x1xf32>
    %167 = arith.divf %165, %166 : vector<16x1xf32>
    %168 = vector.broadcast %167 : vector<16x1xf32> to vector<16x32xf32>
    %169 = arith.subf %159, %168 : vector<16x32xf32>
    %170 = arith.mulf %169, %169 : vector<16x32xf32>
    %cst_123 = arith.constant dense<0.000000e+00> : vector<16xf32>
    %171 = vector.multi_reduction <add>, %170, %cst_123 [1] : vector<16x32xf32> to vector<16xf32>
    %172 = vector.shape_cast %171 : vector<16xf32> to vector<16x1xf32>
    %cst_124 = arith.constant 3.200000e+01 : f32
    %173 = vector.broadcast %cst_124 : f32 to vector<16x1xf32>
    %174 = arith.divf %172, %173 : vector<16x1xf32>
    %175 = vector.broadcast %167 : vector<16x1xf32> to vector<16x32xf32>
    %176 = arith.subf %159, %175 : vector<16x32xf32>
    %cst_125 = arith.constant 9.99999996E-13 : f32
    %177 = vector.broadcast %cst_125 : f32 to vector<16x1xf32>
    %178 = arith.addf %174, %177 : vector<16x1xf32>
    %179 = math.rsqrt %178 : vector<16x1xf32>
    %180 = vector.broadcast %179 : vector<16x1xf32> to vector<16x32xf32>
    %181 = arith.mulf %176, %180 : vector<16x32xf32>
    %182 = vector.broadcast %161 : vector<1x32xf32> to vector<16x32xf32>
    %183 = arith.mulf %181, %182 : vector<16x32xf32>
    %184 = vector.broadcast %163 : vector<1x32xf32> to vector<16x32xf32>
    %185 = arith.addf %183, %184 : vector<16x32xf32>
    %c1_126 = arith.constant 1 : index
    %c0_127 = arith.constant 0 : index
    %c0_128 = arith.constant 0 : index
    %186 = vector.load %arg13[%c1_126, %c0_127, %c0_128] : memref<2x1x32xf32, #tpu.memory_space<vmem>>, vector<1x1x32xf32>
    %187 = vector.shape_cast %186 : vector<1x1x32xf32> to vector<1x32xf32>
    %188 = vector.shape_cast %187 : vector<1x32xf32> to vector<1x32xf32>
    %189 = vector.broadcast %188 : vector<1x32xf32> to vector<16x32xf32>
    %c1_129 = arith.constant 1 : index
    %c0_130 = arith.constant 0 : index
    %c0_131 = arith.constant 0 : index
    %c0_132 = arith.constant 0 : index
    %190 = vector.load %arg6[%c1_129, %c0_130, %c0_131, %c0_132] : memref<2x2x32x16xf32, #tpu.memory_space<vmem>>, vector<1x1x32x16xf32>
    %191 = vector.shape_cast %190 : vector<1x1x32x16xf32> to vector<32x16xf32>
    %cst_133 = arith.constant dense<0.000000e+00> : vector<16x16xf32>
    %192 = tpu.matmul %185, %191, %cst_133 {dimension_numbers = #tpu.dot_dimension_numbers<[1], [0], [0], [1], [0, 0, 1, 1], [], []>} : vector<16x32xf32>, vector<32x16xf32>, vector<16x16xf32> -> vector<16x16xf32>
    %c1_134 = arith.constant 1 : index
    %c0_135 = arith.constant 0 : index
    %c0_136 = arith.constant 0 : index
    %c0_137 = arith.constant 0 : index
    %193 = vector.load %arg9[%c1_134, %c0_135, %c0_136, %c0_137] : memref<2x2x1x16xf32, #tpu.memory_space<vmem>>, vector<1x1x1x16xf32>
    %194 = vector.shape_cast %193 : vector<1x1x1x16xf32> to vector<1x16xf32>
    %195 = vector.broadcast %194 : vector<1x16xf32> to vector<16x16xf32>
    %196 = arith.addf %192, %195 : vector<16x16xf32>
    %c1_138 = arith.constant 1 : index
    %c0_139 = arith.constant 0 : index
    %c0_140 = arith.constant 0 : index
    %c0_141 = arith.constant 0 : index
    %197 = vector.load %arg7[%c1_138, %c0_139, %c0_140, %c0_141] : memref<2x2x32x16xf32, #tpu.memory_space<vmem>>, vector<1x1x32x16xf32>
    %198 = vector.shape_cast %197 : vector<1x1x32x16xf32> to vector<32x16xf32>
    %cst_142 = arith.constant dense<0.000000e+00> : vector<16x16xf32>
    %199 = tpu.matmul %185, %198, %cst_142 {dimension_numbers = #tpu.dot_dimension_numbers<[1], [0], [0], [1], [0, 0, 1, 1], [], []>} : vector<16x32xf32>, vector<32x16xf32>, vector<16x16xf32> -> vector<16x16xf32>
    %c1_143 = arith.constant 1 : index
    %c0_144 = arith.constant 0 : index
    %c0_145 = arith.constant 0 : index
    %c0_146 = arith.constant 0 : index
    %200 = vector.load %arg10[%c1_143, %c0_144, %c0_145, %c0_146] : memref<2x2x1x16xf32, #tpu.memory_space<vmem>>, vector<1x1x1x16xf32>
    %201 = vector.shape_cast %200 : vector<1x1x1x16xf32> to vector<1x16xf32>
    %202 = vector.broadcast %201 : vector<1x16xf32> to vector<16x16xf32>
    %203 = arith.addf %199, %202 : vector<16x16xf32>
    %c1_147 = arith.constant 1 : index
    %c0_148 = arith.constant 0 : index
    %c0_149 = arith.constant 0 : index
    %c0_150 = arith.constant 0 : index
    %204 = vector.load %arg8[%c1_147, %c0_148, %c0_149, %c0_150] : memref<2x2x32x16xf32, #tpu.memory_space<vmem>>, vector<1x1x32x16xf32>
    %205 = vector.shape_cast %204 : vector<1x1x32x16xf32> to vector<32x16xf32>
    %cst_151 = arith.constant dense<0.000000e+00> : vector<16x16xf32>
    %206 = tpu.matmul %185, %205, %cst_151 {dimension_numbers = #tpu.dot_dimension_numbers<[1], [0], [0], [1], [0, 0, 1, 1], [], []>} : vector<16x32xf32>, vector<32x16xf32>, vector<16x16xf32> -> vector<16x16xf32>
    %c1_152 = arith.constant 1 : index
    %c0_153 = arith.constant 0 : index
    %c0_154 = arith.constant 0 : index
    %c0_155 = arith.constant 0 : index
    %207 = vector.load %arg11[%c1_152, %c0_153, %c0_154, %c0_155] : memref<2x2x1x16xf32, #tpu.memory_space<vmem>>, vector<1x1x1x16xf32>
    %208 = vector.shape_cast %207 : vector<1x1x1x16xf32> to vector<1x16xf32>
    %209 = vector.broadcast %208 : vector<1x16xf32> to vector<16x16xf32>
    %210 = arith.addf %206, %209 : vector<16x16xf32>
    %cst_156 = arith.constant dense<0.000000e+00> : vector<16x16xf32>
    %211 = tpu.matmul %196, %203, %cst_156 {dimension_numbers = #tpu.dot_dimension_numbers<[1], [1], [0], [0], [0, 0, 1, 0], [], []>} : vector<16x16xf32>, vector<16x16xf32>, vector<16x16xf32> -> vector<16x16xf32>
    %cst_157 = arith.constant 2.500000e-01 : f32
    %212 = vector.broadcast %cst_157 : f32 to vector<16x16xf32>
    %213 = arith.mulf %211, %212 : vector<16x16xf32>
    %214 = arith.addf %213, %1 : vector<16x16xf32>
    %cst_158 = arith.constant dense<0xFF800000> : vector<16xf32>
    %215 = vector.multi_reduction <maximumf>, %214, %cst_158 [1] : vector<16x16xf32> to vector<16xf32>
    %216 = vector.shape_cast %215 : vector<16xf32> to vector<16x1xf32>
    %217 = vector.broadcast %216 : vector<16x1xf32> to vector<16x16xf32>
    %218 = arith.subf %214, %217 : vector<16x16xf32>
    %219 = math.exp %218 : vector<16x16xf32>
    %cst_159 = arith.constant dense<0.000000e+00> : vector<16xf32>
    %220 = vector.multi_reduction <add>, %219, %cst_159 [1] : vector<16x16xf32> to vector<16xf32>
    %221 = vector.shape_cast %220 : vector<16xf32> to vector<16x1xf32>
    %222 = tpu.reciprocal %221 {approx = true} : vector<16x1xf32> -> vector<16x1xf32>
    %223 = vector.broadcast %222 : vector<16x1xf32> to vector<16x16xf32>
    %224 = arith.mulf %219, %223 : vector<16x16xf32>
    %cst_160 = arith.constant dense<0.000000e+00> : vector<16x16xf32>
    %225 = tpu.matmul %224, %210, %cst_160 {dimension_numbers = #tpu.dot_dimension_numbers<[1], [0], [0], [1], [0, 0, 1, 1], [], []>} : vector<16x16xf32>, vector<16x16xf32>, vector<16x16xf32> -> vector<16x16xf32>
    %c1_161 = arith.constant 1 : index
    %c0_162 = arith.constant 0 : index
    %c0_163 = arith.constant 0 : index
    %c0_164 = arith.constant 0 : index
    %226 = vector.load %arg12[%c1_161, %c0_162, %c0_163, %c0_164] : memref<2x2x16x32xf32, #tpu.memory_space<vmem>>, vector<1x1x16x32xf32>
    %227 = vector.shape_cast %226 : vector<1x1x16x32xf32> to vector<16x32xf32>
    %cst_165 = arith.constant dense<0.000000e+00> : vector<16x32xf32>
    %228 = tpu.matmul %225, %227, %cst_165 {dimension_numbers = #tpu.dot_dimension_numbers<[1], [0], [0], [1], [0, 0, 1, 1], [], []>} : vector<16x16xf32>, vector<16x32xf32>, vector<16x32xf32> -> vector<16x32xf32>
    %229 = arith.addf %189, %228 : vector<16x32xf32>
    %c1_166 = arith.constant 1 : index
    %c1_167 = arith.constant 1 : index
    %c0_168 = arith.constant 0 : index
    %c0_169 = arith.constant 0 : index
    %230 = vector.load %arg6[%c1_166, %c1_167, %c0_168, %c0_169] : memref<2x2x32x16xf32, #tpu.memory_space<vmem>>, vector<1x1x32x16xf32>
    %231 = vector.shape_cast %230 : vector<1x1x32x16xf32> to vector<32x16xf32>
    %cst_170 = arith.constant dense<0.000000e+00> : vector<16x16xf32>
    %232 = tpu.matmul %185, %231, %cst_170 {dimension_numbers = #tpu.dot_dimension_numbers<[1], [0], [0], [1], [0, 0, 1, 1], [], []>} : vector<16x32xf32>, vector<32x16xf32>, vector<16x16xf32> -> vector<16x16xf32>
    %c1_171 = arith.constant 1 : index
    %c1_172 = arith.constant 1 : index
    %c0_173 = arith.constant 0 : index
    %c0_174 = arith.constant 0 : index
    %233 = vector.load %arg9[%c1_171, %c1_172, %c0_173, %c0_174] : memref<2x2x1x16xf32, #tpu.memory_space<vmem>>, vector<1x1x1x16xf32>
    %234 = vector.shape_cast %233 : vector<1x1x1x16xf32> to vector<1x16xf32>
    %235 = vector.broadcast %234 : vector<1x16xf32> to vector<16x16xf32>
    %236 = arith.addf %232, %235 : vector<16x16xf32>
    %c1_175 = arith.constant 1 : index
    %c1_176 = arith.constant 1 : index
    %c0_177 = arith.constant 0 : index
    %c0_178 = arith.constant 0 : index
    %237 = vector.load %arg7[%c1_175, %c1_176, %c0_177, %c0_178] : memref<2x2x32x16xf32, #tpu.memory_space<vmem>>, vector<1x1x32x16xf32>
    %238 = vector.shape_cast %237 : vector<1x1x32x16xf32> to vector<32x16xf32>
    %cst_179 = arith.constant dense<0.000000e+00> : vector<16x16xf32>
    %239 = tpu.matmul %185, %238, %cst_179 {dimension_numbers = #tpu.dot_dimension_numbers<[1], [0], [0], [1], [0, 0, 1, 1], [], []>} : vector<16x32xf32>, vector<32x16xf32>, vector<16x16xf32> -> vector<16x16xf32>
    %c1_180 = arith.constant 1 : index
    %c1_181 = arith.constant 1 : index
    %c0_182 = arith.constant 0 : index
    %c0_183 = arith.constant 0 : index
    %240 = vector.load %arg10[%c1_180, %c1_181, %c0_182, %c0_183] : memref<2x2x1x16xf32, #tpu.memory_space<vmem>>, vector<1x1x1x16xf32>
    %241 = vector.shape_cast %240 : vector<1x1x1x16xf32> to vector<1x16xf32>
    %242 = vector.broadcast %241 : vector<1x16xf32> to vector<16x16xf32>
    %243 = arith.addf %239, %242 : vector<16x16xf32>
    %c1_184 = arith.constant 1 : index
    %c1_185 = arith.constant 1 : index
    %c0_186 = arith.constant 0 : index
    %c0_187 = arith.constant 0 : index
    %244 = vector.load %arg8[%c1_184, %c1_185, %c0_186, %c0_187] : memref<2x2x32x16xf32, #tpu.memory_space<vmem>>, vector<1x1x32x16xf32>
    %245 = vector.shape_cast %244 : vector<1x1x32x16xf32> to vector<32x16xf32>
    %cst_188 = arith.constant dense<0.000000e+00> : vector<16x16xf32>
    %246 = tpu.matmul %185, %245, %cst_188 {dimension_numbers = #tpu.dot_dimension_numbers<[1], [0], [0], [1], [0, 0, 1, 1], [], []>} : vector<16x32xf32>, vector<32x16xf32>, vector<16x16xf32> -> vector<16x16xf32>
    %c1_189 = arith.constant 1 : index
    %c1_190 = arith.constant 1 : index
    %c0_191 = arith.constant 0 : index
    %c0_192 = arith.constant 0 : index
    %247 = vector.load %arg11[%c1_189, %c1_190, %c0_191, %c0_192] : memref<2x2x1x16xf32, #tpu.memory_space<vmem>>, vector<1x1x1x16xf32>
    %248 = vector.shape_cast %247 : vector<1x1x1x16xf32> to vector<1x16xf32>
    %249 = vector.broadcast %248 : vector<1x16xf32> to vector<16x16xf32>
    %250 = arith.addf %246, %249 : vector<16x16xf32>
    %cst_193 = arith.constant dense<0.000000e+00> : vector<16x16xf32>
    %251 = tpu.matmul %236, %243, %cst_193 {dimension_numbers = #tpu.dot_dimension_numbers<[1], [1], [0], [0], [0, 0, 1, 0], [], []>} : vector<16x16xf32>, vector<16x16xf32>, vector<16x16xf32> -> vector<16x16xf32>
    %cst_194 = arith.constant 2.500000e-01 : f32
    %252 = vector.broadcast %cst_194 : f32 to vector<16x16xf32>
    %253 = arith.mulf %251, %252 : vector<16x16xf32>
    %254 = arith.addf %253, %1 : vector<16x16xf32>
    %cst_195 = arith.constant dense<0xFF800000> : vector<16xf32>
    %255 = vector.multi_reduction <maximumf>, %254, %cst_195 [1] : vector<16x16xf32> to vector<16xf32>
    %256 = vector.shape_cast %255 : vector<16xf32> to vector<16x1xf32>
    %257 = vector.broadcast %256 : vector<16x1xf32> to vector<16x16xf32>
    %258 = arith.subf %254, %257 : vector<16x16xf32>
    %259 = math.exp %258 : vector<16x16xf32>
    %cst_196 = arith.constant dense<0.000000e+00> : vector<16xf32>
    %260 = vector.multi_reduction <add>, %259, %cst_196 [1] : vector<16x16xf32> to vector<16xf32>
    %261 = vector.shape_cast %260 : vector<16xf32> to vector<16x1xf32>
    %262 = tpu.reciprocal %261 {approx = true} : vector<16x1xf32> -> vector<16x1xf32>
    %263 = vector.broadcast %262 : vector<16x1xf32> to vector<16x16xf32>
    %264 = arith.mulf %259, %263 : vector<16x16xf32>
    %cst_197 = arith.constant dense<0.000000e+00> : vector<16x16xf32>
    %265 = tpu.matmul %264, %250, %cst_197 {dimension_numbers = #tpu.dot_dimension_numbers<[1], [0], [0], [1], [0, 0, 1, 1], [], []>} : vector<16x16xf32>, vector<16x16xf32>, vector<16x16xf32> -> vector<16x16xf32>
    %c1_198 = arith.constant 1 : index
    %c1_199 = arith.constant 1 : index
    %c0_200 = arith.constant 0 : index
    %c0_201 = arith.constant 0 : index
    %266 = vector.load %arg12[%c1_198, %c1_199, %c0_200, %c0_201] : memref<2x2x16x32xf32, #tpu.memory_space<vmem>>, vector<1x1x16x32xf32>
    %267 = vector.shape_cast %266 : vector<1x1x16x32xf32> to vector<16x32xf32>
    %cst_202 = arith.constant dense<0.000000e+00> : vector<16x32xf32>
    %268 = tpu.matmul %265, %267, %cst_202 {dimension_numbers = #tpu.dot_dimension_numbers<[1], [0], [0], [1], [0, 0, 1, 1], [], []>} : vector<16x16xf32>, vector<16x32xf32>, vector<16x32xf32> -> vector<16x32xf32>
    %269 = arith.addf %229, %268 : vector<16x32xf32>
    %270 = arith.addf %269, %185 : vector<16x32xf32>
    %c1_203 = arith.constant 1 : index
    %c0_204 = arith.constant 0 : index
    %c0_205 = arith.constant 0 : index
    %271 = vector.load %arg14[%c1_203, %c0_204, %c0_205] : memref<2x1x32xf32, #tpu.memory_space<vmem>>, vector<1x1x32xf32>
    %272 = vector.shape_cast %271 : vector<1x1x32xf32> to vector<1x32xf32>
    %c1_206 = arith.constant 1 : index
    %c0_207 = arith.constant 0 : index
    %c0_208 = arith.constant 0 : index
    %273 = vector.load %arg15[%c1_206, %c0_207, %c0_208] : memref<2x1x32xf32, #tpu.memory_space<vmem>>, vector<1x1x32xf32>
    %274 = vector.shape_cast %273 : vector<1x1x32xf32> to vector<1x32xf32>
    %cst_209 = arith.constant dense<0.000000e+00> : vector<16xf32>
    %275 = vector.multi_reduction <add>, %270, %cst_209 [1] : vector<16x32xf32> to vector<16xf32>
    %276 = vector.shape_cast %275 : vector<16xf32> to vector<16x1xf32>
    %cst_210 = arith.constant 3.200000e+01 : f32
    %277 = vector.broadcast %cst_210 : f32 to vector<16x1xf32>
    %278 = arith.divf %276, %277 : vector<16x1xf32>
    %279 = vector.broadcast %278 : vector<16x1xf32> to vector<16x32xf32>
    %280 = arith.subf %270, %279 : vector<16x32xf32>
    %281 = arith.mulf %280, %280 : vector<16x32xf32>
    %cst_211 = arith.constant dense<0.000000e+00> : vector<16xf32>
    %282 = vector.multi_reduction <add>, %281, %cst_211 [1] : vector<16x32xf32> to vector<16xf32>
    %283 = vector.shape_cast %282 : vector<16xf32> to vector<16x1xf32>
    %cst_212 = arith.constant 3.200000e+01 : f32
    %284 = vector.broadcast %cst_212 : f32 to vector<16x1xf32>
    %285 = arith.divf %283, %284 : vector<16x1xf32>
    %286 = vector.broadcast %278 : vector<16x1xf32> to vector<16x32xf32>
    %287 = arith.subf %270, %286 : vector<16x32xf32>
    %cst_213 = arith.constant 9.99999996E-13 : f32
    %288 = vector.broadcast %cst_213 : f32 to vector<16x1xf32>
    %289 = arith.addf %285, %288 : vector<16x1xf32>
    %290 = math.rsqrt %289 : vector<16x1xf32>
    %291 = vector.broadcast %290 : vector<16x1xf32> to vector<16x32xf32>
    %292 = arith.mulf %287, %291 : vector<16x32xf32>
    %293 = vector.broadcast %272 : vector<1x32xf32> to vector<16x32xf32>
    %294 = arith.mulf %292, %293 : vector<16x32xf32>
    %295 = vector.broadcast %274 : vector<1x32xf32> to vector<16x32xf32>
    %296 = arith.addf %294, %295 : vector<16x32xf32>
    %c1_214 = arith.constant 1 : index
    %c0_215 = arith.constant 0 : index
    %c0_216 = arith.constant 0 : index
    %297 = vector.load %arg16[%c1_214, %c0_215, %c0_216] : memref<2x32x64xf32, #tpu.memory_space<vmem>>, vector<1x32x64xf32>
    %298 = vector.shape_cast %297 : vector<1x32x64xf32> to vector<32x64xf32>
    %cst_217 = arith.constant dense<0.000000e+00> : vector<16x64xf32>
    %299 = tpu.matmul %296, %298, %cst_217 {dimension_numbers = #tpu.dot_dimension_numbers<[1], [0], [0], [1], [0, 0, 1, 1], [], []>} : vector<16x32xf32>, vector<32x64xf32>, vector<16x64xf32> -> vector<16x64xf32>
    %c1_218 = arith.constant 1 : index
    %c0_219 = arith.constant 0 : index
    %c0_220 = arith.constant 0 : index
    %300 = vector.load %arg17[%c1_218, %c0_219, %c0_220] : memref<2x1x64xf32, #tpu.memory_space<vmem>>, vector<1x1x64xf32>
    %301 = vector.shape_cast %300 : vector<1x1x64xf32> to vector<1x64xf32>
    %302 = vector.broadcast %301 : vector<1x64xf32> to vector<16x64xf32>
    %303 = arith.addf %299, %302 : vector<16x64xf32>
    %cst_221 = arith.constant 5.000000e-01 : f32
    %304 = vector.broadcast %cst_221 : f32 to vector<16x64xf32>
    %305 = arith.mulf %304, %303 : vector<16x64xf32>
    %cst_222 = arith.constant 0.707106769 : f32
    %306 = vector.broadcast %cst_222 : f32 to vector<16x64xf32>
    %307 = arith.mulf %303, %306 : vector<16x64xf32>
    %308 = math.erf %307 : vector<16x64xf32>
    %cst_223 = arith.constant 1.000000e+00 : f32
    %309 = vector.broadcast %cst_223 : f32 to vector<16x64xf32>
    %310 = arith.addf %309, %308 : vector<16x64xf32>
    %311 = arith.mulf %305, %310 : vector<16x64xf32>
    %c1_224 = arith.constant 1 : index
    %c0_225 = arith.constant 0 : index
    %c0_226 = arith.constant 0 : index
    %312 = vector.load %arg18[%c1_224, %c0_225, %c0_226] : memref<2x64x32xf32, #tpu.memory_space<vmem>>, vector<1x64x32xf32>
    %313 = vector.shape_cast %312 : vector<1x64x32xf32> to vector<64x32xf32>
    %cst_227 = arith.constant dense<0.000000e+00> : vector<16x32xf32>
    %314 = tpu.matmul %311, %313, %cst_227 {dimension_numbers = #tpu.dot_dimension_numbers<[1], [0], [0], [1], [0, 0, 1, 1], [], []>} : vector<16x64xf32>, vector<64x32xf32>, vector<16x32xf32> -> vector<16x32xf32>
    %c1_228 = arith.constant 1 : index
    %c0_229 = arith.constant 0 : index
    %c0_230 = arith.constant 0 : index
    %315 = vector.load %arg19[%c1_228, %c0_229, %c0_230] : memref<2x1x32xf32, #tpu.memory_space<vmem>>, vector<1x1x32xf32>
    %316 = vector.shape_cast %315 : vector<1x1x32xf32> to vector<1x32xf32>
    %317 = vector.broadcast %316 : vector<1x32xf32> to vector<16x32xf32>
    %318 = arith.addf %314, %317 : vector<16x32xf32>
    %319 = arith.addf %318, %296 : vector<16x32xf32>
    %c1_231 = arith.constant 1 : index
    %c0_232 = arith.constant 0 : index
    %c0_233 = arith.constant 0 : index
    %320 = vector.load %arg20[%c1_231, %c0_232, %c0_233] : memref<2x1x32xf32, #tpu.memory_space<vmem>>, vector<1x1x32xf32>
    %321 = vector.shape_cast %320 : vector<1x1x32xf32> to vector<1x32xf32>
    %c1_234 = arith.constant 1 : index
    %c0_235 = arith.constant 0 : index
    %c0_236 = arith.constant 0 : index
    %322 = vector.load %arg21[%c1_234, %c0_235, %c0_236] : memref<2x1x32xf32, #tpu.memory_space<vmem>>, vector<1x1x32xf32>
    %323 = vector.shape_cast %322 : vector<1x1x32xf32> to vector<1x32xf32>
    %cst_237 = arith.constant dense<0.000000e+00> : vector<16xf32>
    %324 = vector.multi_reduction <add>, %319, %cst_237 [1] : vector<16x32xf32> to vector<16xf32>
    %325 = vector.shape_cast %324 : vector<16xf32> to vector<16x1xf32>
    %cst_238 = arith.constant 3.200000e+01 : f32
    %326 = vector.broadcast %cst_238 : f32 to vector<16x1xf32>
    %327 = arith.divf %325, %326 : vector<16x1xf32>
    %328 = vector.broadcast %327 : vector<16x1xf32> to vector<16x32xf32>
    %329 = arith.subf %319, %328 : vector<16x32xf32>
    %330 = arith.mulf %329, %329 : vector<16x32xf32>
    %cst_239 = arith.constant dense<0.000000e+00> : vector<16xf32>
    %331 = vector.multi_reduction <add>, %330, %cst_239 [1] : vector<16x32xf32> to vector<16xf32>
    %332 = vector.shape_cast %331 : vector<16xf32> to vector<16x1xf32>
    %cst_240 = arith.constant 3.200000e+01 : f32
    %333 = vector.broadcast %cst_240 : f32 to vector<16x1xf32>
    %334 = arith.divf %332, %333 : vector<16x1xf32>
    %335 = vector.broadcast %327 : vector<16x1xf32> to vector<16x32xf32>
    %336 = arith.subf %319, %335 : vector<16x32xf32>
    %cst_241 = arith.constant 9.99999996E-13 : f32
    %337 = vector.broadcast %cst_241 : f32 to vector<16x1xf32>
    %338 = arith.addf %334, %337 : vector<16x1xf32>
    %339 = math.rsqrt %338 : vector<16x1xf32>
    %340 = vector.broadcast %339 : vector<16x1xf32> to vector<16x32xf32>
    %341 = arith.mulf %336, %340 : vector<16x32xf32>
    %342 = vector.broadcast %321 : vector<1x32xf32> to vector<16x32xf32>
    %343 = arith.mulf %341, %342 : vector<16x32xf32>
    %344 = vector.broadcast %323 : vector<1x32xf32> to vector<16x32xf32>
    %345 = arith.addf %343, %344 : vector<16x32xf32>
    %c0_242 = arith.constant 0 : index
    %c0_243 = arith.constant 0 : index
    %346 = vector.load %arg3[%c0_242, %c0_243] : memref<2x16xf32, #tpu.memory_space<vmem>>, vector<2x16xf32>
    %cst_244 = arith.constant dense<0.000000e+00> : vector<2x32xf32>
    %347 = tpu.matmul %346, %345, %cst_244 {dimension_numbers = #tpu.dot_dimension_numbers<[1], [0], [0], [1], [0, 0, 1, 1], [], []>} : vector<2x16xf32>, vector<16x32xf32>, vector<2x32xf32> -> vector<2x32xf32>
    %c0_245 = arith.constant 0 : index
    %c0_246 = arith.constant 0 : index
    %348 = vector.load %arg22[%c0_245, %c0_246] : memref<32x32xf32, #tpu.memory_space<vmem>>, vector<32x32xf32>
    %cst_247 = arith.constant dense<0.000000e+00> : vector<2x32xf32>
    %349 = tpu.matmul %347, %348, %cst_247 {dimension_numbers = #tpu.dot_dimension_numbers<[1], [0], [0], [1], [0, 0, 1, 1], [], []>} : vector<2x32xf32>, vector<32x32xf32>, vector<2x32xf32> -> vector<2x32xf32>
    %c0_248 = arith.constant 0 : index
    %c0_249 = arith.constant 0 : index
    %350 = vector.load %arg23[%c0_248, %c0_249] : memref<1x32xf32, #tpu.memory_space<vmem>>, vector<1x32xf32>
    %351 = vector.broadcast %350 : vector<1x32xf32> to vector<2x32xf32>
    %352 = arith.addf %349, %351 : vector<2x32xf32>
    %353 = math.tanh %352 : vector<2x32xf32>
    %c0_250 = arith.constant 0 : index
    %c0_251 = arith.constant 0 : index
    %354 = vector.load %arg24[%c0_250, %c0_251] : memref<2x32xf32, #tpu.memory_space<vmem>>, vector<2x32xf32>
    tpu.vector_store %arg24[%c0_250, %c0_251], %353 {strides = array<i32>} : memref<2x32xf32, #tpu.memory_space<vmem>>, vector<2x32xf32>,
    return
  }
  func.func @transform_0(%arg0: i32) -> (i32, i32) {
    %c0_i32 = arith.constant 0 : i32
    %c0_i32_0 = arith.constant 0 : i32
    %c0_i32_1 = arith.constant 0 : i32
    return %c0_i32, %c0_i32_0 : i32, i32
  }
  func.func @transform_1(%arg0: i32) -> (i32, i32) {
    %c0_i32 = arith.constant 0 : i32
    %c0_i32_0 = arith.constant 0 : i32
    %c0_i32_1 = arith.constant 0 : i32
    return %c0_i32, %c0_i32_0 : i32, i32
  }
  func.func @transform_2(%arg0: i32) -> (i32, i32) {
    %c0_i32 = arith.constant 0 : i32
    %c0_i32_0 = arith.constant 0 : i32
    %c0_i32_1 = arith.constant 0 : i32
    return %c0_i32, %c0_i32_0 : i32, i32
  }
  func.func @transform_3(%arg0: i32) -> (i32, i32) {
    %c0_i32 = arith.constant 0 : i32
    %c0_i32_0 = arith.constant 0 : i32
    %c0_i32_1 = arith.constant 0 : i32
    return %c0_i32, %c0_i32_0 : i32, i32
  }
  func.func @transform_4(%arg0: i32) -> (i32, i32) {
    %c0_i32 = arith.constant 0 : i32
    %c0_i32_0 = arith.constant 0 : i32
    %c0_i32_1 = arith.constant 0 : i32
    return %c0_i32, %c0_i32_0 : i32, i32
  }
  func.func @transform_5(%arg0: i32) -> (i32, i32, i32, i32) {
    %c0_i32 = arith.constant 0 : i32
    %c0_i32_0 = arith.constant 0 : i32
    %c0_i32_1 = arith.constant 0 : i32
    %c0_i32_2 = arith.constant 0 : i32
    %c0_i32_3 = arith.constant 0 : i32
    return %c0_i32, %c0_i32_0, %c0_i32_1, %c0_i32_2 : i32, i32, i32, i32
  }
  func.func @transform_6(%arg0: i32) -> (i32, i32, i32, i32) {
    %c0_i32 = arith.constant 0 : i32
    %c0_i32_0 = arith.constant 0 : i32
    %c0_i32_1 = arith.constant 0 : i32
    %c0_i32_2 = arith.constant 0 : i32
    %c0_i32_3 = arith.constant 0 : i32
    return %c0_i32, %c0_i32_0, %c0_i32_1, %c0_i32_2 : i32, i32, i32, i32
  }
  func.func @transform_7(%arg0: i32) -> (i32, i32, i32, i32) {
    %c0_i32 = arith.constant 0 : i32
    %c0_i32_0 = arith.constant 0 : i32
    %c0_i32_1 = arith.constant 0 : i32
    %c0_i32_2 = arith.constant 0 : i32
    %c0_i32_3 = arith.constant 0 : i32
    return %c0_i32, %c0_i32_0, %c0_i32_1, %c0_i32_2 : i32, i32, i32, i32
  }
  func.func @transform_8(%arg0: i32) -> (i32, i32, i32, i32) {
    %c0_i32 = arith.constant 0 : i32
    %c0_i32_0 = arith.constant 0 : i32
    %c0_i32_1 = arith.constant 0 : i32
    %c0_i32_2 = arith.constant 0 : i32
    %c0_i32_3 = arith.constant 0 : i32
    return %c0_i32, %c0_i32_0, %c0_i32_1, %c0_i32_2 : i32, i32, i32, i32
  }
  func.func @transform_9(%arg0: i32) -> (i32, i32, i32, i32) {
    %c0_i32 = arith.constant 0 : i32
    %c0_i32_0 = arith.constant 0 : i32
    %c0_i32_1 = arith.constant 0 : i32
    %c0_i32_2 = arith.constant 0 : i32
    %c0_i32_3 = arith.constant 0 : i32
    return %c0_i32, %c0_i32_0, %c0_i32_1, %c0_i32_2 : i32, i32, i32, i32
  }
  func.func @transform_10(%arg0: i32) -> (i32, i32, i32, i32) {
    %c0_i32 = arith.constant 0 : i32
    %c0_i32_0 = arith.constant 0 : i32
    %c0_i32_1 = arith.constant 0 : i32
    %c0_i32_2 = arith.constant 0 : i32
    %c0_i32_3 = arith.constant 0 : i32
    return %c0_i32, %c0_i32_0, %c0_i32_1, %c0_i32_2 : i32, i32, i32, i32
  }
  func.func @transform_11(%arg0: i32) -> (i32, i32, i32, i32) {
    %c0_i32 = arith.constant 0 : i32
    %c0_i32_0 = arith.constant 0 : i32
    %c0_i32_1 = arith.constant 0 : i32
    %c0_i32_2 = arith.constant 0 : i32
    %c0_i32_3 = arith.constant 0 : i32
    return %c0_i32, %c0_i32_0, %c0_i32_1, %c0_i32_2 : i32, i32, i32, i32
  }
  func.func @transform_12(%arg0: i32) -> (i32, i32, i32) {
    %c0_i32 = arith.constant 0 : i32
    %c0_i32_0 = arith.constant 0 : i32
    %c0_i32_1 = arith.constant 0 : i32
    %c0_i32_2 = arith.constant 0 : i32
    return %c0_i32, %c0_i32_0, %c0_i32_1 : i32, i32, i32
  }
  func.func @transform_13(%arg0: i32) -> (i32, i32, i32) {
    %c0_i32 = arith.constant 0 : i32
    %c0_i32_0 = arith.constant 0 : i32
    %c0_i32_1 = arith.constant 0 : i32
    %c0_i32_2 = arith.constant 0 : i32
    return %c0_i32, %c0_i32_0, %c0_i32_1 : i32, i32, i32
  }
  func.func @transform_14(%arg0: i32) -> (i32, i32, i32) {
    %c0_i32 = arith.constant 0 : i32
    %c0_i32_0 = arith.constant 0 : i32
    %c0_i32_1 = arith.constant 0 : i32
    %c0_i32_2 = arith.constant 0 : i32
    return %c0_i32, %c0_i32_0, %c0_i32_1 : i32, i32, i32
  }
  func.func @transform_15(%arg0: i32) -> (i32, i32, i32) {
    %c0_i32 = arith.constant 0 : i32
    %c0_i32_0 = arith.constant 0 : i32
    %c0_i32_1 = arith.constant 0 : i32
    %c0_i32_2 = arith.constant 0 : i32
    return %c0_i32, %c0_i32_0, %c0_i32_1 : i32, i32, i32
  }
  func.func @transform_16(%arg0: i32) -> (i32, i32, i32) {
    %c0_i32 = arith.constant 0 : i32
    %c0_i32_0 = arith.constant 0 : i32
    %c0_i32_1 = arith.constant 0 : i32
    %c0_i32_2 = arith.constant 0 : i32
    return %c0_i32, %c0_i32_0, %c0_i32_1 : i32, i32, i32
  }
  func.func @transform_17(%arg0: i32) -> (i32, i32, i32) {
    %c0_i32 = arith.constant 0 : i32
    %c0_i32_0 = arith.constant 0 : i32
    %c0_i32_1 = arith.constant 0 : i32
    %c0_i32_2 = arith.constant 0 : i32
    return %c0_i32, %c0_i32_0, %c0_i32_1 : i32, i32, i32
  }
  func.func @transform_18(%arg0: i32) -> (i32, i32, i32) {
    %c0_i32 = arith.constant 0 : i32
    %c0_i32_0 = arith.constant 0 : i32
    %c0_i32_1 = arith.constant 0 : i32
    %c0_i32_2 = arith.constant 0 : i32
    return %c0_i32, %c0_i32_0, %c0_i32_1 : i32, i32, i32
  }
  func.func @transform_19(%arg0: i32) -> (i32, i32, i32) {
    %c0_i32 = arith.constant 0 : i32
    %c0_i32_0 = arith.constant 0 : i32
    %c0_i32_1 = arith.constant 0 : i32
    %c0_i32_2 = arith.constant 0 : i32
    return %c0_i32, %c0_i32_0, %c0_i32_1 : i32, i32, i32
  }
  func.func @transform_20(%arg0: i32) -> (i32, i32, i32) {
    %c0_i32 = arith.constant 0 : i32
    %c0_i32_0 = arith.constant 0 : i32
    %c0_i32_1 = arith.constant 0 : i32
    %c0_i32_2 = arith.constant 0 : i32
    return %c0_i32, %c0_i32_0, %c0_i32_1 : i32, i32, i32
  }
  func.func @transform_21(%arg0: i32) -> (i32, i32) {
    %c0_i32 = arith.constant 0 : i32
    %c0_i32_0 = arith.constant 0 : i32
    %c0_i32_1 = arith.constant 0 : i32
    return %c0_i32, %c0_i32_0 : i32, i32
  }
  func.func @transform_22(%arg0: i32) -> (i32, i32) {
    %c0_i32 = arith.constant 0 : i32
    %c0_i32_0 = arith.constant 0 : i32
    %c0_i32_1 = arith.constant 0 : i32
    return %c0_i32, %c0_i32_0 : i32, i32
  }
  func.func @transform_23(%arg0: i32) -> (i32, i32) {
    %c0_i32 = arith.constant 0 : i32
    %c0_i32_0 = arith.constant 0 : i32
    %c0_i32_1 = arith.constant 0 : i32
    return %c0_i32, %c0_i32_0 : i32, i32
  }
}

</mosaic_0001>

<llo_original>
// kernel: bert_forward.1
$region0: #{bert_forward.1}
  #allocation0 [shape = 'u32[]', space=smem, size = 0x4, offset = 0x4, fixed_abs, tag = 'smem constant byte address 0x4 - core index']
  #allocation1 [shape = 'u32[144,128]{1,0:T(1,128)}', space=vmem, size = 0x12000, scoped, tag = 'internal scratch']
  %s0 = inlined_call_operand.vmem [shape: f32[16,32], index: 0, kind: input, shape index: {}]
  %s1 = inlined_call_operand.vmem [shape: f32[16,16], index: 1, kind: input, shape index: {}]
  %s2 = inlined_call_operand.vmem [shape: f32[2,16], index: 2, kind: input, shape index: {}]
  %s3 = inlined_call_operand.vmem [shape: f32[1,32], index: 3, kind: input, shape index: {}]
  %s4 = inlined_call_operand.vmem [shape: f32[1,32], index: 4, kind: input, shape index: {}]
  %s5 = inlined_call_operand.vmem [shape: f32[2,2,32,16], index: 5, kind: input, shape index: {}]
  %s6 = inlined_call_operand.vmem [shape: f32[2,2,32,16], index: 6, kind: input, shape index: {}]
  %s7 = inlined_call_operand.vmem [shape: f32[2,2,32,16], index: 7, kind: input, shape index: {}]
  %s8 = inlined_call_operand.vmem [shape: f32[2,2,1,16], index: 8, kind: input, shape index: {}]
  %s9 = inlined_call_operand.vmem [shape: f32[2,2,1,16], index: 9, kind: input, shape index: {}]
  %s10 = inlined_call_operand.vmem [shape: f32[2,2,1,16], index: 10, kind: input, shape index: {}]
  %s11 = inlined_call_operand.vmem [shape: f32[2,2,16,32], index: 11, kind: input, shape index: {}]
  %s12 = inlined_call_operand.vmem [shape: f32[2,1,32], index: 12, kind: input, shape index: {}]
  %s13 = inlined_call_operand.vmem [shape: f32[2,1,32], index: 13, kind: input, shape index: {}]
  %s14 = inlined_call_operand.vmem [shape: f32[2,1,32], index: 14, kind: input, shape index: {}]
  %s15 = inlined_call_operand.vmem [shape: f32[2,32,64], index: 15, kind: input, shape index: {}]
  %s16 = inlined_call_operand.vmem [shape: f32[2,1,64], index: 16, kind: input, shape index: {}]
  %s17 = inlined_call_operand.vmem [shape: f32[2,64,32], index: 17, kind: input, shape index: {}]
  %s18 = inlined_call_operand.vmem [shape: f32[2,1,32], index: 18, kind: input, shape index: {}]
  %s19 = inlined_call_operand.vmem [shape: f32[2,1,32], index: 19, kind: input, shape index: {}]
  %s20 = inlined_call_operand.vmem [shape: f32[2,1,32], index: 20, kind: input, shape index: {}]
  %s21 = inlined_call_operand.vmem [shape: f32[32,32], index: 21, kind: input, shape index: {}]
  %s22 = inlined_call_operand.vmem [shape: f32[1,32], index: 22, kind: input, shape index: {}]
  %s23 = inlined_call_operand.hbm [shape: f32[2,32], index: 23, kind: output, shape index: {}]
  %s24 = sld [smem:[#allocation0]]
  $region102: #{bert_forward.1} parent=0
    _
  %s26 = ssub.s32 1, %s24
  %s27 = scalar_select 0, %s26, %s24
  $region1: #{bert_forward.1} parent=0
    #allocation2 [shape = 'u8[1024]{0}', space=vmem, size = 0x400, scoped, tag = 'output window, operand 0, single buffered']
    #allocation3 [shape = 's32[1]{0}', space=sflag, size = 0x4, scoped, tag = 'scoped memory for bert_forward.1']
    %28 = vsyncpa [#allocation3], 0
    // Predicated region
    $region2: #{bert_forward.1} parent=1 // pred_check
      _
    $region3: #{bert_forward.1} parent=1 // pred_check_branch
      %30 = sbr.rel (0) target = $region5
    $region4: #{bert_forward.1} parent=1 // pred_region
      _
    $region5: #{bert_forward.1} parent=1 // pred_fallthru
      _
    // Predicated region
    $region6: #{bert_forward.1} parent=1 // pred_check
      _
    $region7: #{bert_forward.1} parent=1 // pred_check_branch
      %32 = sbr.rel (0) target = $region9
    $region8: #{bert_forward.1} parent=1 // pred_region
      _
    $region9: #{bert_forward.1} parent=1 // pred_fallthru
      _
    // Predicated region
    $region10: #{bert_forward.1} parent=1 // pred_check
      _
    $region11: #{bert_forward.1} parent=1 // pred_check_branch
      %34 = sbr.rel (0) target = $region13
    $region12: #{bert_forward.1} parent=1 // pred_region
      _
    $region13: #{bert_forward.1} parent=1 // pred_fallthru
      _
    // Predicated region
    $region14: #{bert_forward.1} parent=1 // pred_check
      _
    $region15: #{bert_forward.1} parent=1 // pred_check_branch
      %36 = sbr.rel (0) target = $region17
    $region16: #{bert_forward.1} parent=1 // pred_region
      _
    $region17: #{bert_forward.1} parent=1 // pred_fallthru
      _
    // Predicated region
    $region18: #{bert_forward.1} parent=1 // pred_check
      _
    $region19: #{bert_forward.1} parent=1 // pred_check_branch
      %38 = sbr.rel (0) target = $region21
    $region20: #{bert_forward.1} parent=1 // pred_region
      _
    $region21: #{bert_forward.1} parent=1 // pred_fallthru
      _
    // Predicated region
    $region22: #{bert_forward.1} parent=1 // pred_check
      _
    $region23: #{bert_forward.1} parent=1 // pred_check_branch
      %40 = sbr.rel (0) target = $region25
    $region24: #{bert_forward.1} parent=1 // pred_region
      _
    $region25: #{bert_forward.1} parent=1 // pred_fallthru
      _
    // Predicated region
    $region26: #{bert_forward.1} parent=1 // pred_check
      _
    $region27: #{bert_forward.1} parent=1 // pred_check_branch
      %42 = sbr.rel (0) target = $region29
    $region28: #{bert_forward.1} parent=1 // pred_region
      _
    $region29: #{bert_forward.1} parent=1 // pred_fallthru
      _
    // Predicated region
    $region30: #{bert_forward.1} parent=1 // pred_check
      _
    $region31: #{bert_forward.1} parent=1 // pred_check_branch
      %44 = sbr.rel (0) target = $region33
    $region32: #{bert_forward.1} parent=1 // pred_region
      _
    $region33: #{bert_forward.1} parent=1 // pred_fallthru
      _
    // Predicated region
    $region34: #{bert_forward.1} parent=1 // pred_check
      _
    $region35: #{bert_forward.1} parent=1 // pred_check_branch
      %46 = sbr.rel (0) target = $region37
    $region36: #{bert_forward.1} parent=1 // pred_region
      _
    $region37: #{bert_forward.1} parent=1 // pred_fallthru
      _
    // Predicated region
    $region38: #{bert_forward.1} parent=1 // pred_check
      _
    $region39: #{bert_forward.1} parent=1 // pred_check_branch
      %48 = sbr.rel (0) target = $region41
    $region40: #{bert_forward.1} parent=1 // pred_region
      _
    $region41: #{bert_forward.1} parent=1 // pred_fallthru
      _
    // Predicated region
    $region42: #{bert_forward.1} parent=1 // pred_check
      _
    $region43: #{bert_forward.1} parent=1 // pred_check_branch
      %50 = sbr.rel (0) target = $region45
    $region44: #{bert_forward.1} parent=1 // pred_region
      _
    $region45: #{bert_forward.1} parent=1 // pred_fallthru
      _
    // Predicated region
    $region46: #{bert_forward.1} parent=1 // pred_check
      _
    $region47: #{bert_forward.1} parent=1 // pred_check_branch
      %52 = sbr.rel (0) target = $region49
    $region48: #{bert_forward.1} parent=1 // pred_region
      _
    $region49: #{bert_forward.1} parent=1 // pred_fallthru
      _
    // Predicated region
    $region50: #{bert_forward.1} parent=1 // pred_check
      _
    $region51: #{bert_forward.1} parent=1 // pred_check_branch
      %54 = sbr.rel (0) target = $region53
    $region52: #{bert_forward.1} parent=1 // pred_region
      _
    $region53: #{bert_forward.1} parent=1 // pred_fallthru
      _
    // Predicated region
    $region54: #{bert_forward.1} parent=1 // pred_check
      _
    $region55: #{bert_forward.1} parent=1 // pred_check_branch
      %56 = sbr.rel (0) target = $region57
    $region56: #{bert_forward.1} parent=1 // pred_region
      _
    $region57: #{bert_forward.1} parent=1 // pred_fallthru
      _
    // Predicated region
    $region58: #{bert_forward.1} parent=1 // pred_check
      _
    $region59: #{bert_forward.1} parent=1 // pred_check_branch
      %58 = sbr.rel (0) target = $region61
    $region60: #{bert_forward.1} parent=1 // pred_region
      _
    $region61: #{bert_forward.1} parent=1 // pred_fallthru
      _
    // Predicated region
    $region62: #{bert_forward.1} parent=1 // pred_check
      _
    $region63: #{bert_forward.1} parent=1 // pred_check_branch
      %60 = sbr.rel (0) target = $region65
    $region64: #{bert_forward.1} parent=1 // pred_region
      _
    $region65: #{bert_forward.1} parent=1 // pred_fallthru
      _
    // Predicated region
    $region66: #{bert_forward.1} parent=1 // pred_check
      _
    $region67: #{bert_forward.1} parent=1 // pred_check_branch
      %62 = sbr.rel (0) target = $region69
    $region68: #{bert_forward.1} parent=1 // pred_region
      _
    $region69: #{bert_forward.1} parent=1 // pred_fallthru
      _
    // Predicated region
    $region70: #{bert_forward.1} parent=1 // pred_check
      _
    $region71: #{bert_forward.1} parent=1 // pred_check_branch
      %64 = sbr.rel (0) target = $region73
    $region72: #{bert_forward.1} parent=1 // pred_region
      _
    $region73: #{bert_forward.1} parent=1 // pred_fallthru
      _
    // Predicated region
    $region74: #{bert_forward.1} parent=1 // pred_check
      _
    $region75: #{bert_forward.1} parent=1 // pred_check_branch
      %66 = sbr.rel (0) target = $region77
    $region76: #{bert_forward.1} parent=1 // pred_region
      _
    $region77: #{bert_forward.1} parent=1 // pred_fallthru
      _
    // Predicated region
    $region78: #{bert_forward.1} parent=1 // pred_check
      _
    $region79: #{bert_forward.1} parent=1 // pred_check_branch
      %68 = sbr.rel (0) target = $region81
    $region80: #{bert_forward.1} parent=1 // pred_region
      _
    $region81: #{bert_forward.1} parent=1 // pred_fallthru
      _
    // Predicated region
    $region82: #{bert_forward.1} parent=1 // pred_check
      _
    $region83: #{bert_forward.1} parent=1 // pred_check_branch
      %70 = sbr.rel (0) target = $region85
    $region84: #{bert_forward.1} parent=1 // pred_region
      _
    $region85: #{bert_forward.1} parent=1 // pred_fallthru
      _
    // Predicated region
    $region86: #{bert_forward.1} parent=1 // pred_check
      _
    $region87: #{bert_forward.1} parent=1 // pred_check_branch
      %72 = sbr.rel (0) target = $region89
    $region88: #{bert_forward.1} parent=1 // pred_region
      _
    $region89: #{bert_forward.1} parent=1 // pred_fallthru
      _
    // Predicated region
    $region90: #{bert_forward.1} parent=1 // pred_check
      _
    $region91: #{bert_forward.1} parent=1 // pred_check_branch
      %74 = sbr.rel (0) target = $region93
    $region92: #{bert_forward.1} parent=1 // pred_region
      _
    $region93: #{bert_forward.1} parent=1 // pred_fallthru
      _
    %v75 = vld [vmem:[%s0] sm:$0xff]
    %v76 = vld [vmem:[%s0 + $0x8] sm:$0xff]
    %v77 = vld [vmem:[%s1] sm:$0xff]
    %v78 = vld [vmem:[%s1 + $0x8] sm:$0xff]
    %v79 = vld [vmem:[%s3] sm:$0x1]
    %v80 = vld [vmem:[%s4] sm:$0x1]
    %vm81 = vcmask 261120
    %v82 = vsel %vm81, %v75, 0.0
    %83 = vadd.xlane.f32.xlu0 %v82
    %v84 = vpop.xlane.xlu0 %83
    %v85 = vsel %vm81, %v76, 0.0
    %86 = vadd.xlane.f32.xlu0 %v85
    %v87 = vpop.xlane.xlu0 %86
    %v88 = vrcp.pop 32.0
    %v89 = vmul.f32 %v84, %v88
    %v90 = vmul.f32 %v87, %v88
    %v91 = vsub.f32 %v75, %v89
    %v92 = vsub.f32 %v76, %v90
    %v93 = vmul.f32 %v91, %v91
    %v94 = vmul.f32 %v92, %v92
    %v95 = vsel %vm81, %v93, 0.0
    %96 = vadd.xlane.f32.xlu0 %v95
    %v97 = vpop.xlane.xlu0 %96
    %v98 = vsel %vm81, %v94, 0.0
    %99 = vadd.xlane.f32.xlu0 %v98
    %v100 = vpop.xlane.xlu0 %99
    %v101 = vmul.f32 %v97, %v88
    %v102 = vmul.f32 %v100, %v88
    %v103 = vadd.f32 %v101, 1e-12
    %v104 = vadd.f32 %v102, 1e-12
    %v105 = vrsqrt.pop %v103
    %v106 = vrsqrt.pop %v104
    %v107 = vmul.f32 %v91, %v105
    %v108 = vmul.f32 %v92, %v106
    %v110 = vlaneseq
    %v111 = vshrl.u32 %v110, 7
    %v112 = vsub.s32 0, %v111
    %v113 = vrot.slane %v79, %v112
    %v115 = vmul.f32 %v107, %v113
    %v116 = vmul.f32 %v108, %v113
    %v118 = vlaneseq
    %v119 = vshrl.u32 %v118, 7
    %v120 = vsub.s32 0, %v119
    %v121 = vrot.slane %v80, %v120
    %v123 = vadd.f32 %v115, %v121
    %v124 = vadd.f32 %v116, %v121
    %v125 = vld [vmem:[%s12] sm:$0x1]
    %v127 = vlaneseq
    %v128 = vshrl.u32 %v127, 7
    %v129 = vsub.s32 0, %v128
    %v130 = vrot.slane %v125, %v129
    %v132 = vld [vmem:[%s5] sm:$0xff]
    %v133 = vld [vmem:[%s5 + $0x8] sm:$0xff]
    %v134 = vld [vmem:[%s5 + $0x10] sm:$0xff]
    %v135 = vld [vmem:[%s5 + $0x18] sm:$0xff]
    %v136 = vld [vmem:[%s8] sm:$0x1]
    %v138 = vlaneseq
    %v139 = vshrl.u32 %v138, 7
    %v140 = vsub.s32 0, %v139
    %v141 = vrot.slane %v136, %v140
    %v144 = vsel %vm81, %v123, 0
    %v147 = vsel %vm81, %v124, 0
    %149 = vmatprep.subr.mxu0 0.0
    %150 = vmatpush1.msra.mxu0 %v132
    %151 = vmatprep.subr.mxu0 0.0
    %152 = vmatpush1.msra.mxu0 %v133
    %153 = vmatprep.subr.mxu0 0.0
    %154 = vmatpush1.msra.mxu0 %v134
    %155 = vmatprep.subr.mxu0 0.0
    %156 = vmatpush1.msra.mxu0 %v135
    %157 = vmatprep.subr.mxu0 0.0
    %158 = vmatpush1.msra.mxu0 0.0
    %159 = vmatprep.subr.mxu0 0.0
    %160 = vmatpush1.msra.mxu0 0.0
    %161 = vmatprep.subr.mxu0 0.0
    %162 = vmatpush1.msra.mxu0 0.0
    %163 = vmatprep.subr.mxu0 0.0
    %164 = vmatpush1.msra.mxu0 0.0
    %165 = vmatprep.subr.mxu0 0.0
    %166 = vmatpush1.msra.mxu0 0.0
    %167 = vmatprep.subr.mxu0 0.0
    %168 = vmatpush1.msra.mxu0 0.0
    %169 = vmatprep.subr.mxu0 0.0
    %170 = vmatpush1.msra.mxu0 0.0
    %171 = vmatprep.subr.mxu0 0.0
    %172 = vmatpush1.msra.mxu0 0.0
    %173 = vmatprep.subr.mxu0 0.0
    %174 = vmatpush1.msra.mxu0 0.0
    %175 = vmatprep.subr.mxu0 0.0
    %176 = vmatpush1.msra.mxu0 0.0
    %177 = vmatprep.subr.mxu0 0.0
    %178 = vmatpush1.msra.mxu0 0.0
    %179 = vmatprep.subr.mxu0 0.0
    %180 = vmatpush1.msra.mxu0 0.0
    %181 = vmatprep.subr.mxu0 0.0
    %182 = vmatpush1.msra.mxu0 0.0
    %183 = vmatprep.subr.mxu0 0.0
    %184 = vmatpush1.msra.mxu0 0.0
    %185 = vmatprep.subr.mxu0 0.0
    %186 = vmatpush1.msra.mxu0 0.0
    %187 = vmatprep.subr.mxu0 0.0
    %188 = vmatpush1.msra.mxu0 0.0
    %189 = vmatprep.subr.mxu0 0.0
    %190 = vmatpush1.msra.mxu0 0.0
    %191 = vmatprep.subr.mxu0 0.0
    %192 = vmatpush1.msra.mxu0 0.0
    %193 = vmatprep.subr.mxu0 0.0
    %194 = vmatpush1.msra.mxu0 0.0
    %195 = vmatprep.subr.mxu0 0.0
    %196 = vmatpush1.msra.mxu0 0.0
    %197 = vmatprep.subr.mxu0 0.0
    %198 = vmatpush1.msra.mxu0 0.0
    %199 = vmatprep.subr.mxu0 0.0
    %200 = vmatpush1.msra.mxu0 0.0
    %201 = vmatprep.subr.mxu0 0.0
    %202 = vmatpush1.msra.mxu0 0.0
    %203 = vmatprep.subr.mxu0 0.0
    %204 = vmatpush1.msra.mxu0 0.0
    %205 = vmatprep.subr.mxu0 0.0
    %206 = vmatpush1.msra.mxu0 0.0
    %207 = vmatprep.subr.mxu0 0.0
    %208 = vmatpush1.msra.mxu0 0.0
    %209 = vmatprep.subr.mxu0 0.0
    %210 = vmatpush1.msra.mxu0 0.0
    %211 = vmatprep.subr.mxu0 0.0
    %212 = vmatpush1.msra.mxu0 0.0
    %213 = vmatprep.mubr.f32.mxu0 0.0
    %214 = vmatmul.mubr.f32.gmra.mrb[0].mxu0 %v144
    %v215 = vpop.f32.mrb[0].mxu0
    %v216 = vadd.f32 %v141, %v215
    %v217 = vpop.f32.mrb[0].mxu0
    %218 = vmatprep.mubr.f32.mxu0 0.0
    %219 = vmatmul.mubr.f32.gmra.mrb[0].mxu0 %v147
    %v220 = vpop.f32.mrb[0].mxu0
    %v221 = vadd.f32 %v141, %v220
    %v222 = vpop.f32.mrb[0].mxu0
    %223 = vdwg.mxu0
    %v224 = vld [vmem:[%s6] sm:$0xff]
    %v225 = vld [vmem:[%s6 + $0x8] sm:$0xff]
    %v226 = vld [vmem:[%s6 + $0x10] sm:$0xff]
    %v227 = vld [vmem:[%s6 + $0x18] sm:$0xff]
    %v228 = vld [vmem:[%s9] sm:$0x1]
    %v230 = vlaneseq
    %v231 = vshrl.u32 %v230, 7
    %v232 = vsub.s32 0, %v231
    %v233 = vrot.slane %v228, %v232
    %235 = vmatprep.subr.mxu0 0.0
    %236 = vmatpush1.msra.mxu0 %v224
    %237 = vmatprep.subr.mxu0 0.0
    %238 = vmatpush1.msra.mxu0 %v225
    %239 = vmatprep.subr.mxu0 0.0
    %240 = vmatpush1.msra.mxu0 %v226
    %241 = vmatprep.subr.mxu0 0.0
    %242 = vmatpush1.msra.mxu0 %v227
    %243 = vmatprep.subr.mxu0 0.0
    %244 = vmatpush1.msra.mxu0 0.0
    %245 = vmatprep.subr.mxu0 0.0
    %246 = vmatpush1.msra.mxu0 0.0
    %247 = vmatprep.subr.mxu0 0.0
    %248 = vmatpush1.msra.mxu0 0.0
    %249 = vmatprep.subr.mxu0 0.0
    %250 = vmatpush1.msra.mxu0 0.0
    %251 = vmatprep.subr.mxu0 0.0
    %252 = vmatpush1.msra.mxu0 0.0
    %253 = vmatprep.subr.mxu0 0.0
    %254 = vmatpush1.msra.mxu0 0.0
    %255 = vmatprep.subr.mxu0 0.0
    %256 = vmatpush1.msra.mxu0 0.0
    %257 = vmatprep.subr.mxu0 0.0
    %258 = vmatpush1.msra.mxu0 0.0
    %259 = vmatprep.subr.mxu0 0.0
    %260 = vmatpush1.msra.mxu0 0.0
    %261 = vmatprep.subr.mxu0 0.0
    %262 = vmatpush1.msra.mxu0 0.0
    %263 = vmatprep.subr.mxu0 0.0
    %264 = vmatpush1.msra.mxu0 0.0
    %265 = vmatprep.subr.mxu0 0.0
    %266 = vmatpush1.msra.mxu0 0.0
    %267 = vmatprep.subr.mxu0 0.0
    %268 = vmatpush1.msra.mxu0 0.0
    %269 = vmatprep.subr.mxu0 0.0
    %270 = vmatpush1.msra.mxu0 0.0
    %271 = vmatprep.subr.mxu0 0.0
    %272 = vmatpush1.msra.mxu0 0.0
    %273 = vmatprep.subr.mxu0 0.0
    %274 = vmatpush1.msra.mxu0 0.0
    %275 = vmatprep.subr.mxu0 0.0
    %276 = vmatpush1.msra.mxu0 0.0
    %277 = vmatprep.subr.mxu0 0.0
    %278 = vmatpush1.msra.mxu0 0.0
    %279 = vmatprep.subr.mxu0 0.0
    %280 = vmatpush1.msra.mxu0 0.0
    %281 = vmatprep.subr.mxu0 0.0
    %282 = vmatpush1.msra.mxu0 0.0
    %283 = vmatprep.subr.mxu0 0.0
    %284 = vmatpush1.msra.mxu0 0.0
    %285 = vmatprep.subr.mxu0 0.0
    %286 = vmatpush1.msra.mxu0 0.0
    %287 = vmatprep.subr.mxu0 0.0
    %288 = vmatpush1.msra.mxu0 0.0
    %289 = vmatprep.subr.mxu0 0.0
    %290 = vmatpush1.msra.mxu0 0.0
    %291 = vmatprep.subr.mxu0 0.0
    %292 = vmatpush1.msra.mxu0 0.0
    %293 = vmatprep.subr.mxu0 0.0
    %294 = vmatpush1.msra.mxu0 0.0
    %295 = vmatprep.subr.mxu0 0.0
    %296 = vmatpush1.msra.mxu0 0.0
    %297 = vmatprep.subr.mxu0 0.0
    %298 = vmatpush1.msra.mxu0 0.0
    %299 = vmatprep.mubr.f32.mxu0 0.0
    %300 = vmatmul.mubr.f32.gmra.mrb[0].mxu0 %v144
    %v301 = vpop.f32.mrb[0].mxu0
    %v302 = vadd.f32 %v233, %v301
    %v303 = vpop.f32.mrb[0].mxu0
    %304 = vmatprep.mubr.f32.mxu0 0.0
    %305 = vmatmul.mubr.f32.gmra.mrb[0].mxu0 %v147
    %v306 = vpop.f32.mrb[0].mxu0
    %v307 = vadd.f32 %v233, %v306
    %v308 = vpop.f32.mrb[0].mxu0
    %309 = vdwg.mxu0
    %v310 = vld [vmem:[%s7] sm:$0xff]
    %v311 = vld [vmem:[%s7 + $0x8] sm:$0xff]
    %v312 = vld [vmem:[%s7 + $0x10] sm:$0xff]
    %v313 = vld [vmem:[%s7 + $0x18] sm:$0xff]
    %v314 = vld [vmem:[%s10] sm:$0x1]
    %v316 = vlaneseq
    %v317 = vshrl.u32 %v316, 7
    %v318 = vsub.s32 0, %v317
    %v319 = vrot.slane %v314, %v318
    %321 = vmatprep.subr.mxu0 0.0
    %322 = vmatpush1.msra.mxu0 %v310
    %323 = vmatprep.subr.mxu0 0.0
    %324 = vmatpush1.msra.mxu0 %v311
    %325 = vmatprep.subr.mxu0 0.0
    %326 = vmatpush1.msra.mxu0 %v312
    %327 = vmatprep.subr.mxu0 0.0
    %328 = vmatpush1.msra.mxu0 %v313
    %329 = vmatprep.subr.mxu0 0.0
    %330 = vmatpush1.msra.mxu0 0.0
    %331 = vmatprep.subr.mxu0 0.0
    %332 = vmatpush1.msra.mxu0 0.0
    %333 = vmatprep.subr.mxu0 0.0
    %334 = vmatpush1.msra.mxu0 0.0
    %335 = vmatprep.subr.mxu0 0.0
    %336 = vmatpush1.msra.mxu0 0.0
    %337 = vmatprep.subr.mxu0 0.0
    %338 = vmatpush1.msra.mxu0 0.0
    %339 = vmatprep.subr.mxu0 0.0
    %340 = vmatpush1.msra.mxu0 0.0
    %341 = vmatprep.subr.mxu0 0.0
    %342 = vmatpush1.msra.mxu0 0.0
    %343 = vmatprep.subr.mxu0 0.0
    %344 = vmatpush1.msra.mxu0 0.0
    %345 = vmatprep.subr.mxu0 0.0
    %346 = vmatpush1.msra.mxu0 0.0
    %347 = vmatprep.subr.mxu0 0.0
    %348 = vmatpush1.msra.mxu0 0.0
    %349 = vmatprep.subr.mxu0 0.0
    %350 = vmatpush1.msra.mxu0 0.0
    %351 = vmatprep.subr.mxu0 0.0
    %352 = vmatpush1.msra.mxu0 0.0
    %353 = vmatprep.subr.mxu0 0.0
    %354 = vmatpush1.msra.mxu0 0.0
    %355 = vmatprep.subr.mxu0 0.0
    %356 = vmatpush1.msra.mxu0 0.0
    %357 = vmatprep.subr.mxu0 0.0
    %358 = vmatpush1.msra.mxu0 0.0
    %359 = vmatprep.subr.mxu0 0.0
    %360 = vmatpush1.msra.mxu0 0.0
    %361 = vmatprep.subr.mxu0 0.0
    %362 = vmatpush1.msra.mxu0 0.0
    %363 = vmatprep.subr.mxu0 0.0
    %364 = vmatpush1.msra.mxu0 0.0
    %365 = vmatprep.subr.mxu0 0.0
    %366 = vmatpush1.msra.mxu0 0.0
    %367 = vmatprep.subr.mxu0 0.0
    %368 = vmatpush1.msra.mxu0 0.0
    %369 = vmatprep.subr.mxu0 0.0
    %370 = vmatpush1.msra.mxu0 0.0
    %371 = vmatprep.subr.mxu0 0.0
    %372 = vmatpush1.msra.mxu0 0.0
    %373 = vmatprep.subr.mxu0 0.0
    %374 = vmatpush1.msra.mxu0 0.0
    %375 = vmatprep.subr.mxu0 0.0
    %376 = vmatpush1.msra.mxu0 0.0
    %377 = vmatprep.subr.mxu0 0.0
    %378 = vmatpush1.msra.mxu0 0.0
    %379 = vmatprep.subr.mxu0 0.0
    %380 = vmatpush1.msra.mxu0 0.0
    %381 = vmatprep.subr.mxu0 0.0
    %382 = vmatpush1.msra.mxu0 0.0
    %383 = vmatprep.subr.mxu0 0.0
    %384 = vmatpush1.msra.mxu0 0.0
    %385 = vmatprep.mubr.f32.mxu0 0.0
    %386 = vmatmul.mubr.f32.gmra.mrb[0].mxu0 %v144
    %v387 = vpop.f32.mrb[0].mxu0
    %v388 = vadd.f32 %v319, %v387
    %v389 = vpop.f32.mrb[0].mxu0
    %390 = vmatprep.mubr.f32.mxu0 0.0
    %391 = vmatmul.mubr.f32.gmra.mrb[0].mxu0 %v147
    %v392 = vpop.f32.mrb[0].mxu0
    %v393 = vadd.f32 %v319, %v392
    %v394 = vpop.f32.mrb[0].mxu0
    %395 = vdwg.mxu0
    %vm396 = vcmask 130048
    %v398 = vsel %vm396, %v216, 0
    %v401 = vsel %vm396, %v221, 0
    %v404 = vsel %vm396, %v302, 0
    %v407 = vsel %vm396, %v307, 0
    %409 = vmatprep.subr.mxu0 0.0
    %410 = vmatpush1.xpose.msra.mxu0 %v404
    %411 = vmatprep.subr.mxu0 0.0
    %412 = vmatpush1.xpose.msra.mxu0 %v407
    %413 = vmatprep.subr.mxu0 0.0
    %414 = vmatpush1.xpose.msra.mxu0 0.0
    %415 = vmatprep.subr.mxu0 0.0
    %416 = vmatpush1.xpose.msra.mxu0 0.0
    %417 = vmatprep.subr.mxu0 0.0
    %418 = vmatpush1.xpose.msra.mxu0 0.0
    %419 = vmatprep.subr.mxu0 0.0
    %420 = vmatpush1.xpose.msra.mxu0 0.0
    %421 = vmatprep.subr.mxu0 0.0
    %422 = vmatpush1.xpose.msra.mxu0 0.0
    %423 = vmatprep.subr.mxu0 0.0
    %424 = vmatpush1.xpose.msra.mxu0 0.0
    %425 = vmatprep.subr.mxu0 0.0
    %426 = vmatpush1.xpose.msra.mxu0 0.0
    %427 = vmatprep.subr.mxu0 0.0
    %428 = vmatpush1.xpose.msra.mxu0 0.0
    %429 = vmatprep.subr.mxu0 0.0
    %430 = vmatpush1.xpose.msra.mxu0 0.0
    %431 = vmatprep.subr.mxu0 0.0
    %432 = vmatpush1.xpose.msra.mxu0 0.0
    %433 = vmatprep.subr.mxu0 0.0
    %434 = vmatpush1.xpose.msra.mxu0 0.0
    %435 = vmatprep.subr.mxu0 0.0
    %436 = vmatpush1.xpose.msra.mxu0 0.0
    %437 = vmatprep.subr.mxu0 0.0
    %438 = vmatpush1.xpose.msra.mxu0 0.0
    %439 = vmatprep.subr.mxu0 0.0
    %440 = vmatpush1.xpose.msra.mxu0 0.0
    %441 = vmatprep.subr.mxu0 0.0
    %442 = vmatpush1.xpose.msra.mxu0 0.0
    %443 = vmatprep.subr.mxu0 0.0
    %444 = vmatpush1.xpose.msra.mxu0 0.0
    %445 = vmatprep.subr.mxu0 0.0
    %446 = vmatpush1.xpose.msra.mxu0 0.0
    %447 = vmatprep.subr.mxu0 0.0
    %448 = vmatpush1.xpose.msra.mxu0 0.0
    %449 = vmatprep.subr.mxu0 0.0
    %450 = vmatpush1.xpose.msra.mxu0 0.0
    %451 = vmatprep.subr.mxu0 0.0
    %452 = vmatpush1.xpose.msra.mxu0 0.0
    %453 = vmatprep.subr.mxu0 0.0
    %454 = vmatpush1.xpose.msra.mxu0 0.0
    %455 = vmatprep.subr.mxu0 0.0
    %456 = vmatpush1.xpose.msra.mxu0 0.0
    %457 = vmatprep.subr.mxu0 0.0
    %458 = vmatpush1.xpose.msra.mxu0 0.0
    %459 = vmatprep.subr.mxu0 0.0
    %460 = vmatpush1.xpose.msra.mxu0 0.0
    %461 = vmatprep.subr.mxu0 0.0
    %462 = vmatpush1.xpose.msra.mxu0 0.0
    %463 = vmatprep.subr.mxu0 0.0
    %464 = vmatpush1.xpose.msra.mxu0 0.0
    %465 = vmatprep.subr.mxu0 0.0
    %466 = vmatpush1.xpose.msra.mxu0 0.0
    %467 = vmatprep.subr.mxu0 0.0
    %468 = vmatpush1.xpose.msra.mxu0 0.0
    %469 = vmatprep.subr.mxu0 0.0
    %470 = vmatpush1.xpose.msra.mxu0 0.0
    %471 = vmatprep.subr.mxu0 0.0
    %472 = vmatpush1.xpose.msra.mxu0 0.0
    %473 = vmatprep.mubr.f32.mxu0 0.0
    %474 = vmatmul.mubr.f32.gmra.mrb[0].mxu0 %v398
    %v475 = vpop.f32.mrb[0].mxu0
    %v476 = vadd.f32 0.0, %v475
    %v477 = vpop.f32.mrb[0].mxu0
    %478 = vmatprep.mubr.f32.mxu0 0.0
    %479 = vmatmul.mubr.f32.gmra.mrb[0].mxu0 %v401
    %v480 = vpop.f32.mrb[0].mxu0
    %v481 = vadd.f32 0.0, %v480
    %v482 = vpop.f32.mrb[0].mxu0
    %483 = vdwg.mxu0
    %v484 = vmul.f32 %v476, 0.25
    %v485 = vmul.f32 %v481, 0.25
    %v486 = vadd.f32 %v484, %v77
    %v487 = vadd.f32 %v485, %v78
    %v488 = vsel %vm396, %v486, -inf
    %489 = vmax.xlane.f32.xlu0 %v488
    %v490 = vpop.xlane.xlu0 %489
    %v491 = vsel %vm396, %v487, -inf
    %492 = vmax.xlane.f32.xlu0 %v491
    %v493 = vpop.xlane.xlu0 %492
    %v494 = vsub.f32 %v486, %v490
    %v495 = vsub.f32 %v487, %v493
    %v496 = vmul.f32 %v494, 1.442695
    %v497 = vpow.pop %v496
    %v498 = vmul.f32 %v495, 1.442695
    %v499 = vpow.pop %v498
    %v500 = vsel %vm396, %v497, 0.0
    %501 = vadd.xlane.f32.xlu0 %v500
    %v502 = vpop.xlane.xlu0 %501
    %v503 = vsel %vm396, %v499, 0.0
    %504 = vadd.xlane.f32.xlu0 %v503
    %v505 = vpop.xlane.xlu0 %504
    %v506 = vrcp.pop %v502
    %v507 = vrcp.pop %v505
    %v508 = vmul.f32 %v497, %v506
    %v509 = vmul.f32 %v499, %v507
    %v511 = vsel %vm396, %v508, 0
    %v514 = vsel %vm396, %v509, 0
    %516 = vmatprep.subr.mxu0 0.0
    %517 = vmatpush1.msra.mxu0 %v388
    %518 = vmatprep.subr.mxu0 0.0
    %519 = vmatpush1.msra.mxu0 %v393
    %520 = vmatprep.subr.mxu0 0.0
    %521 = vmatpush1.msra.mxu0 0.0
    %522 = vmatprep.subr.mxu0 0.0
    %523 = vmatpush1.msra.mxu0 0.0
    %524 = vmatprep.subr.mxu0 0.0
    %525 = vmatpush1.msra.mxu0 0.0
    %526 = vmatprep.subr.mxu0 0.0
    %527 = vmatpush1.msra.mxu0 0.0
    %528 = vmatprep.subr.mxu0 0.0
    %529 = vmatpush1.msra.mxu0 0.0
    %530 = vmatprep.subr.mxu0 0.0
    %531 = vmatpush1.msra.mxu0 0.0
    %532 = vmatprep.subr.mxu0 0.0
    %533 = vmatpush1.msra.mxu0 0.0
    %534 = vmatprep.subr.mxu0 0.0
    %535 = vmatpush1.msra.mxu0 0.0
    %536 = vmatprep.subr.mxu0 0.0
    %537 = vmatpush1.msra.mxu0 0.0
    %538 = vmatprep.subr.mxu0 0.0
    %539 = vmatpush1.msra.mxu0 0.0
    %540 = vmatprep.subr.mxu0 0.0
    %541 = vmatpush1.msra.mxu0 0.0
    %542 = vmatprep.subr.mxu0 0.0
    %543 = vmatpush1.msra.mxu0 0.0
    %544 = vmatprep.subr.mxu0 0.0
    %545 = vmatpush1.msra.mxu0 0.0
    %546 = vmatprep.subr.mxu0 0.0
    %547 = vmatpush1.msra.mxu0 0.0
    %548 = vmatprep.subr.mxu0 0.0
    %549 = vmatpush1.msra.mxu0 0.0
    %550 = vmatprep.subr.mxu0 0.0
    %551 = vmatpush1.msra.mxu0 0.0
    %552 = vmatprep.subr.mxu0 0.0
    %553 = vmatpush1.msra.mxu0 0.0
    %554 = vmatprep.subr.mxu0 0.0
    %555 = vmatpush1.msra.mxu0 0.0
    %556 = vmatprep.subr.mxu0 0.0
    %557 = vmatpush1.msra.mxu0 0.0
    %558 = vmatprep.subr.mxu0 0.0
    %559 = vmatpush1.msra.mxu0 0.0
    %560 = vmatprep.subr.mxu0 0.0
    %561 = vmatpush1.msra.mxu0 0.0
    %562 = vmatprep.subr.mxu0 0.0
    %563 = vmatpush1.msra.mxu0 0.0
    %564 = vmatprep.subr.mxu0 0.0
    %565 = vmatpush1.msra.mxu0 0.0
    %566 = vmatprep.subr.mxu0 0.0
    %567 = vmatpush1.msra.mxu0 0.0
    %568 = vmatprep.subr.mxu0 0.0
    %569 = vmatpush1.msra.mxu0 0.0
    %570 = vmatprep.subr.mxu0 0.0
    %571 = vmatpush1.msra.mxu0 0.0
    %572 = vmatprep.subr.mxu0 0.0
    %573 = vmatpush1.msra.mxu0 0.0
    %574 = vmatprep.subr.mxu0 0.0
    %575 = vmatpush1.msra.mxu0 0.0
    %576 = vmatprep.subr.mxu0 0.0
    %577 = vmatpush1.msra.mxu0 0.0
    %578 = vmatprep.subr.mxu0 0.0
    %579 = vmatpush1.msra.mxu0 0.0
    %580 = vmatprep.mubr.f32.mxu0 0.0
    %581 = vmatmul.mubr.f32.gmra.mrb[0].mxu0 %v511
    %v582 = vpop.f32.mrb[0].mxu0
    %v583 = vadd.f32 0.0, %v582
    %v584 = vpop.f32.mrb[0].mxu0
    %585 = vmatprep.mubr.f32.mxu0 0.0
    %586 = vmatmul.mubr.f32.gmra.mrb[0].mxu0 %v514
    %v587 = vpop.f32.mrb[0].mxu0
    %v588 = vadd.f32 0.0, %v587
    %v589 = vpop.f32.mrb[0].mxu0
    %590 = vdwg.mxu0
    %v591 = vld [vmem:[%s11] sm:$0xff]
    %v592 = vld [vmem:[%s11 + $0x8] sm:$0xff]
    %v594 = vsel %vm396, %v583, 0
    %v597 = vsel %vm396, %v588, 0
    %599 = vmatprep.subr.mxu0 0.0
    %600 = vmatpush1.msra.mxu0 %v591
    %601 = vmatprep.subr.mxu0 0.0
    %602 = vmatpush1.msra.mxu0 %v592
    %603 = vmatprep.subr.mxu0 0.0
    %604 = vmatpush1.msra.mxu0 0.0
    %605 = vmatprep.subr.mxu0 0.0
    %606 = vmatpush1.msra.mxu0 0.0
    %607 = vmatprep.subr.mxu0 0.0
    %608 = vmatpush1.msra.mxu0 0.0
    %609 = vmatprep.subr.mxu0 0.0
    %610 = vmatpush1.msra.mxu0 0.0
    %611 = vmatprep.subr.mxu0 0.0
    %612 = vmatpush1.msra.mxu0 0.0
    %613 = vmatprep.subr.mxu0 0.0
    %614 = vmatpush1.msra.mxu0 0.0
    %615 = vmatprep.subr.mxu0 0.0
    %616 = vmatpush1.msra.mxu0 0.0
    %617 = vmatprep.subr.mxu0 0.0
    %618 = vmatpush1.msra.mxu0 0.0
    %619 = vmatprep.subr.mxu0 0.0
    %620 = vmatpush1.msra.mxu0 0.0
    %621 = vmatprep.subr.mxu0 0.0
    %622 = vmatpush1.msra.mxu0 0.0
    %623 = vmatprep.subr.mxu0 0.0
    %624 = vmatpush1.msra.mxu0 0.0
    %625 = vmatprep.subr.mxu0 0.0
    %626 = vmatpush1.msra.mxu0 0.0
    %627 = vmatprep.subr.mxu0 0.0
    %628 = vmatpush1.msra.mxu0 0.0
    %629 = vmatprep.subr.mxu0 0.0
    %630 = vmatpush1.msra.mxu0 0.0
    %631 = vmatprep.subr.mxu0 0.0
    %632 = vmatpush1.msra.mxu0 0.0
    %633 = vmatprep.subr.mxu0 0.0
    %634 = vmatpush1.msra.mxu0 0.0
    %635 = vmatprep.subr.mxu0 0.0
    %636 = vmatpush1.msra.mxu0 0.0
    %637 = vmatprep.subr.mxu0 0.0
    %638 = vmatpush1.msra.mxu0 0.0
    %639 = vmatprep.subr.mxu0 0.0
    %640 = vmatpush1.msra.mxu0 0.0
    %641 = vmatprep.subr.mxu0 0.0
    %642 = vmatpush1.msra.mxu0 0.0
    %643 = vmatprep.subr.mxu0 0.0
    %644 = vmatpush1.msra.mxu0 0.0
    %645 = vmatprep.subr.mxu0 0.0
    %646 = vmatpush1.msra.mxu0 0.0
    %647 = vmatprep.subr.mxu0 0.0
    %648 = vmatpush1.msra.mxu0 0.0
    %649 = vmatprep.subr.mxu0 0.0
    %650 = vmatpush1.msra.mxu0 0.0
    %651 = vmatprep.subr.mxu0 0.0
    %652 = vmatpush1.msra.mxu0 0.0
    %653 = vmatprep.subr.mxu0 0.0
    %654 = vmatpush1.msra.mxu0 0.0
    %655 = vmatprep.subr.mxu0 0.0
    %656 = vmatpush1.msra.mxu0 0.0
    %657 = vmatprep.subr.mxu0 0.0
    %658 = vmatpush1.msra.mxu0 0.0
    %659 = vmatprep.subr.mxu0 0.0
    %660 = vmatpush1.msra.mxu0 0.0
    %661 = vmatprep.subr.mxu0 0.0
    %662 = vmatpush1.msra.mxu0 0.0
    %663 = vmatprep.mubr.f32.mxu0 0.0
    %664 = vmatmul.mubr.f32.gmra.mrb[0].mxu0 %v594
    %v665 = vpop.f32.mrb[0].mxu0
    %v666 = vadd.f32 0.0, %v665
    %v667 = vpop.f32.mrb[0].mxu0
    %668 = vmatprep.mubr.f32.mxu0 0.0
    %669 = vmatmul.mubr.f32.gmra.mrb[0].mxu0 %v597
    %v670 = vpop.f32.mrb[0].mxu0
    %v671 = vadd.f32 0.0, %v670
    %v672 = vpop.f32.mrb[0].mxu0
    %673 = vdwg.mxu0
    %v674 = vadd.f32 %v130, %v666
    %v675 = vadd.f32 %v130, %v671
    %s676 = scalar_lea.vmem %s5, 32
    %v677 = vld [vmem:[%s676] sm:$0xff]
    %v678 = vld [vmem:[%s676 + $0x8] sm:$0xff]
    %v679 = vld [vmem:[%s676 + $0x10] sm:$0xff]
    %v680 = vld [vmem:[%s676 + $0x18] sm:$0xff]
    %s681 = scalar_lea.vmem %s8, 1
    %v682 = vld [vmem:[%s681] sm:$0x1]
    %v684 = vlaneseq
    %v685 = vshrl.u32 %v684, 7
    %v686 = vsub.s32 0, %v685
    %v687 = vrot.slane %v682, %v686
    %689 = vmatprep.subr.mxu0 0.0
    %690 = vmatpush1.msra.mxu0 %v677
    %691 = vmatprep.subr.mxu0 0.0
    %692 = vmatpush1.msra.mxu0 %v678
    %693 = vmatprep.subr.mxu0 0.0
    %694 = vmatpush1.msra.mxu0 %v679
    %695 = vmatprep.subr.mxu0 0.0
    %696 = vmatpush1.msra.mxu0 %v680
    %697 = vmatprep.subr.mxu0 0.0
    %698 = vmatpush1.msra.mxu0 0.0
    %699 = vmatprep.subr.mxu0 0.0
    %700 = vmatpush1.msra.mxu0 0.0
    %701 = vmatprep.subr.mxu0 0.0
    %702 = vmatpush1.msra.mxu0 0.0
    %703 = vmatprep.subr.mxu0 0.0
    %704 = vmatpush1.msra.mxu0 0.0
    %705 = vmatprep.subr.mxu0 0.0
    %706 = vmatpush1.msra.mxu0 0.0
    %707 = vmatprep.subr.mxu0 0.0
    %708 = vmatpush1.msra.mxu0 0.0
    %709 = vmatprep.subr.mxu0 0.0
    %710 = vmatpush1.msra.mxu0 0.0
    %711 = vmatprep.subr.mxu0 0.0
    %712 = vmatpush1.msra.mxu0 0.0
    %713 = vmatprep.subr.mxu0 0.0
    %714 = vmatpush1.msra.mxu0 0.0
    %715 = vmatprep.subr.mxu0 0.0
    %716 = vmatpush1.msra.mxu0 0.0
    %717 = vmatprep.subr.mxu0 0.0
    %718 = vmatpush1.msra.mxu0 0.0
    %719 = vmatprep.subr.mxu0 0.0
    %720 = vmatpush1.msra.mxu0 0.0
    %721 = vmatprep.subr.mxu0 0.0
    %722 = vmatpush1.msra.mxu0 0.0
    %723 = vmatprep.subr.mxu0 0.0
    %724 = vmatpush1.msra.mxu0 0.0
    %725 = vmatprep.subr.mxu0 0.0
    %726 = vmatpush1.msra.mxu0 0.0
    %727 = vmatprep.subr.mxu0 0.0
    %728 = vmatpush1.msra.mxu0 0.0
    %729 = vmatprep.subr.mxu0 0.0
    %730 = vmatpush1.msra.mxu0 0.0
    %731 = vmatprep.subr.mxu0 0.0
    %732 = vmatpush1.msra.mxu0 0.0
    %733 = vmatprep.subr.mxu0 0.0
    %734 = vmatpush1.msra.mxu0 0.0
    %735 = vmatprep.subr.mxu0 0.0
    %736 = vmatpush1.msra.mxu0 0.0
    %737 = vmatprep.subr.mxu0 0.0
    %738 = vmatpush1.msra.mxu0 0.0
    %739 = vmatprep.subr.mxu0 0.0
    %740 = vmatpush1.msra.mxu0 0.0
    %741 = vmatprep.subr.mxu0 0.0
    %742 = vmatpush1.msra.mxu0 0.0
    %743 = vmatprep.subr.mxu0 0.0
    %744 = vmatpush1.msra.mxu0 0.0
    %745 = vmatprep.subr.mxu0 0.0
    %746 = vmatpush1.msra.mxu0 0.0
    %747 = vmatprep.subr.mxu0 0.0
    %748 = vmatpush1.msra.mxu0 0.0
    %749 = vmatprep.subr.mxu0 0.0
    %750 = vmatpush1.msra.mxu0 0.0
    %751 = vmatprep.subr.mxu0 0.0
    %752 = vmatpush1.msra.mxu0 0.0
    %753 = vmatprep.mubr.f32.mxu0 0.0
    %754 = vmatmul.mubr.f32.gmra.mrb[0].mxu0 %v144
    %v755 = vpop.f32.mrb[0].mxu0
    %v756 = vadd.f32 %v687, %v755
    %v757 = vpop.f32.mrb[0].mxu0
    %758 = vmatprep.mubr.f32.mxu0 0.0
    %759 = vmatmul.mubr.f32.gmra.mrb[0].mxu0 %v147
    %v760 = vpop.f32.mrb[0].mxu0
    %v761 = vadd.f32 %v687, %v760
    %v762 = vpop.f32.mrb[0].mxu0
    %763 = vdwg.mxu0
    %s764 = scalar_lea.vmem %s6, 32
    %v765 = vld [vmem:[%s764] sm:$0xff]
    %v766 = vld [vmem:[%s764 + $0x8] sm:$0xff]
    %v767 = vld [vmem:[%s764 + $0x10] sm:$0xff]
    %v768 = vld [vmem:[%s764 + $0x18] sm:$0xff]
    %s769 = scalar_lea.vmem %s9, 1
    %v770 = vld [vmem:[%s769] sm:$0x1]
    %v772 = vlaneseq
    %v773 = vshrl.u32 %v772, 7
    %v774 = vsub.s32 0, %v773
    %v775 = vrot.slane %v770, %v774
    %777 = vmatprep.subr.mxu0 0.0
    %778 = vmatpush1.msra.mxu0 %v765
    %779 = vmatprep.subr.mxu0 0.0
    %780 = vmatpush1.msra.mxu0 %v766
    %781 = vmatprep.subr.mxu0 0.0
    %782 = vmatpush1.msra.mxu0 %v767
    %783 = vmatprep.subr.mxu0 0.0
    %784 = vmatpush1.msra.mxu0 %v768
    %785 = vmatprep.subr.mxu0 0.0
    %786 = vmatpush1.msra.mxu0 0.0
    %787 = vmatprep.subr.mxu0 0.0
    %788 = vmatpush1.msra.mxu0 0.0
    %789 = vmatprep.subr.mxu0 0.0
    %790 = vmatpush1.msra.mxu0 0.0
    %791 = vmatprep.subr.mxu0 0.0
    %792 = vmatpush1.msra.mxu0 0.0
    %793 = vmatprep.subr.mxu0 0.0
    %794 = vmatpush1.msra.mxu0 0.0
    %795 = vmatprep.subr.mxu0 0.0
    %796 = vmatpush1.msra.mxu0 0.0
    %797 = vmatprep.subr.mxu0 0.0
    %798 = vmatpush1.msra.mxu0 0.0
    %799 = vmatprep.subr.mxu0 0.0
    %800 = vmatpush1.msra.mxu0 0.0
    %801 = vmatprep.subr.mxu0 0.0
    %802 = vmatpush1.msra.mxu0 0.0
    %803 = vmatprep.subr.mxu0 0.0
    %804 = vmatpush1.msra.mxu0 0.0
    %805 = vmatprep.subr.mxu0 0.0
    %806 = vmatpush1.msra.mxu0 0.0
    %807 = vmatprep.subr.mxu0 0.0
    %808 = vmatpush1.msra.mxu0 0.0
    %809 = vmatprep.subr.mxu0 0.0
    %810 = vmatpush1.msra.mxu0 0.0
    %811 = vmatprep.subr.mxu0 0.0
    %812 = vmatpush1.msra.mxu0 0.0
    %813 = vmatprep.subr.mxu0 0.0
    %814 = vmatpush1.msra.mxu0 0.0
    %815 = vmatprep.subr.mxu0 0.0
    %816 = vmatpush1.msra.mxu0 0.0
    %817 = vmatprep.subr.mxu0 0.0
    %818 = vmatpush1.msra.mxu0 0.0
    %819 = vmatprep.subr.mxu0 0.0
    %820 = vmatpush1.msra.mxu0 0.0
    %821 = vmatprep.subr.mxu0 0.0
    %822 = vmatpush1.msra.mxu0 0.0
    %823 = vmatprep.subr.mxu0 0.0
    %824 = vmatpush1.msra.mxu0 0.0
    %825 = vmatprep.subr.mxu0 0.0
    %826 = vmatpush1.msra.mxu0 0.0
    %827 = vmatprep.subr.mxu0 0.0
    %828 = vmatpush1.msra.mxu0 0.0
    %829 = vmatprep.subr.mxu0 0.0
    %830 = vmatpush1.msra.mxu0 0.0
    %831 = vmatprep.subr.mxu0 0.0
    %832 = vmatpush1.msra.mxu0 0.0
    %833 = vmatprep.subr.mxu0 0.0
    %834 = vmatpush1.msra.mxu0 0.0
    %835 = vmatprep.subr.mxu0 0.0
    %836 = vmatpush1.msra.mxu0 0.0
    %837 = vmatprep.subr.mxu0 0.0
    %838 = vmatpush1.msra.mxu0 0.0
    %839 = vmatprep.subr.mxu0 0.0
    %840 = vmatpush1.msra.mxu0 0.0
    %841 = vmatprep.mubr.f32.mxu0 0.0
    %842 = vmatmul.mubr.f32.gmra.mrb[0].mxu0 %v144
    %v843 = vpop.f32.mrb[0].mxu0
    %v844 = vadd.f32 %v775, %v843
    %v845 = vpop.f32.mrb[0].mxu0
    %846 = vmatprep.mubr.f32.mxu0 0.0
    %847 = vmatmul.mubr.f32.gmra.mrb[0].mxu0 %v147
    %v848 = vpop.f32.mrb[0].mxu0
    %v849 = vadd.f32 %v775, %v848
    %v850 = vpop.f32.mrb[0].mxu0
    %851 = vdwg.mxu0
    %s852 = scalar_lea.vmem %s7, 32
    %v853 = vld [vmem:[%s852] sm:$0xff]
    %v854 = vld [vmem:[%s852 + $0x8] sm:$0xff]
    %v855 = vld [vmem:[%s852 + $0x10] sm:$0xff]
    %v856 = vld [vmem:[%s852 + $0x18] sm:$0xff]
    %s857 = scalar_lea.vmem %s10, 1
    %v858 = vld [vmem:[%s857] sm:$0x1]
    %v860 = vlaneseq
    %v861 = vshrl.u32 %v860, 7
    %v862 = vsub.s32 0, %v861
    %v863 = vrot.slane %v858, %v862
    %865 = vmatprep.subr.mxu0 0.0
    %866 = vmatpush1.msra.mxu0 %v853
    %867 = vmatprep.subr.mxu0 0.0
    %868 = vmatpush1.msra.mxu0 %v854
    %869 = vmatprep.subr.mxu0 0.0
    %870 = vmatpush1.msra.mxu0 %v855
    %871 = vmatprep.subr.mxu0 0.0
    %872 = vmatpush1.msra.mxu0 %v856
    %873 = vmatprep.subr.mxu0 0.0
    %874 = vmatpush1.msra.mxu0 0.0
    %875 = vmatprep.subr.mxu0 0.0
    %876 = vmatpush1.msra.mxu0 0.0
    %877 = vmatprep.subr.mxu0 0.0
    %878 = vmatpush1.msra.mxu0 0.0
    %879 = vmatprep.subr.mxu0 0.0
    %880 = vmatpush1.msra.mxu0 0.0
    %881 = vmatprep.subr.mxu0 0.0
    %882 = vmatpush1.msra.mxu0 0.0
    %883 = vmatprep.subr.mxu0 0.0
    %884 = vmatpush1.msra.mxu0 0.0
    %885 = vmatprep.subr.mxu0 0.0
    %886 = vmatpush1.msra.mxu0 0.0
    %887 = vmatprep.subr.mxu0 0.0
    %888 = vmatpush1.msra.mxu0 0.0
    %889 = vmatprep.subr.mxu0 0.0
    %890 = vmatpush1.msra.mxu0 0.0
    %891 = vmatprep.subr.mxu0 0.0
    %892 = vmatpush1.msra.mxu0 0.0
    %893 = vmatprep.subr.mxu0 0.0
    %894 = vmatpush1.msra.mxu0 0.0
    %895 = vmatprep.subr.mxu0 0.0
    %896 = vmatpush1.msra.mxu0 0.0
    %897 = vmatprep.subr.mxu0 0.0
    %898 = vmatpush1.msra.mxu0 0.0
    %899 = vmatprep.subr.mxu0 0.0
    %900 = vmatpush1.msra.mxu0 0.0
    %901 = vmatprep.subr.mxu0 0.0
    %902 = vmatpush1.msra.mxu0 0.0
    %903 = vmatprep.subr.mxu0 0.0
    %904 = vmatpush1.msra.mxu0 0.0
    %905 = vmatprep.subr.mxu0 0.0
    %906 = vmatpush1.msra.mxu0 0.0
    %907 = vmatprep.subr.mxu0 0.0
    %908 = vmatpush1.msra.mxu0 0.0
    %909 = vmatprep.subr.mxu0 0.0
    %910 = vmatpush1.msra.mxu0 0.0
    %911 = vmatprep.subr.mxu0 0.0
    %912 = vmatpush1.msra.mxu0 0.0
    %913 = vmatprep.subr.mxu0 0.0
    %914 = vmatpush1.msra.mxu0 0.0
    %915 = vmatprep.subr.mxu0 0.0
    %916 = vmatpush1.msra.mxu0 0.0
    %917 = vmatprep.subr.mxu0 0.0
    %918 = vmatpush1.msra.mxu0 0.0
    %919 = vmatprep.subr.mxu0 0.0
    %920 = vmatpush1.msra.mxu0 0.0
    %921 = vmatprep.subr.mxu0 0.0
    %922 = vmatpush1.msra.mxu0 0.0
    %923 = vmatprep.subr.mxu0 0.0
    %924 = vmatpush1.msra.mxu0 0.0
    %925 = vmatprep.subr.mxu0 0.0
    %926 = vmatpush1.msra.mxu0 0.0
    %927 = vmatprep.subr.mxu0 0.0
    %928 = vmatpush1.msra.mxu0 0.0
    %929 = vmatprep.mubr.f32.mxu0 0.0
    %930 = vmatmul.mubr.f32.gmra.mrb[0].mxu0 %v144
    %v931 = vpop.f32.mrb[0].mxu0
    %v932 = vadd.f32 %v863, %v931
    %v933 = vpop.f32.mrb[0].mxu0
    %934 = vmatprep.mubr.f32.mxu0 0.0
    %935 = vmatmul.mubr.f32.gmra.mrb[0].mxu0 %v147
    %v936 = vpop.f32.mrb[0].mxu0
    %v937 = vadd.f32 %v863, %v936
    %v938 = vpop.f32.mrb[0].mxu0
    %939 = vdwg.mxu0
    %v941 = vsel %vm396, %v756, 0
    %v944 = vsel %vm396, %v761, 0
    %v947 = vsel %vm396, %v844, 0
    %v950 = vsel %vm396, %v849, 0
    %952 = vmatprep.subr.mxu0 0.0
    %953 = vmatpush1.xpose.msra.mxu0 %v947
    %954 = vmatprep.subr.mxu0 0.0
    %955 = vmatpush1.xpose.msra.mxu0 %v950
    %956 = vmatprep.subr.mxu0 0.0
    %957 = vmatpush1.xpose.msra.mxu0 0.0
    %958 = vmatprep.subr.mxu0 0.0
    %959 = vmatpush1.xpose.msra.mxu0 0.0
    %960 = vmatprep.subr.mxu0 0.0
    %961 = vmatpush1.xpose.msra.mxu0 0.0
    %962 = vmatprep.subr.mxu0 0.0
    %963 = vmatpush1.xpose.msra.mxu0 0.0
    %964 = vmatprep.subr.mxu0 0.0
    %965 = vmatpush1.xpose.msra.mxu0 0.0
    %966 = vmatprep.subr.mxu0 0.0
    %967 = vmatpush1.xpose.msra.mxu0 0.0
    %968 = vmatprep.subr.mxu0 0.0
    %969 = vmatpush1.xpose.msra.mxu0 0.0
    %970 = vmatprep.subr.mxu0 0.0
    %971 = vmatpush1.xpose.msra.mxu0 0.0
    %972 = vmatprep.subr.mxu0 0.0
    %973 = vmatpush1.xpose.msra.mxu0 0.0
    %974 = vmatprep.subr.mxu0 0.0
    %975 = vmatpush1.xpose.msra.mxu0 0.0
    %976 = vmatprep.subr.mxu0 0.0
    %977 = vmatpush1.xpose.msra.mxu0 0.0
    %978 = vmatprep.subr.mxu0 0.0
    %979 = vmatpush1.xpose.msra.mxu0 0.0
    %980 = vmatprep.subr.mxu0 0.0
    %981 = vmatpush1.xpose.msra.mxu0 0.0
    %982 = vmatprep.subr.mxu0 0.0
    %983 = vmatpush1.xpose.msra.mxu0 0.0
    %984 = vmatprep.subr.mxu0 0.0
    %985 = vmatpush1.xpose.msra.mxu0 0.0
    %986 = vmatprep.subr.mxu0 0.0
    %987 = vmatpush1.xpose.msra.mxu0 0.0
    %988 = vmatprep.subr.mxu0 0.0
    %989 = vmatpush1.xpose.msra.mxu0 0.0
    %990 = vmatprep.subr.mxu0 0.0
    %991 = vmatpush1.xpose.msra.mxu0 0.0
    %992 = vmatprep.subr.mxu0 0.0
    %993 = vmatpush1.xpose.msra.mxu0 0.0
    %994 = vmatprep.subr.mxu0 0.0
    %995 = vmatpush1.xpose.msra.mxu0 0.0
    %996 = vmatprep.subr.mxu0 0.0
    %997 = vmatpush1.xpose.msra.mxu0 0.0
    %998 = vmatprep.subr.mxu0 0.0
    %999 = vmatpush1.xpose.msra.mxu0 0.0
    %1000 = vmatprep.subr.mxu0 0.0
    %1001 = vmatpush1.xpose.msra.mxu0 0.0
    %1002 = vmatprep.subr.mxu0 0.0
    %1003 = vmatpush1.xpose.msra.mxu0 0.0
    %1004 = vmatprep.subr.mxu0 0.0
    %1005 = vmatpush1.xpose.msra.mxu0 0.0
    %1006 = vmatprep.subr.mxu0 0.0
    %1007 = vmatpush1.xpose.msra.mxu0 0.0
    %1008 = vmatprep.subr.mxu0 0.0
    %1009 = vmatpush1.xpose.msra.mxu0 0.0
    %1010 = vmatprep.subr.mxu0 0.0
    %1011 = vmatpush1.xpose.msra.mxu0 0.0
    %1012 = vmatprep.subr.mxu0 0.0
    %1013 = vmatpush1.xpose.msra.mxu0 0.0
    %1014 = vmatprep.subr.mxu0 0.0
    %1015 = vmatpush1.xpose.msra.mxu0 0.0
    %1016 = vmatprep.mubr.f32.mxu0 0.0
    %1017 = vmatmul.mubr.f32.gmra.mrb[0].mxu0 %v941
    %v1018 = vpop.f32.mrb[0].mxu0
    %v1019 = vadd.f32 0.0, %v1018
    %v1020 = vpop.f32.mrb[0].mxu0
    %1021 = vmatprep.mubr.f32.mxu0 0.0
    %1022 = vmatmul.mubr.f32.gmra.mrb[0].mxu0 %v944
    %v1023 = vpop.f32.mrb[0].mxu0
    %v1024 = vadd.f32 0.0, %v1023
    %v1025 = vpop.f32.mrb[0].mxu0
    %1026 = vdwg.mxu0
    %v1027 = vmul.f32 %v1019, 0.25
    %v1028 = vmul.f32 %v1024, 0.25
    %v1029 = vadd.f32 %v1027, %v77
    %v1030 = vadd.f32 %v1028, %v78
    %v1031 = vsel %vm396, %v1029, -inf
    %1032 = vmax.xlane.f32.xlu0 %v1031
    %v1033 = vpop.xlane.xlu0 %1032
    %v1034 = vsel %vm396, %v1030, -inf
    %1035 = vmax.xlane.f32.xlu0 %v1034
    %v1036 = vpop.xlane.xlu0 %1035
    %v1037 = vsub.f32 %v1029, %v1033
    %v1038 = vsub.f32 %v1030, %v1036
    %v1039 = vmul.f32 %v1037, 1.442695
    %v1040 = vpow.pop %v1039
    %v1041 = vmul.f32 %v1038, 1.442695
    %v1042 = vpow.pop %v1041
    %v1043 = vsel %vm396, %v1040, 0.0
    %1044 = vadd.xlane.f32.xlu0 %v1043
    %v1045 = vpop.xlane.xlu0 %1044
    %v1046 = vsel %vm396, %v1042, 0.0
    %1047 = vadd.xlane.f32.xlu0 %v1046
    %v1048 = vpop.xlane.xlu0 %1047
    %v1049 = vrcp.pop %v1045
    %v1050 = vrcp.pop %v1048
    %v1051 = vmul.f32 %v1040, %v1049
    %v1052 = vmul.f32 %v1042, %v1050
    %v1054 = vsel %vm396, %v1051, 0
    %v1057 = vsel %vm396, %v1052, 0
    %1059 = vmatprep.subr.mxu0 0.0
    %1060 = vmatpush1.msra.mxu0 %v932
    %1061 = vmatprep.subr.mxu0 0.0
    %1062 = vmatpush1.msra.mxu0 %v937
    %1063 = vmatprep.subr.mxu0 0.0
    %1064 = vmatpush1.msra.mxu0 0.0
    %1065 = vmatprep.subr.mxu0 0.0
    %1066 = vmatpush1.msra.mxu0 0.0
    %1067 = vmatprep.subr.mxu0 0.0
    %1068 = vmatpush1.msra.mxu0 0.0
    %1069 = vmatprep.subr.mxu0 0.0
    %1070 = vmatpush1.msra.mxu0 0.0
    %1071 = vmatprep.subr.mxu0 0.0
    %1072 = vmatpush1.msra.mxu0 0.0
    %1073 = vmatprep.subr.mxu0 0.0
    %1074 = vmatpush1.msra.mxu0 0.0
    %1075 = vmatprep.subr.mxu0 0.0
    %1076 = vmatpush1.msra.mxu0 0.0
    %1077 = vmatprep.subr.mxu0 0.0
    %1078 = vmatpush1.msra.mxu0 0.0
    %1079 = vmatprep.subr.mxu0 0.0
    %1080 = vmatpush1.msra.mxu0 0.0
    %1081 = vmatprep.subr.mxu0 0.0
    %1082 = vmatpush1.msra.mxu0 0.0
    %1083 = vmatprep.subr.mxu0 0.0
    %1084 = vmatpush1.msra.mxu0 0.0
    %1085 = vmatprep.subr.mxu0 0.0
    %1086 = vmatpush1.msra.mxu0 0.0
    %1087 = vmatprep.subr.mxu0 0.0
    %1088 = vmatpush1.msra.mxu0 0.0
    %1089 = vmatprep.subr.mxu0 0.0
    %1090 = vmatpush1.msra.mxu0 0.0
    %1091 = vmatprep.subr.mxu0 0.0
    %1092 = vmatpush1.msra.mxu0 0.0
    %1093 = vmatprep.subr.mxu0 0.0
    %1094 = vmatpush1.msra.mxu0 0.0
    %1095 = vmatprep.subr.mxu0 0.0
    %1096 = vmatpush1.msra.mxu0 0.0
    %1097 = vmatprep.subr.mxu0 0.0
    %1098 = vmatpush1.msra.mxu0 0.0
    %1099 = vmatprep.subr.mxu0 0.0
    %1100 = vmatpush1.msra.mxu0 0.0
    %1101 = vmatprep.subr.mxu0 0.0
    %1102 = vmatpush1.msra.mxu0 0.0
    %1103 = vmatprep.subr.mxu0 0.0
    %1104 = vmatpush1.msra.mxu0 0.0
    %1105 = vmatprep.subr.mxu0 0.0
    %1106 = vmatpush1.msra.mxu0 0.0
    %1107 = vmatprep.subr.mxu0 0.0
    %1108 = vmatpush1.msra.mxu0 0.0
    %1109 = vmatprep.subr.mxu0 0.0
    %1110 = vmatpush1.msra.mxu0 0.0
    %1111 = vmatprep.subr.mxu0 0.0
    %1112 = vmatpush1.msra.mxu0 0.0
    %1113 = vmatprep.subr.mxu0 0.0
    %1114 = vmatpush1.msra.mxu0 0.0
    %1115 = vmatprep.subr.mxu0 0.0
    %1116 = vmatpush1.msra.mxu0 0.0
    %1117 = vmatprep.subr.mxu0 0.0
    %1118 = vmatpush1.msra.mxu0 0.0
    %1119 = vmatprep.subr.mxu0 0.0
    %1120 = vmatpush1.msra.mxu0 0.0
    %1121 = vmatprep.subr.mxu0 0.0
    %1122 = vmatpush1.msra.mxu0 0.0
    %1123 = vmatprep.mubr.f32.mxu0 0.0
    %1124 = vmatmul.mubr.f32.gmra.mrb[0].mxu0 %v1054
    %v1125 = vpop.f32.mrb[0].mxu0
    %v1126 = vadd.f32 0.0, %v1125
    %v1127 = vpop.f32.mrb[0].mxu0
    %1128 = vmatprep.mubr.f32.mxu0 0.0
    %1129 = vmatmul.mubr.f32.gmra.mrb[0].mxu0 %v1057
    %v1130 = vpop.f32.mrb[0].mxu0
    %v1131 = vadd.f32 0.0, %v1130
    %v1132 = vpop.f32.mrb[0].mxu0
    %1133 = vdwg.mxu0
    %s1134 = scalar_lea.vmem %s11, 16
    %v1135 = vld [vmem:[%s1134] sm:$0xff]
    %v1136 = vld [vmem:[%s1134 + $0x8] sm:$0xff]
    %v1138 = vsel %vm396, %v1126, 0
    %v1141 = vsel %vm396, %v1131, 0
    %1143 = vmatprep.subr.mxu0 0.0
    %1144 = vmatpush1.msra.mxu0 %v1135
    %1145 = vmatprep.subr.mxu0 0.0
    %1146 = vmatpush1.msra.mxu0 %v1136
    %1147 = vmatprep.subr.mxu0 0.0
    %1148 = vmatpush1.msra.mxu0 0.0
    %1149 = vmatprep.subr.mxu0 0.0
    %1150 = vmatpush1.msra.mxu0 0.0
    %1151 = vmatprep.subr.mxu0 0.0
    %1152 = vmatpush1.msra.mxu0 0.0
    %1153 = vmatprep.subr.mxu0 0.0
    %1154 = vmatpush1.msra.mxu0 0.0
    %1155 = vmatprep.subr.mxu0 0.0
    %1156 = vmatpush1.msra.mxu0 0.0
    %1157 = vmatprep.subr.mxu0 0.0
    %1158 = vmatpush1.msra.mxu0 0.0
    %1159 = vmatprep.subr.mxu0 0.0
    %1160 = vmatpush1.msra.mxu0 0.0
    %1161 = vmatprep.subr.mxu0 0.0
    %1162 = vmatpush1.msra.mxu0 0.0
    %1163 = vmatprep.subr.mxu0 0.0
    %1164 = vmatpush1.msra.mxu0 0.0
    %1165 = vmatprep.subr.mxu0 0.0
    %1166 = vmatpush1.msra.mxu0 0.0
    %1167 = vmatprep.subr.mxu0 0.0
    %1168 = vmatpush1.msra.mxu0 0.0
    %1169 = vmatprep.subr.mxu0 0.0
    %1170 = vmatpush1.msra.mxu0 0.0
    %1171 = vmatprep.subr.mxu0 0.0
    %1172 = vmatpush1.msra.mxu0 0.0
    %1173 = vmatprep.subr.mxu0 0.0
    %1174 = vmatpush1.msra.mxu0 0.0
    %1175 = vmatprep.subr.mxu0 0.0
    %1176 = vmatpush1.msra.mxu0 0.0
    %1177 = vmatprep.subr.mxu0 0.0
    %1178 = vmatpush1.msra.mxu0 0.0
    %1179 = vmatprep.subr.mxu0 0.0
    %1180 = vmatpush1.msra.mxu0 0.0
    %1181 = vmatprep.subr.mxu0 0.0
    %1182 = vmatpush1.msra.mxu0 0.0
    %1183 = vmatprep.subr.mxu0 0.0
    %1184 = vmatpush1.msra.mxu0 0.0
    %1185 = vmatprep.subr.mxu0 0.0
    %1186 = vmatpush1.msra.mxu0 0.0
    %1187 = vmatprep.subr.mxu0 0.0
    %1188 = vmatpush1.msra.mxu0 0.0
    %1189 = vmatprep.subr.mxu0 0.0
    %1190 = vmatpush1.msra.mxu0 0.0
    %1191 = vmatprep.subr.mxu0 0.0
    %1192 = vmatpush1.msra.mxu0 0.0
    %1193 = vmatprep.subr.mxu0 0.0
    %1194 = vmatpush1.msra.mxu0 0.0
    %1195 = vmatprep.subr.mxu0 0.0
    %1196 = vmatpush1.msra.mxu0 0.0
    %1197 = vmatprep.subr.mxu0 0.0
    %1198 = vmatpush1.msra.mxu0 0.0
    %1199 = vmatprep.subr.mxu0 0.0
    %1200 = vmatpush1.msra.mxu0 0.0
    %1201 = vmatprep.subr.mxu0 0.0
    %1202 = vmatpush1.msra.mxu0 0.0
    %1203 = vmatprep.subr.mxu0 0.0
    %1204 = vmatpush1.msra.mxu0 0.0
    %1205 = vmatprep.subr.mxu0 0.0
    %1206 = vmatpush1.msra.mxu0 0.0
    %1207 = vmatprep.mubr.f32.mxu0 0.0
    %1208 = vmatmul.mubr.f32.gmra.mrb[0].mxu0 %v1138
    %v1209 = vpop.f32.mrb[0].mxu0
    %v1210 = vadd.f32 0.0, %v1209
    %v1211 = vpop.f32.mrb[0].mxu0
    %1212 = vmatprep.mubr.f32.mxu0 0.0
    %1213 = vmatmul.mubr.f32.gmra.mrb[0].mxu0 %v1141
    %v1214 = vpop.f32.mrb[0].mxu0
    %v1215 = vadd.f32 0.0, %v1214
    %v1216 = vpop.f32.mrb[0].mxu0
    %1217 = vdwg.mxu0
    %v1218 = vadd.f32 %v674, %v1210
    %v1219 = vadd.f32 %v675, %v1215
    %v1220 = vadd.f32 %v1218, %v123
    %v1221 = vadd.f32 %v1219, %v124
    %v1222 = vld [vmem:[%s13] sm:$0x1]
    %v1223 = vld [vmem:[%s14] sm:$0x1]
    %v1224 = vsel %vm81, %v1220, 0.0
    %1225 = vadd.xlane.f32.xlu0 %v1224
    %v1226 = vpop.xlane.xlu0 %1225
    %v1227 = vsel %vm81, %v1221, 0.0
    %1228 = vadd.xlane.f32.xlu0 %v1227
    %v1229 = vpop.xlane.xlu0 %1228
    %v1230 = vmul.f32 %v1226, %v88
    %v1231 = vmul.f32 %v1229, %v88
    %v1232 = vsub.f32 %v1220, %v1230
    %v1233 = vsub.f32 %v1221, %v1231
    %v1234 = vmul.f32 %v1232, %v1232
    %v1235 = vmul.f32 %v1233, %v1233
    %v1236 = vsel %vm81, %v1234, 0.0
    %1237 = vadd.xlane.f32.xlu0 %v1236
    %v1238 = vpop.xlane.xlu0 %1237
    %v1239 = vsel %vm81, %v1235, 0.0
    %1240 = vadd.xlane.f32.xlu0 %v1239
    %v1241 = vpop.xlane.xlu0 %1240
    %v1242 = vmul.f32 %v1238, %v88
    %v1243 = vmul.f32 %v1241, %v88
    %v1244 = vadd.f32 %v1242, 1e-12
    %v1245 = vadd.f32 %v1243, 1e-12
    %v1246 = vrsqrt.pop %v1244
    %v1247 = vrsqrt.pop %v1245
    %v1248 = vmul.f32 %v1232, %v1246
    %v1249 = vmul.f32 %v1233, %v1247
    %v1251 = vlaneseq
    %v1252 = vshrl.u32 %v1251, 7
    %v1253 = vsub.s32 0, %v1252
    %v1254 = vrot.slane %v1222, %v1253
    %v1256 = vmul.f32 %v1248, %v1254
    %v1257 = vmul.f32 %v1249, %v1254
    %v1259 = vlaneseq
    %v1260 = vshrl.u32 %v1259, 7
    %v1261 = vsub.s32 0, %v1260
    %v1262 = vrot.slane %v1223, %v1261
    %v1264 = vadd.f32 %v1256, %v1262
    %v1265 = vadd.f32 %v1257, %v1262
    %v1266 = vld [vmem:[%s15] sm:$0xff]
    %v1267 = vld [vmem:[%s15 + $0x8] sm:$0xff]
    %v1268 = vld [vmem:[%s15 + $0x10] sm:$0xff]
    %v1269 = vld [vmem:[%s15 + $0x18] sm:$0xff]
    %v1270 = vld [vmem:[%s16] sm:$0x1]
    %v1272 = vlaneseq
    %v1273 = vshrl.u32 %v1272, 7
    %v1274 = vsub.s32 0, %v1273
    %v1275 = vrot.slane %v1270, %v1274
    %v1278 = vsel %vm81, %v1264, 0
    %v1281 = vsel %vm81, %v1265, 0
    %1283 = vmatprep.subr.mxu0 0.0
    %1284 = vmatpush1.msra.mxu0 %v1266
    %1285 = vmatprep.subr.mxu0 0.0
    %1286 = vmatpush1.msra.mxu0 %v1267
    %1287 = vmatprep.subr.mxu0 0.0
    %1288 = vmatpush1.msra.mxu0 %v1268
    %1289 = vmatprep.subr.mxu0 0.0
    %1290 = vmatpush1.msra.mxu0 %v1269
    %1291 = vmatprep.subr.mxu0 0.0
    %1292 = vmatpush1.msra.mxu0 0.0
    %1293 = vmatprep.subr.mxu0 0.0
    %1294 = vmatpush1.msra.mxu0 0.0
    %1295 = vmatprep.subr.mxu0 0.0
    %1296 = vmatpush1.msra.mxu0 0.0
    %1297 = vmatprep.subr.mxu0 0.0
    %1298 = vmatpush1.msra.mxu0 0.0
    %1299 = vmatprep.subr.mxu0 0.0
    %1300 = vmatpush1.msra.mxu0 0.0
    %1301 = vmatprep.subr.mxu0 0.0
    %1302 = vmatpush1.msra.mxu0 0.0
    %1303 = vmatprep.subr.mxu0 0.0
    %1304 = vmatpush1.msra.mxu0 0.0
    %1305 = vmatprep.subr.mxu0 0.0
    %1306 = vmatpush1.msra.mxu0 0.0
    %1307 = vmatprep.subr.mxu0 0.0
    %1308 = vmatpush1.msra.mxu0 0.0
    %1309 = vmatprep.subr.mxu0 0.0
    %1310 = vmatpush1.msra.mxu0 0.0
    %1311 = vmatprep.subr.mxu0 0.0
    %1312 = vmatpush1.msra.mxu0 0.0
    %1313 = vmatprep.subr.mxu0 0.0
    %1314 = vmatpush1.msra.mxu0 0.0
    %1315 = vmatprep.subr.mxu0 0.0
    %1316 = vmatpush1.msra.mxu0 0.0
    %1317 = vmatprep.subr.mxu0 0.0
    %1318 = vmatpush1.msra.mxu0 0.0
    %1319 = vmatprep.subr.mxu0 0.0
    %1320 = vmatpush1.msra.mxu0 0.0
    %1321 = vmatprep.subr.mxu0 0.0
    %1322 = vmatpush1.msra.mxu0 0.0
    %1323 = vmatprep.subr.mxu0 0.0
    %1324 = vmatpush1.msra.mxu0 0.0
    %1325 = vmatprep.subr.mxu0 0.0
    %1326 = vmatpush1.msra.mxu0 0.0
    %1327 = vmatprep.subr.mxu0 0.0
    %1328 = vmatpush1.msra.mxu0 0.0
    %1329 = vmatprep.subr.mxu0 0.0
    %1330 = vmatpush1.msra.mxu0 0.0
    %1331 = vmatprep.subr.mxu0 0.0
    %1332 = vmatpush1.msra.mxu0 0.0
    %1333 = vmatprep.subr.mxu0 0.0
    %1334 = vmatpush1.msra.mxu0 0.0
    %1335 = vmatprep.subr.mxu0 0.0
    %1336 = vmatpush1.msra.mxu0 0.0
    %1337 = vmatprep.subr.mxu0 0.0
    %1338 = vmatpush1.msra.mxu0 0.0
    %1339 = vmatprep.subr.mxu0 0.0
    %1340 = vmatpush1.msra.mxu0 0.0
    %1341 = vmatprep.subr.mxu0 0.0
    %1342 = vmatpush1.msra.mxu0 0.0
    %1343 = vmatprep.subr.mxu0 0.0
    %1344 = vmatpush1.msra.mxu0 0.0
    %1345 = vmatprep.subr.mxu0 0.0
    %1346 = vmatpush1.msra.mxu0 0.0
    %1347 = vmatprep.mubr.f32.mxu0 0.0
    %1348 = vmatmul.mubr.f32.gmra.mrb[0].mxu0 %v1278
    %v1349 = vpop.f32.mrb[0].mxu0
    %v1350 = vadd.f32 %v1275, %v1349
    %v1351 = vpop.f32.mrb[0].mxu0
    %1352 = vmatprep.mubr.f32.mxu0 0.0
    %1353 = vmatmul.mubr.f32.gmra.mrb[0].mxu0 %v1281
    %v1354 = vpop.f32.mrb[0].mxu0
    %v1355 = vadd.f32 %v1275, %v1354
    %v1356 = vpop.f32.mrb[0].mxu0
    %1357 = vdwg.mxu0
    %v1358 = vmul.f32 %v1350, 0.5
    %v1359 = vmul.f32 %v1355, 0.5
    %v1360 = vmul.f32 %v1350, 0.70710677
    %v1361 = vmul.f32 %v1355, 0.70710677
    %v1362 = verf.f32.pop %v1360
    %v1363 = verf.f32.pop %v1361
    %v1364 = vadd.f32 %v1362, 1.0
    %v1365 = vadd.f32 %v1363, 1.0
    %v1366 = vmul.f32 %v1358, %v1364
    %v1367 = vmul.f32 %v1359, %v1365
    %v1368 = vld [vmem:[%s17] sm:$0xff]
    %v1369 = vld [vmem:[%s17 + $0x8] sm:$0xff]
    %v1370 = vld [vmem:[%s17 + $0x10] sm:$0xff]
    %v1371 = vld [vmem:[%s17 + $0x18] sm:$0xff]
    %v1372 = vld [vmem:[%s17 + $0x20] sm:$0xff]
    %v1373 = vld [vmem:[%s17 + $0x28] sm:$0xff]
    %v1374 = vld [vmem:[%s17 + $0x30] sm:$0xff]
    %v1375 = vld [vmem:[%s17 + $0x38] sm:$0xff]
    %v1376 = vld [vmem:[%s18] sm:$0x1]
    %v1378 = vlaneseq
    %v1379 = vshrl.u32 %v1378, 7
    %v1380 = vsub.s32 0, %v1379
    %v1381 = vrot.slane %v1376, %v1380
    %vm1383 = vcmask 523264
    %v1385 = vsel %vm1383, %v1366, 0
    %v1388 = vsel %vm1383, %v1367, 0
    %1390 = vmatprep.subr.mxu0 0.0
    %1391 = vmatpush1.msra.mxu0 %v1368
    %1392 = vmatprep.subr.mxu0 0.0
    %1393 = vmatpush1.msra.mxu0 %v1369
    %1394 = vmatprep.subr.mxu0 0.0
    %1395 = vmatpush1.msra.mxu0 %v1370
    %1396 = vmatprep.subr.mxu0 0.0
    %1397 = vmatpush1.msra.mxu0 %v1371
    %1398 = vmatprep.subr.mxu0 0.0
    %1399 = vmatpush1.msra.mxu0 %v1372
    %1400 = vmatprep.subr.mxu0 0.0
    %1401 = vmatpush1.msra.mxu0 %v1373
    %1402 = vmatprep.subr.mxu0 0.0
    %1403 = vmatpush1.msra.mxu0 %v1374
    %1404 = vmatprep.subr.mxu0 0.0
    %1405 = vmatpush1.msra.mxu0 %v1375
    %1406 = vmatprep.subr.mxu0 0.0
    %1407 = vmatpush1.msra.mxu0 0.0
    %1408 = vmatprep.subr.mxu0 0.0
    %1409 = vmatpush1.msra.mxu0 0.0
    %1410 = vmatprep.subr.mxu0 0.0
    %1411 = vmatpush1.msra.mxu0 0.0
    %1412 = vmatprep.subr.mxu0 0.0
    %1413 = vmatpush1.msra.mxu0 0.0
    %1414 = vmatprep.subr.mxu0 0.0
    %1415 = vmatpush1.msra.mxu0 0.0
    %1416 = vmatprep.subr.mxu0 0.0
    %1417 = vmatpush1.msra.mxu0 0.0
    %1418 = vmatprep.subr.mxu0 0.0
    %1419 = vmatpush1.msra.mxu0 0.0
    %1420 = vmatprep.subr.mxu0 0.0
    %1421 = vmatpush1.msra.mxu0 0.0
    %1422 = vmatprep.subr.mxu0 0.0
    %1423 = vmatpush1.msra.mxu0 0.0
    %1424 = vmatprep.subr.mxu0 0.0
    %1425 = vmatpush1.msra.mxu0 0.0
    %1426 = vmatprep.subr.mxu0 0.0
    %1427 = vmatpush1.msra.mxu0 0.0
    %1428 = vmatprep.subr.mxu0 0.0
    %1429 = vmatpush1.msra.mxu0 0.0
    %1430 = vmatprep.subr.mxu0 0.0
    %1431 = vmatpush1.msra.mxu0 0.0
    %1432 = vmatprep.subr.mxu0 0.0
    %1433 = vmatpush1.msra.mxu0 0.0
    %1434 = vmatprep.subr.mxu0 0.0
    %1435 = vmatpush1.msra.mxu0 0.0
    %1436 = vmatprep.subr.mxu0 0.0
    %1437 = vmatpush1.msra.mxu0 0.0
    %1438 = vmatprep.subr.mxu0 0.0
    %1439 = vmatpush1.msra.mxu0 0.0
    %1440 = vmatprep.subr.mxu0 0.0
    %1441 = vmatpush1.msra.mxu0 0.0
    %1442 = vmatprep.subr.mxu0 0.0
    %1443 = vmatpush1.msra.mxu0 0.0
    %1444 = vmatprep.subr.mxu0 0.0
    %1445 = vmatpush1.msra.mxu0 0.0
    %1446 = vmatprep.subr.mxu0 0.0
    %1447 = vmatpush1.msra.mxu0 0.0
    %1448 = vmatprep.subr.mxu0 0.0
    %1449 = vmatpush1.msra.mxu0 0.0
    %1450 = vmatprep.subr.mxu0 0.0
    %1451 = vmatpush1.msra.mxu0 0.0
    %1452 = vmatprep.subr.mxu0 0.0
    %1453 = vmatpush1.msra.mxu0 0.0
    %1454 = vmatprep.mubr.f32.mxu0 0.0
    %1455 = vmatmul.mubr.f32.gmra.mrb[0].mxu0 %v1385
    %v1456 = vpop.f32.mrb[0].mxu0
    %v1457 = vadd.f32 %v1381, %v1456
    %v1458 = vpop.f32.mrb[0].mxu0
    %1459 = vmatprep.mubr.f32.mxu0 0.0
    %1460 = vmatmul.mubr.f32.gmra.mrb[0].mxu0 %v1388
    %v1461 = vpop.f32.mrb[0].mxu0
    %v1462 = vadd.f32 %v1381, %v1461
    %v1463 = vpop.f32.mrb[0].mxu0
    %1464 = vdwg.mxu0
    %v1465 = vadd.f32 %v1457, %v1264
    %v1466 = vadd.f32 %v1462, %v1265
    %v1467 = vld [vmem:[%s19] sm:$0x1]
    %v1468 = vld [vmem:[%s20] sm:$0x1]
    %v1469 = vsel %vm81, %v1465, 0.0
    %1470 = vadd.xlane.f32.xlu0 %v1469
    %v1471 = vpop.xlane.xlu0 %1470
    %v1472 = vsel %vm81, %v1466, 0.0
    %1473 = vadd.xlane.f32.xlu0 %v1472
    %v1474 = vpop.xlane.xlu0 %1473
    %v1475 = vmul.f32 %v1471, %v88
    %v1476 = vmul.f32 %v1474, %v88
    %v1477 = vsub.f32 %v1465, %v1475
    %v1478 = vsub.f32 %v1466, %v1476
    %v1479 = vmul.f32 %v1477, %v1477
    %v1480 = vmul.f32 %v1478, %v1478
    %v1481 = vsel %vm81, %v1479, 0.0
    %1482 = vadd.xlane.f32.xlu0 %v1481
    %v1483 = vpop.xlane.xlu0 %1482
    %v1484 = vsel %vm81, %v1480, 0.0
    %1485 = vadd.xlane.f32.xlu0 %v1484
    %v1486 = vpop.xlane.xlu0 %1485
    %v1487 = vmul.f32 %v1483, %v88
    %v1488 = vmul.f32 %v1486, %v88
    %v1489 = vadd.f32 %v1487, 1e-12
    %v1490 = vadd.f32 %v1488, 1e-12
    %v1491 = vrsqrt.pop %v1489
    %v1492 = vrsqrt.pop %v1490
    %v1493 = vmul.f32 %v1477, %v1491
    %v1494 = vmul.f32 %v1478, %v1492
    %v1496 = vlaneseq
    %v1497 = vshrl.u32 %v1496, 7
    %v1498 = vsub.s32 0, %v1497
    %v1499 = vrot.slane %v1467, %v1498
    %v1501 = vmul.f32 %v1493, %v1499
    %v1502 = vmul.f32 %v1494, %v1499
    %v1504 = vlaneseq
    %v1505 = vshrl.u32 %v1504, 7
    %v1506 = vsub.s32 0, %v1505
    %v1507 = vrot.slane %v1468, %v1506
    %v1509 = vadd.f32 %v1501, %v1507
    %v1510 = vadd.f32 %v1502, %v1507
    %s1511 = scalar_lea.vmem %s12, 1
    %v1512 = vld [vmem:[%s1511] sm:$0x1]
    %v1514 = vlaneseq
    %v1515 = vshrl.u32 %v1514, 7
    %v1516 = vsub.s32 0, %v1515
    %v1517 = vrot.slane %v1512, %v1516
    %s1519 = scalar_lea.vmem %s5, 64
    %v1520 = vld [vmem:[%s1519] sm:$0xff]
    %v1521 = vld [vmem:[%s1519 + $0x8] sm:$0xff]
    %v1522 = vld [vmem:[%s1519 + $0x10] sm:$0xff]
    %v1523 = vld [vmem:[%s1519 + $0x18] sm:$0xff]
    %s1524 = scalar_lea.vmem %s8, 2
    %v1525 = vld [vmem:[%s1524] sm:$0x1]
    %v1527 = vlaneseq
    %v1528 = vshrl.u32 %v1527, 7
    %v1529 = vsub.s32 0, %v1528
    %v1530 = vrot.slane %v1525, %v1529
    %v1533 = vsel %vm81, %v1509, 0
    %v1536 = vsel %vm81, %v1510, 0
    %1538 = vmatprep.subr.mxu0 0.0
    %1539 = vmatpush1.msra.mxu0 %v1520
    %1540 = vmatprep.subr.mxu0 0.0
    %1541 = vmatpush1.msra.mxu0 %v1521
    %1542 = vmatprep.subr.mxu0 0.0
    %1543 = vmatpush1.msra.mxu0 %v1522
    %1544 = vmatprep.subr.mxu0 0.0
    %1545 = vmatpush1.msra.mxu0 %v1523
    %1546 = vmatprep.subr.mxu0 0.0
    %1547 = vmatpush1.msra.mxu0 0.0
    %1548 = vmatprep.subr.mxu0 0.0
    %1549 = vmatpush1.msra.mxu0 0.0
    %1550 = vmatprep.subr.mxu0 0.0
    %1551 = vmatpush1.msra.mxu0 0.0
    %1552 = vmatprep.subr.mxu0 0.0
    %1553 = vmatpush1.msra.mxu0 0.0
    %1554 = vmatprep.subr.mxu0 0.0
    %1555 = vmatpush1.msra.mxu0 0.0
    %1556 = vmatprep.subr.mxu0 0.0
    %1557 = vmatpush1.msra.mxu0 0.0
    %1558 = vmatprep.subr.mxu0 0.0
    %1559 = vmatpush1.msra.mxu0 0.0
    %1560 = vmatprep.subr.mxu0 0.0
    %1561 = vmatpush1.msra.mxu0 0.0
    %1562 = vmatprep.subr.mxu0 0.0
    %1563 = vmatpush1.msra.mxu0 0.0
    %1564 = vmatprep.subr.mxu0 0.0
    %1565 = vmatpush1.msra.mxu0 0.0
    %1566 = vmatprep.subr.mxu0 0.0
    %1567 = vmatpush1.msra.mxu0 0.0
    %1568 = vmatprep.subr.mxu0 0.0
    %1569 = vmatpush1.msra.mxu0 0.0
    %1570 = vmatprep.subr.mxu0 0.0
    %1571 = vmatpush1.msra.mxu0 0.0
    %1572 = vmatprep.subr.mxu0 0.0
    %1573 = vmatpush1.msra.mxu0 0.0
    %1574 = vmatprep.subr.mxu0 0.0
    %1575 = vmatpush1.msra.mxu0 0.0
    %1576 = vmatprep.subr.mxu0 0.0
    %1577 = vmatpush1.msra.mxu0 0.0
    %1578 = vmatprep.subr.mxu0 0.0
    %1579 = vmatpush1.msra.mxu0 0.0
    %1580 = vmatprep.subr.mxu0 0.0
    %1581 = vmatpush1.msra.mxu0 0.0
    %1582 = vmatprep.subr.mxu0 0.0
    %1583 = vmatpush1.msra.mxu0 0.0
    %1584 = vmatprep.subr.mxu0 0.0
    %1585 = vmatpush1.msra.mxu0 0.0
    %1586 = vmatprep.subr.mxu0 0.0
    %1587 = vmatpush1.msra.mxu0 0.0
    %1588 = vmatprep.subr.mxu0 0.0
    %1589 = vmatpush1.msra.mxu0 0.0
    %1590 = vmatprep.subr.mxu0 0.0
    %1591 = vmatpush1.msra.mxu0 0.0
    %1592 = vmatprep.subr.mxu0 0.0
    %1593 = vmatpush1.msra.mxu0 0.0
    %1594 = vmatprep.subr.mxu0 0.0
    %1595 = vmatpush1.msra.mxu0 0.0
    %1596 = vmatprep.subr.mxu0 0.0
    %1597 = vmatpush1.msra.mxu0 0.0
    %1598 = vmatprep.subr.mxu0 0.0
    %1599 = vmatpush1.msra.mxu0 0.0
    %1600 = vmatprep.subr.mxu0 0.0
    %1601 = vmatpush1.msra.mxu0 0.0
    %1602 = vmatprep.mubr.f32.mxu0 0.0
    %1603 = vmatmul.mubr.f32.gmra.mrb[0].mxu0 %v1533
    %v1604 = vpop.f32.mrb[0].mxu0
    %v1605 = vadd.f32 %v1530, %v1604
    %v1606 = vpop.f32.mrb[0].mxu0
    %1607 = vmatprep.mubr.f32.mxu0 0.0
    %1608 = vmatmul.mubr.f32.gmra.mrb[0].mxu0 %v1536
    %v1609 = vpop.f32.mrb[0].mxu0
    %v1610 = vadd.f32 %v1530, %v1609
    %v1611 = vpop.f32.mrb[0].mxu0
    %1612 = vdwg.mxu0
    %s1613 = scalar_lea.vmem %s6, 64
    %v1614 = vld [vmem:[%s1613] sm:$0xff]
    %v1615 = vld [vmem:[%s1613 + $0x8] sm:$0xff]
    %v1616 = vld [vmem:[%s1613 + $0x10] sm:$0xff]
    %v1617 = vld [vmem:[%s1613 + $0x18] sm:$0xff]
    %s1618 = scalar_lea.vmem %s9, 2
    %v1619 = vld [vmem:[%s1618] sm:$0x1]
    %v1621 = vlaneseq
    %v1622 = vshrl.u32 %v1621, 7
    %v1623 = vsub.s32 0, %v1622
    %v1624 = vrot.slane %v1619, %v1623
    %1626 = vmatprep.subr.mxu0 0.0
    %1627 = vmatpush1.msra.mxu0 %v1614
    %1628 = vmatprep.subr.mxu0 0.0
    %1629 = vmatpush1.msra.mxu0 %v1615
    %1630 = vmatprep.subr.mxu0 0.0
    %1631 = vmatpush1.msra.mxu0 %v1616
    %1632 = vmatprep.subr.mxu0 0.0
    %1633 = vmatpush1.msra.mxu0 %v1617
    %1634 = vmatprep.subr.mxu0 0.0
    %1635 = vmatpush1.msra.mxu0 0.0
    %1636 = vmatprep.subr.mxu0 0.0
    %1637 = vmatpush1.msra.mxu0 0.0
    %1638 = vmatprep.subr.mxu0 0.0
    %1639 = vmatpush1.msra.mxu0 0.0
    %1640 = vmatprep.subr.mxu0 0.0
    %1641 = vmatpush1.msra.mxu0 0.0
    %1642 = vmatprep.subr.mxu0 0.0
    %1643 = vmatpush1.msra.mxu0 0.0
    %1644 = vmatprep.subr.mxu0 0.0
    %1645 = vmatpush1.msra.mxu0 0.0
    %1646 = vmatprep.subr.mxu0 0.0
    %1647 = vmatpush1.msra.mxu0 0.0
    %1648 = vmatprep.subr.mxu0 0.0
    %1649 = vmatpush1.msra.mxu0 0.0
    %1650 = vmatprep.subr.mxu0 0.0
    %1651 = vmatpush1.msra.mxu0 0.0
    %1652 = vmatprep.subr.mxu0 0.0
    %1653 = vmatpush1.msra.mxu0 0.0
    %1654 = vmatprep.subr.mxu0 0.0
    %1655 = vmatpush1.msra.mxu0 0.0
    %1656 = vmatprep.subr.mxu0 0.0
    %1657 = vmatpush1.msra.mxu0 0.0
    %1658 = vmatprep.subr.mxu0 0.0
    %1659 = vmatpush1.msra.mxu0 0.0
    %1660 = vmatprep.subr.mxu0 0.0
    %1661 = vmatpush1.msra.mxu0 0.0
    %1662 = vmatprep.subr.mxu0 0.0
    %1663 = vmatpush1.msra.mxu0 0.0
    %1664 = vmatprep.subr.mxu0 0.0
    %1665 = vmatpush1.msra.mxu0 0.0
    %1666 = vmatprep.subr.mxu0 0.0
    %1667 = vmatpush1.msra.mxu0 0.0
    %1668 = vmatprep.subr.mxu0 0.0
    %1669 = vmatpush1.msra.mxu0 0.0
    %1670 = vmatprep.subr.mxu0 0.0
    %1671 = vmatpush1.msra.mxu0 0.0
    %1672 = vmatprep.subr.mxu0 0.0
    %1673 = vmatpush1.msra.mxu0 0.0
    %1674 = vmatprep.subr.mxu0 0.0
    %1675 = vmatpush1.msra.mxu0 0.0
    %1676 = vmatprep.subr.mxu0 0.0
    %1677 = vmatpush1.msra.mxu0 0.0
    %1678 = vmatprep.subr.mxu0 0.0
    %1679 = vmatpush1.msra.mxu0 0.0
    %1680 = vmatprep.subr.mxu0 0.0
    %1681 = vmatpush1.msra.mxu0 0.0
    %1682 = vmatprep.subr.mxu0 0.0
    %1683 = vmatpush1.msra.mxu0 0.0
    %1684 = vmatprep.subr.mxu0 0.0
    %1685 = vmatpush1.msra.mxu0 0.0
    %1686 = vmatprep.subr.mxu0 0.0
    %1687 = vmatpush1.msra.mxu0 0.0
    %1688 = vmatprep.subr.mxu0 0.0
    %1689 = vmatpush1.msra.mxu0 0.0
    %1690 = vmatprep.mubr.f32.mxu0 0.0
    %1691 = vmatmul.mubr.f32.gmra.mrb[0].mxu0 %v1533
    %v1692 = vpop.f32.mrb[0].mxu0
    %v1693 = vadd.f32 %v1624, %v1692
    %v1694 = vpop.f32.mrb[0].mxu0
    %1695 = vmatprep.mubr.f32.mxu0 0.0
    %1696 = vmatmul.mubr.f32.gmra.mrb[0].mxu0 %v1536
    %v1697 = vpop.f32.mrb[0].mxu0
    %v1698 = vadd.f32 %v1624, %v1697
    %v1699 = vpop.f32.mrb[0].mxu0
    %1700 = vdwg.mxu0
    %s1701 = scalar_lea.vmem %s7, 64
    %v1702 = vld [vmem:[%s1701] sm:$0xff]
    %v1703 = vld [vmem:[%s1701 + $0x8] sm:$0xff]
    %v1704 = vld [vmem:[%s1701 + $0x10] sm:$0xff]
    %v1705 = vld [vmem:[%s1701 + $0x18] sm:$0xff]
    %s1706 = scalar_lea.vmem %s10, 2
    %v1707 = vld [vmem:[%s1706] sm:$0x1]
    %v1709 = vlaneseq
    %v1710 = vshrl.u32 %v1709, 7
    %v1711 = vsub.s32 0, %v1710
    %v1712 = vrot.slane %v1707, %v1711
    %1714 = vmatprep.subr.mxu0 0.0
    %1715 = vmatpush1.msra.mxu0 %v1702
    %1716 = vmatprep.subr.mxu0 0.0
    %1717 = vmatpush1.msra.mxu0 %v1703
    %1718 = vmatprep.subr.mxu0 0.0
    %1719 = vmatpush1.msra.mxu0 %v1704
    %1720 = vmatprep.subr.mxu0 0.0
    %1721 = vmatpush1.msra.mxu0 %v1705
    %1722 = vmatprep.subr.mxu0 0.0
    %1723 = vmatpush1.msra.mxu0 0.0
    %1724 = vmatprep.subr.mxu0 0.0
    %1725 = vmatpush1.msra.mxu0 0.0
    %1726 = vmatprep.subr.mxu0 0.0
    %1727 = vmatpush1.msra.mxu0 0.0
    %1728 = vmatprep.subr.mxu0 0.0
    %1729 = vmatpush1.msra.mxu0 0.0
    %1730 = vmatprep.subr.mxu0 0.0
    %1731 = vmatpush1.msra.mxu0 0.0
    %1732 = vmatprep.subr.mxu0 0.0
    %1733 = vmatpush1.msra.mxu0 0.0
    %1734 = vmatprep.subr.mxu0 0.0
    %1735 = vmatpush1.msra.mxu0 0.0
    %1736 = vmatprep.subr.mxu0 0.0
    %1737 = vmatpush1.msra.mxu0 0.0
    %1738 = vmatprep.subr.mxu0 0.0
    %1739 = vmatpush1.msra.mxu0 0.0
    %1740 = vmatprep.subr.mxu0 0.0
    %1741 = vmatpush1.msra.mxu0 0.0
    %1742 = vmatprep.subr.mxu0 0.0
    %1743 = vmatpush1.msra.mxu0 0.0
    %1744 = vmatprep.subr.mxu0 0.0
    %1745 = vmatpush1.msra.mxu0 0.0
    %1746 = vmatprep.subr.mxu0 0.0
    %1747 = vmatpush1.msra.mxu0 0.0
    %1748 = vmatprep.subr.mxu0 0.0
    %1749 = vmatpush1.msra.mxu0 0.0
    %1750 = vmatprep.subr.mxu0 0.0
    %1751 = vmatpush1.msra.mxu0 0.0
    %1752 = vmatprep.subr.mxu0 0.0
    %1753 = vmatpush1.msra.mxu0 0.0
    %1754 = vmatprep.subr.mxu0 0.0
    %1755 = vmatpush1.msra.mxu0 0.0
    %1756 = vmatprep.subr.mxu0 0.0
    %1757 = vmatpush1.msra.mxu0 0.0
    %1758 = vmatprep.subr.mxu0 0.0
    %1759 = vmatpush1.msra.mxu0 0.0
    %1760 = vmatprep.subr.mxu0 0.0
    %1761 = vmatpush1.msra.mxu0 0.0
    %1762 = vmatprep.subr.mxu0 0.0
    %1763 = vmatpush1.msra.mxu0 0.0
    %1764 = vmatprep.subr.mxu0 0.0
    %1765 = vmatpush1.msra.mxu0 0.0
    %1766 = vmatprep.subr.mxu0 0.0
    %1767 = vmatpush1.msra.mxu0 0.0
    %1768 = vmatprep.subr.mxu0 0.0
    %1769 = vmatpush1.msra.mxu0 0.0
    %1770 = vmatprep.subr.mxu0 0.0
    %1771 = vmatpush1.msra.mxu0 0.0
    %1772 = vmatprep.subr.mxu0 0.0
    %1773 = vmatpush1.msra.mxu0 0.0
    %1774 = vmatprep.subr.mxu0 0.0
    %1775 = vmatpush1.msra.mxu0 0.0
    %1776 = vmatprep.subr.mxu0 0.0
    %1777 = vmatpush1.msra.mxu0 0.0
    %1778 = vmatprep.mubr.f32.mxu0 0.0
    %1779 = vmatmul.mubr.f32.gmra.mrb[0].mxu0 %v1533
    %v1780 = vpop.f32.mrb[0].mxu0
    %v1781 = vadd.f32 %v1712, %v1780
    %v1782 = vpop.f32.mrb[0].mxu0
    %1783 = vmatprep.mubr.f32.mxu0 0.0
    %1784 = vmatmul.mubr.f32.gmra.mrb[0].mxu0 %v1536
    %v1785 = vpop.f32.mrb[0].mxu0
    %v1786 = vadd.f32 %v1712, %v1785
    %v1787 = vpop.f32.mrb[0].mxu0
    %1788 = vdwg.mxu0
    %v1790 = vsel %vm396, %v1605, 0
    %v1793 = vsel %vm396, %v1610, 0
    %v1796 = vsel %vm396, %v1693, 0
    %v1799 = vsel %vm396, %v1698, 0
    %1801 = vmatprep.subr.mxu0 0.0
    %1802 = vmatpush1.xpose.msra.mxu0 %v1796
    %1803 = vmatprep.subr.mxu0 0.0
    %1804 = vmatpush1.xpose.msra.mxu0 %v1799
    %1805 = vmatprep.subr.mxu0 0.0
    %1806 = vmatpush1.xpose.msra.mxu0 0.0
    %1807 = vmatprep.subr.mxu0 0.0
    %1808 = vmatpush1.xpose.msra.mxu0 0.0
    %1809 = vmatprep.subr.mxu0 0.0
    %1810 = vmatpush1.xpose.msra.mxu0 0.0
    %1811 = vmatprep.subr.mxu0 0.0
    %1812 = vmatpush1.xpose.msra.mxu0 0.0
    %1813 = vmatprep.subr.mxu0 0.0
    %1814 = vmatpush1.xpose.msra.mxu0 0.0
    %1815 = vmatprep.subr.mxu0 0.0
    %1816 = vmatpush1.xpose.msra.mxu0 0.0
    %1817 = vmatprep.subr.mxu0 0.0
    %1818 = vmatpush1.xpose.msra.mxu0 0.0
    %1819 = vmatprep.subr.mxu0 0.0
    %1820 = vmatpush1.xpose.msra.mxu0 0.0
    %1821 = vmatprep.subr.mxu0 0.0
    %1822 = vmatpush1.xpose.msra.mxu0 0.0
    %1823 = vmatprep.subr.mxu0 0.0
    %1824 = vmatpush1.xpose.msra.mxu0 0.0
    %1825 = vmatprep.subr.mxu0 0.0
    %1826 = vmatpush1.xpose.msra.mxu0 0.0
    %1827 = vmatprep.subr.mxu0 0.0
    %1828 = vmatpush1.xpose.msra.mxu0 0.0
    %1829 = vmatprep.subr.mxu0 0.0
    %1830 = vmatpush1.xpose.msra.mxu0 0.0
    %1831 = vmatprep.subr.mxu0 0.0
    %1832 = vmatpush1.xpose.msra.mxu0 0.0
    %1833 = vmatprep.subr.mxu0 0.0
    %1834 = vmatpush1.xpose.msra.mxu0 0.0
    %1835 = vmatprep.subr.mxu0 0.0
    %1836 = vmatpush1.xpose.msra.mxu0 0.0
    %1837 = vmatprep.subr.mxu0 0.0
    %1838 = vmatpush1.xpose.msra.mxu0 0.0
    %1839 = vmatprep.subr.mxu0 0.0
    %1840 = vmatpush1.xpose.msra.mxu0 0.0
    %1841 = vmatprep.subr.mxu0 0.0
    %1842 = vmatpush1.xpose.msra.mxu0 0.0
    %1843 = vmatprep.subr.mxu0 0.0
    %1844 = vmatpush1.xpose.msra.mxu0 0.0
    %1845 = vmatprep.subr.mxu0 0.0
    %1846 = vmatpush1.xpose.msra.mxu0 0.0
    %1847 = vmatprep.subr.mxu0 0.0
    %1848 = vmatpush1.xpose.msra.mxu0 0.0
    %1849 = vmatprep.subr.mxu0 0.0
    %1850 = vmatpush1.xpose.msra.mxu0 0.0
    %1851 = vmatprep.subr.mxu0 0.0
    %1852 = vmatpush1.xpose.msra.mxu0 0.0
    %1853 = vmatprep.subr.mxu0 0.0
    %1854 = vmatpush1.xpose.msra.mxu0 0.0
    %1855 = vmatprep.subr.mxu0 0.0
    %1856 = vmatpush1.xpose.msra.mxu0 0.0
    %1857 = vmatprep.subr.mxu0 0.0
    %1858 = vmatpush1.xpose.msra.mxu0 0.0
    %1859 = vmatprep.subr.mxu0 0.0
    %1860 = vmatpush1.xpose.msra.mxu0 0.0
    %1861 = vmatprep.subr.mxu0 0.0
    %1862 = vmatpush1.xpose.msra.mxu0 0.0
    %1863 = vmatprep.subr.mxu0 0.0
    %1864 = vmatpush1.xpose.msra.mxu0 0.0
    %1865 = vmatprep.mubr.f32.mxu0 0.0
    %1866 = vmatmul.mubr.f32.gmra.mrb[0].mxu0 %v1790
    %v1867 = vpop.f32.mrb[0].mxu0
    %v1868 = vadd.f32 0.0, %v1867
    %v1869 = vpop.f32.mrb[0].mxu0
    %1870 = vmatprep.mubr.f32.mxu0 0.0
    %1871 = vmatmul.mubr.f32.gmra.mrb[0].mxu0 %v1793
    %v1872 = vpop.f32.mrb[0].mxu0
    %v1873 = vadd.f32 0.0, %v1872
    %v1874 = vpop.f32.mrb[0].mxu0
    %1875 = vdwg.mxu0
    %v1876 = vmul.f32 %v1868, 0.25
    %v1877 = vmul.f32 %v1873, 0.25
    %v1878 = vadd.f32 %v1876, %v77
    %v1879 = vadd.f32 %v1877, %v78
    %v1880 = vsel %vm396, %v1878, -inf
    %1881 = vmax.xlane.f32.xlu0 %v1880
    %v1882 = vpop.xlane.xlu0 %1881
    %v1883 = vsel %vm396, %v1879, -inf
    %1884 = vmax.xlane.f32.xlu0 %v1883
    %v1885 = vpop.xlane.xlu0 %1884
    %v1886 = vsub.f32 %v1878, %v1882
    %v1887 = vsub.f32 %v1879, %v1885
    %v1888 = vmul.f32 %v1886, 1.442695
    %v1889 = vpow.pop %v1888
    %v1890 = vmul.f32 %v1887, 1.442695
    %v1891 = vpow.pop %v1890
    %v1892 = vsel %vm396, %v1889, 0.0
    %1893 = vadd.xlane.f32.xlu0 %v1892
    %v1894 = vpop.xlane.xlu0 %1893
    %v1895 = vsel %vm396, %v1891, 0.0
    %1896 = vadd.xlane.f32.xlu0 %v1895
    %v1897 = vpop.xlane.xlu0 %1896
    %v1898 = vrcp.pop %v1894
    %v1899 = vrcp.pop %v1897
    %v1900 = vmul.f32 %v1889, %v1898
    %v1901 = vmul.f32 %v1891, %v1899
    %v1903 = vsel %vm396, %v1900, 0
    %v1906 = vsel %vm396, %v1901, 0
    %1908 = vmatprep.subr.mxu0 0.0
    %1909 = vmatpush1.msra.mxu0 %v1781
    %1910 = vmatprep.subr.mxu0 0.0
    %1911 = vmatpush1.msra.mxu0 %v1786
    %1912 = vmatprep.subr.mxu0 0.0
    %1913 = vmatpush1.msra.mxu0 0.0
    %1914 = vmatprep.subr.mxu0 0.0
    %1915 = vmatpush1.msra.mxu0 0.0
    %1916 = vmatprep.subr.mxu0 0.0
    %1917 = vmatpush1.msra.mxu0 0.0
    %1918 = vmatprep.subr.mxu0 0.0
    %1919 = vmatpush1.msra.mxu0 0.0
    %1920 = vmatprep.subr.mxu0 0.0
    %1921 = vmatpush1.msra.mxu0 0.0
    %1922 = vmatprep.subr.mxu0 0.0
    %1923 = vmatpush1.msra.mxu0 0.0
    %1924 = vmatprep.subr.mxu0 0.0
    %1925 = vmatpush1.msra.mxu0 0.0
    %1926 = vmatprep.subr.mxu0 0.0
    %1927 = vmatpush1.msra.mxu0 0.0
    %1928 = vmatprep.subr.mxu0 0.0
    %1929 = vmatpush1.msra.mxu0 0.0
    %1930 = vmatprep.subr.mxu0 0.0
    %1931 = vmatpush1.msra.mxu0 0.0
    %1932 = vmatprep.subr.mxu0 0.0
    %1933 = vmatpush1.msra.mxu0 0.0
    %1934 = vmatprep.subr.mxu0 0.0
    %1935 = vmatpush1.msra.mxu0 0.0
    %1936 = vmatprep.subr.mxu0 0.0
    %1937 = vmatpush1.msra.mxu0 0.0
    %1938 = vmatprep.subr.mxu0 0.0
    %1939 = vmatpush1.msra.mxu0 0.0
    %1940 = vmatprep.subr.mxu0 0.0
    %1941 = vmatpush1.msra.mxu0 0.0
    %1942 = vmatprep.subr.mxu0 0.0
    %1943 = vmatpush1.msra.mxu0 0.0
    %1944 = vmatprep.subr.mxu0 0.0
    %1945 = vmatpush1.msra.mxu0 0.0
    %1946 = vmatprep.subr.mxu0 0.0
    %1947 = vmatpush1.msra.mxu0 0.0
    %1948 = vmatprep.subr.mxu0 0.0
    %1949 = vmatpush1.msra.mxu0 0.0
    %1950 = vmatprep.subr.mxu0 0.0
    %1951 = vmatpush1.msra.mxu0 0.0
    %1952 = vmatprep.subr.mxu0 0.0
    %1953 = vmatpush1.msra.mxu0 0.0
    %1954 = vmatprep.subr.mxu0 0.0
    %1955 = vmatpush1.msra.mxu0 0.0
    %1956 = vmatprep.subr.mxu0 0.0
    %1957 = vmatpush1.msra.mxu0 0.0
    %1958 = vmatprep.subr.mxu0 0.0
    %1959 = vmatpush1.msra.mxu0 0.0
    %1960 = vmatprep.subr.mxu0 0.0
    %1961 = vmatpush1.msra.mxu0 0.0
    %1962 = vmatprep.subr.mxu0 0.0
    %1963 = vmatpush1.msra.mxu0 0.0
    %1964 = vmatprep.subr.mxu0 0.0
    %1965 = vmatpush1.msra.mxu0 0.0
    %1966 = vmatprep.subr.mxu0 0.0
    %1967 = vmatpush1.msra.mxu0 0.0
    %1968 = vmatprep.subr.mxu0 0.0
    %1969 = vmatpush1.msra.mxu0 0.0
    %1970 = vmatprep.subr.mxu0 0.0
    %1971 = vmatpush1.msra.mxu0 0.0
    %1972 = vmatprep.mubr.f32.mxu0 0.0
    %1973 = vmatmul.mubr.f32.gmra.mrb[0].mxu0 %v1903
    %v1974 = vpop.f32.mrb[0].mxu0
    %v1975 = vadd.f32 0.0, %v1974
    %v1976 = vpop.f32.mrb[0].mxu0
    %1977 = vmatprep.mubr.f32.mxu0 0.0
    %1978 = vmatmul.mubr.f32.gmra.mrb[0].mxu0 %v1906
    %v1979 = vpop.f32.mrb[0].mxu0
    %v1980 = vadd.f32 0.0, %v1979
    %v1981 = vpop.f32.mrb[0].mxu0
    %1982 = vdwg.mxu0
    %s1983 = scalar_lea.vmem %s11, 32
    %v1984 = vld [vmem:[%s1983] sm:$0xff]
    %v1985 = vld [vmem:[%s1983 + $0x8] sm:$0xff]
    %v1987 = vsel %vm396, %v1975, 0
    %v1990 = vsel %vm396, %v1980, 0
    %1992 = vmatprep.subr.mxu0 0.0
    %1993 = vmatpush1.msra.mxu0 %v1984
    %1994 = vmatprep.subr.mxu0 0.0
    %1995 = vmatpush1.msra.mxu0 %v1985
    %1996 = vmatprep.subr.mxu0 0.0
    %1997 = vmatpush1.msra.mxu0 0.0
    %1998 = vmatprep.subr.mxu0 0.0
    %1999 = vmatpush1.msra.mxu0 0.0
    %2000 = vmatprep.subr.mxu0 0.0
    %2001 = vmatpush1.msra.mxu0 0.0
    %2002 = vmatprep.subr.mxu0 0.0
    %2003 = vmatpush1.msra.mxu0 0.0
    %2004 = vmatprep.subr.mxu0 0.0
    %2005 = vmatpush1.msra.mxu0 0.0
    %2006 = vmatprep.subr.mxu0 0.0
    %2007 = vmatpush1.msra.mxu0 0.0
    %2008 = vmatprep.subr.mxu0 0.0
    %2009 = vmatpush1.msra.mxu0 0.0
    %2010 = vmatprep.subr.mxu0 0.0
    %2011 = vmatpush1.msra.mxu0 0.0
    %2012 = vmatprep.subr.mxu0 0.0
    %2013 = vmatpush1.msra.mxu0 0.0
    %2014 = vmatprep.subr.mxu0 0.0
    %2015 = vmatpush1.msra.mxu0 0.0
    %2016 = vmatprep.subr.mxu0 0.0
    %2017 = vmatpush1.msra.mxu0 0.0
    %2018 = vmatprep.subr.mxu0 0.0
    %2019 = vmatpush1.msra.mxu0 0.0
    %2020 = vmatprep.subr.mxu0 0.0
    %2021 = vmatpush1.msra.mxu0 0.0
    %2022 = vmatprep.subr.mxu0 0.0
    %2023 = vmatpush1.msra.mxu0 0.0
    %2024 = vmatprep.subr.mxu0 0.0
    %2025 = vmatpush1.msra.mxu0 0.0
    %2026 = vmatprep.subr.mxu0 0.0
    %2027 = vmatpush1.msra.mxu0 0.0
    %2028 = vmatprep.subr.mxu0 0.0
    %2029 = vmatpush1.msra.mxu0 0.0
    %2030 = vmatprep.subr.mxu0 0.0
    %2031 = vmatpush1.msra.mxu0 0.0
    %2032 = vmatprep.subr.mxu0 0.0
    %2033 = vmatpush1.msra.mxu0 0.0
    %2034 = vmatprep.subr.mxu0 0.0
    %2035 = vmatpush1.msra.mxu0 0.0
    %2036 = vmatprep.subr.mxu0 0.0
    %2037 = vmatpush1.msra.mxu0 0.0
    %2038 = vmatprep.subr.mxu0 0.0
    %2039 = vmatpush1.msra.mxu0 0.0
    %2040 = vmatprep.subr.mxu0 0.0
    %2041 = vmatpush1.msra.mxu0 0.0
    %2042 = vmatprep.subr.mxu0 0.0
    %2043 = vmatpush1.msra.mxu0 0.0
    %2044 = vmatprep.subr.mxu0 0.0
    %2045 = vmatpush1.msra.mxu0 0.0
    %2046 = vmatprep.subr.mxu0 0.0
    %2047 = vmatpush1.msra.mxu0 0.0
    %2048 = vmatprep.subr.mxu0 0.0
    %2049 = vmatpush1.msra.mxu0 0.0
    %2050 = vmatprep.subr.mxu0 0.0
    %2051 = vmatpush1.msra.mxu0 0.0
    %2052 = vmatprep.subr.mxu0 0.0
    %2053 = vmatpush1.msra.mxu0 0.0
    %2054 = vmatprep.subr.mxu0 0.0
    %2055 = vmatpush1.msra.mxu0 0.0
    %2056 = vmatprep.mubr.f32.mxu0 0.0
    %2057 = vmatmul.mubr.f32.gmra.mrb[0].mxu0 %v1987
    %v2058 = vpop.f32.mrb[0].mxu0
    %v2059 = vadd.f32 0.0, %v2058
    %v2060 = vpop.f32.mrb[0].mxu0
    %2061 = vmatprep.mubr.f32.mxu0 0.0
    %2062 = vmatmul.mubr.f32.gmra.mrb[0].mxu0 %v1990
    %v2063 = vpop.f32.mrb[0].mxu0
    %v2064 = vadd.f32 0.0, %v2063
    %v2065 = vpop.f32.mrb[0].mxu0
    %2066 = vdwg.mxu0
    %v2067 = vadd.f32 %v1517, %v2059
    %v2068 = vadd.f32 %v1517, %v2064
    %s2069 = scalar_lea.vmem %s5, 96
    %v2070 = vld [vmem:[%s2069] sm:$0xff]
    %v2071 = vld [vmem:[%s2069 + $0x8] sm:$0xff]
    %v2072 = vld [vmem:[%s2069 + $0x10] sm:$0xff]
    %v2073 = vld [vmem:[%s2069 + $0x18] sm:$0xff]
    %s2074 = scalar_lea.vmem %s8, 3
    %v2075 = vld [vmem:[%s2074] sm:$0x1]
    %v2077 = vlaneseq
    %v2078 = vshrl.u32 %v2077, 7
    %v2079 = vsub.s32 0, %v2078
    %v2080 = vrot.slane %v2075, %v2079
    %2082 = vmatprep.subr.mxu0 0.0
    %2083 = vmatpush1.msra.mxu0 %v2070
    %2084 = vmatprep.subr.mxu0 0.0
    %2085 = vmatpush1.msra.mxu0 %v2071
    %2086 = vmatprep.subr.mxu0 0.0
    %2087 = vmatpush1.msra.mxu0 %v2072
    %2088 = vmatprep.subr.mxu0 0.0
    %2089 = vmatpush1.msra.mxu0 %v2073
    %2090 = vmatprep.subr.mxu0 0.0
    %2091 = vmatpush1.msra.mxu0 0.0
    %2092 = vmatprep.subr.mxu0 0.0
    %2093 = vmatpush1.msra.mxu0 0.0
    %2094 = vmatprep.subr.mxu0 0.0
    %2095 = vmatpush1.msra.mxu0 0.0
    %2096 = vmatprep.subr.mxu0 0.0
    %2097 = vmatpush1.msra.mxu0 0.0
    %2098 = vmatprep.subr.mxu0 0.0
    %2099 = vmatpush1.msra.mxu0 0.0
    %2100 = vmatprep.subr.mxu0 0.0
    %2101 = vmatpush1.msra.mxu0 0.0
    %2102 = vmatprep.subr.mxu0 0.0
    %2103 = vmatpush1.msra.mxu0 0.0
    %2104 = vmatprep.subr.mxu0 0.0
    %2105 = vmatpush1.msra.mxu0 0.0
    %2106 = vmatprep.subr.mxu0 0.0
    %2107 = vmatpush1.msra.mxu0 0.0
    %2108 = vmatprep.subr.mxu0 0.0
    %2109 = vmatpush1.msra.mxu0 0.0
    %2110 = vmatprep.subr.mxu0 0.0
    %2111 = vmatpush1.msra.mxu0 0.0
    %2112 = vmatprep.subr.mxu0 0.0
    %2113 = vmatpush1.msra.mxu0 0.0
    %2114 = vmatprep.subr.mxu0 0.0
    %2115 = vmatpush1.msra.mxu0 0.0
    %2116 = vmatprep.subr.mxu0 0.0
    %2117 = vmatpush1.msra.mxu0 0.0
    %2118 = vmatprep.subr.mxu0 0.0
    %2119 = vmatpush1.msra.mxu0 0.0
    %2120 = vmatprep.subr.mxu0 0.0
    %2121 = vmatpush1.msra.mxu0 0.0
    %2122 = vmatprep.subr.mxu0 0.0
    %2123 = vmatpush1.msra.mxu0 0.0
    %2124 = vmatprep.subr.mxu0 0.0
    %2125 = vmatpush1.msra.mxu0 0.0
    %2126 = vmatprep.subr.mxu0 0.0
    %2127 = vmatpush1.msra.mxu0 0.0
    %2128 = vmatprep.subr.mxu0 0.0
    %2129 = vmatpush1.msra.mxu0 0.0
    %2130 = vmatprep.subr.mxu0 0.0
    %2131 = vmatpush1.msra.mxu0 0.0
    %2132 = vmatprep.subr.mxu0 0.0
    %2133 = vmatpush1.msra.mxu0 0.0
    %2134 = vmatprep.subr.mxu0 0.0
    %2135 = vmatpush1.msra.mxu0 0.0
    %2136 = vmatprep.subr.mxu0 0.0
    %2137 = vmatpush1.msra.mxu0 0.0
    %2138 = vmatprep.subr.mxu0 0.0
    %2139 = vmatpush1.msra.mxu0 0.0
    %2140 = vmatprep.subr.mxu0 0.0
    %2141 = vmatpush1.msra.mxu0 0.0
    %2142 = vmatprep.subr.mxu0 0.0
    %2143 = vmatpush1.msra.mxu0 0.0
    %2144 = vmatprep.subr.mxu0 0.0
    %2145 = vmatpush1.msra.mxu0 0.0
    %2146 = vmatprep.mubr.f32.mxu0 0.0
    %2147 = vmatmul.mubr.f32.gmra.mrb[0].mxu0 %v1533
    %v2148 = vpop.f32.mrb[0].mxu0
    %v2149 = vadd.f32 %v2080, %v2148
    %v2150 = vpop.f32.mrb[0].mxu0
    %2151 = vmatprep.mubr.f32.mxu0 0.0
    %2152 = vmatmul.mubr.f32.gmra.mrb[0].mxu0 %v1536
    %v2153 = vpop.f32.mrb[0].mxu0
    %v2154 = vadd.f32 %v2080, %v2153
    %v2155 = vpop.f32.mrb[0].mxu0
    %2156 = vdwg.mxu0
    %s2157 = scalar_lea.vmem %s6, 96
    %v2158 = vld [vmem:[%s2157] sm:$0xff]
    %v2159 = vld [vmem:[%s2157 + $0x8] sm:$0xff]
    %v2160 = vld [vmem:[%s2157 + $0x10] sm:$0xff]
    %v2161 = vld [vmem:[%s2157 + $0x18] sm:$0xff]
    %s2162 = scalar_lea.vmem %s9, 3
    %v2163 = vld [vmem:[%s2162] sm:$0x1]
    %v2165 = vlaneseq
    %v2166 = vshrl.u32 %v2165, 7
    %v2167 = vsub.s32 0, %v2166
    %v2168 = vrot.slane %v2163, %v2167
    %2170 = vmatprep.subr.mxu0 0.0
    %2171 = vmatpush1.msra.mxu0 %v2158
    %2172 = vmatprep.subr.mxu0 0.0
    %2173 = vmatpush1.msra.mxu0 %v2159
    %2174 = vmatprep.subr.mxu0 0.0
    %2175 = vmatpush1.msra.mxu0 %v2160
    %2176 = vmatprep.subr.mxu0 0.0
    %2177 = vmatpush1.msra.mxu0 %v2161
    %2178 = vmatprep.subr.mxu0 0.0
    %2179 = vmatpush1.msra.mxu0 0.0
    %2180 = vmatprep.subr.mxu0 0.0
    %2181 = vmatpush1.msra.mxu0 0.0
    %2182 = vmatprep.subr.mxu0 0.0
    %2183 = vmatpush1.msra.mxu0 0.0
    %2184 = vmatprep.subr.mxu0 0.0
    %2185 = vmatpush1.msra.mxu0 0.0
    %2186 = vmatprep.subr.mxu0 0.0
    %2187 = vmatpush1.msra.mxu0 0.0
    %2188 = vmatprep.subr.mxu0 0.0
    %2189 = vmatpush1.msra.mxu0 0.0
    %2190 = vmatprep.subr.mxu0 0.0
    %2191 = vmatpush1.msra.mxu0 0.0
    %2192 = vmatprep.subr.mxu0 0.0
    %2193 = vmatpush1.msra.mxu0 0.0
    %2194 = vmatprep.subr.mxu0 0.0
    %2195 = vmatpush1.msra.mxu0 0.0
    %2196 = vmatprep.subr.mxu0 0.0
    %2197 = vmatpush1.msra.mxu0 0.0
    %2198 = vmatprep.subr.mxu0 0.0
    %2199 = vmatpush1.msra.mxu0 0.0
    %2200 = vmatprep.subr.mxu0 0.0
    %2201 = vmatpush1.msra.mxu0 0.0
    %2202 = vmatprep.subr.mxu0 0.0
    %2203 = vmatpush1.msra.mxu0 0.0
    %2204 = vmatprep.subr.mxu0 0.0
    %2205 = vmatpush1.msra.mxu0 0.0
    %2206 = vmatprep.subr.mxu0 0.0
    %2207 = vmatpush1.msra.mxu0 0.0
    %2208 = vmatprep.subr.mxu0 0.0
    %2209 = vmatpush1.msra.mxu0 0.0
    %2210 = vmatprep.subr.mxu0 0.0
    %2211 = vmatpush1.msra.mxu0 0.0
    %2212 = vmatprep.subr.mxu0 0.0
    %2213 = vmatpush1.msra.mxu0 0.0
    %2214 = vmatprep.subr.mxu0 0.0
    %2215 = vmatpush1.msra.mxu0 0.0
    %2216 = vmatprep.subr.mxu0 0.0
    %2217 = vmatpush1.msra.mxu0 0.0
    %2218 = vmatprep.subr.mxu0 0.0
    %2219 = vmatpush1.msra.mxu0 0.0
    %2220 = vmatprep.subr.mxu0 0.0
    %2221 = vmatpush1.msra.mxu0 0.0
    %2222 = vmatprep.subr.mxu0 0.0
    %2223 = vmatpush1.msra.mxu0 0.0
    %2224 = vmatprep.subr.mxu0 0.0
    %2225 = vmatpush1.msra.mxu0 0.0
    %2226 = vmatprep.subr.mxu0 0.0
    %2227 = vmatpush1.msra.mxu0 0.0
    %2228 = vmatprep.subr.mxu0 0.0
    %2229 = vmatpush1.msra.mxu0 0.0
    %2230 = vmatprep.subr.mxu0 0.0
    %2231 = vmatpush1.msra.mxu0 0.0
    %2232 = vmatprep.subr.mxu0 0.0
    %2233 = vmatpush1.msra.mxu0 0.0
    %2234 = vmatprep.mubr.f32.mxu0 0.0
    %2235 = vmatmul.mubr.f32.gmra.mrb[0].mxu0 %v1533
    %v2236 = vpop.f32.mrb[0].mxu0
    %v2237 = vadd.f32 %v2168, %v2236
    %v2238 = vpop.f32.mrb[0].mxu0
    %2239 = vmatprep.mubr.f32.mxu0 0.0
    %2240 = vmatmul.mubr.f32.gmra.mrb[0].mxu0 %v1536
    %v2241 = vpop.f32.mrb[0].mxu0
    %v2242 = vadd.f32 %v2168, %v2241
    %v2243 = vpop.f32.mrb[0].mxu0
    %2244 = vdwg.mxu0
    %s2245 = scalar_lea.vmem %s7, 96
    %v2246 = vld [vmem:[%s2245] sm:$0xff]
    %v2247 = vld [vmem:[%s2245 + $0x8] sm:$0xff]
    %v2248 = vld [vmem:[%s2245 + $0x10] sm:$0xff]
    %v2249 = vld [vmem:[%s2245 + $0x18] sm:$0xff]
    %s2250 = scalar_lea.vmem %s10, 3
    %v2251 = vld [vmem:[%s2250] sm:$0x1]
    %v2253 = vlaneseq
    %v2254 = vshrl.u32 %v2253, 7
    %v2255 = vsub.s32 0, %v2254
    %v2256 = vrot.slane %v2251, %v2255
    %2258 = vmatprep.subr.mxu0 0.0
    %2259 = vmatpush1.msra.mxu0 %v2246
    %2260 = vmatprep.subr.mxu0 0.0
    %2261 = vmatpush1.msra.mxu0 %v2247
    %2262 = vmatprep.subr.mxu0 0.0
    %2263 = vmatpush1.msra.mxu0 %v2248
    %2264 = vmatprep.subr.mxu0 0.0
    %2265 = vmatpush1.msra.mxu0 %v2249
    %2266 = vmatprep.subr.mxu0 0.0
    %2267 = vmatpush1.msra.mxu0 0.0
    %2268 = vmatprep.subr.mxu0 0.0
    %2269 = vmatpush1.msra.mxu0 0.0
    %2270 = vmatprep.subr.mxu0 0.0
    %2271 = vmatpush1.msra.mxu0 0.0
    %2272 = vmatprep.subr.mxu0 0.0
    %2273 = vmatpush1.msra.mxu0 0.0
    %2274 = vmatprep.subr.mxu0 0.0
    %2275 = vmatpush1.msra.mxu0 0.0
    %2276 = vmatprep.subr.mxu0 0.0
    %2277 = vmatpush1.msra.mxu0 0.0
    %2278 = vmatprep.subr.mxu0 0.0
    %2279 = vmatpush1.msra.mxu0 0.0
    %2280 = vmatprep.subr.mxu0 0.0
    %2281 = vmatpush1.msra.mxu0 0.0
    %2282 = vmatprep.subr.mxu0 0.0
    %2283 = vmatpush1.msra.mxu0 0.0
    %2284 = vmatprep.subr.mxu0 0.0
    %2285 = vmatpush1.msra.mxu0 0.0
    %2286 = vmatprep.subr.mxu0 0.0
    %2287 = vmatpush1.msra.mxu0 0.0
    %2288 = vmatprep.subr.mxu0 0.0
    %2289 = vmatpush1.msra.mxu0 0.0
    %2290 = vmatprep.subr.mxu0 0.0
    %2291 = vmatpush1.msra.mxu0 0.0
    %2292 = vmatprep.subr.mxu0 0.0
    %2293 = vmatpush1.msra.mxu0 0.0
    %2294 = vmatprep.subr.mxu0 0.0
    %2295 = vmatpush1.msra.mxu0 0.0
    %2296 = vmatprep.subr.mxu0 0.0
    %2297 = vmatpush1.msra.mxu0 0.0
    %2298 = vmatprep.subr.mxu0 0.0
    %2299 = vmatpush1.msra.mxu0 0.0
    %2300 = vmatprep.subr.mxu0 0.0
    %2301 = vmatpush1.msra.mxu0 0.0
    %2302 = vmatprep.subr.mxu0 0.0
    %2303 = vmatpush1.msra.mxu0 0.0
    %2304 = vmatprep.subr.mxu0 0.0
    %2305 = vmatpush1.msra.mxu0 0.0
    %2306 = vmatprep.subr.mxu0 0.0
    %2307 = vmatpush1.msra.mxu0 0.0
    %2308 = vmatprep.subr.mxu0 0.0
    %2309 = vmatpush1.msra.mxu0 0.0
    %2310 = vmatprep.subr.mxu0 0.0
    %2311 = vmatpush1.msra.mxu0 0.0
    %2312 = vmatprep.subr.mxu0 0.0
    %2313 = vmatpush1.msra.mxu0 0.0
    %2314 = vmatprep.subr.mxu0 0.0
    %2315 = vmatpush1.msra.mxu0 0.0
    %2316 = vmatprep.subr.mxu0 0.0
    %2317 = vmatpush1.msra.mxu0 0.0
    %2318 = vmatprep.subr.mxu0 0.0
    %2319 = vmatpush1.msra.mxu0 0.0
    %2320 = vmatprep.subr.mxu0 0.0
    %2321 = vmatpush1.msra.mxu0 0.0
    %2322 = vmatprep.mubr.f32.mxu0 0.0
    %2323 = vmatmul.mubr.f32.gmra.mrb[0].mxu0 %v1533
    %v2324 = vpop.f32.mrb[0].mxu0
    %v2325 = vadd.f32 %v2256, %v2324
    %v2326 = vpop.f32.mrb[0].mxu0
    %2327 = vmatprep.mubr.f32.mxu0 0.0
    %2328 = vmatmul.mubr.f32.gmra.mrb[0].mxu0 %v1536
    %v2329 = vpop.f32.mrb[0].mxu0
    %v2330 = vadd.f32 %v2256, %v2329
    %v2331 = vpop.f32.mrb[0].mxu0
    %2332 = vdwg.mxu0
    %v2334 = vsel %vm396, %v2149, 0
    %v2337 = vsel %vm396, %v2154, 0
    %v2340 = vsel %vm396, %v2237, 0
    %v2343 = vsel %vm396, %v2242, 0
    %2345 = vmatprep.subr.mxu0 0.0
    %2346 = vmatpush1.xpose.msra.mxu0 %v2340
    %2347 = vmatprep.subr.mxu0 0.0
    %2348 = vmatpush1.xpose.msra.mxu0 %v2343
    %2349 = vmatprep.subr.mxu0 0.0
    %2350 = vmatpush1.xpose.msra.mxu0 0.0
    %2351 = vmatprep.subr.mxu0 0.0
    %2352 = vmatpush1.xpose.msra.mxu0 0.0
    %2353 = vmatprep.subr.mxu0 0.0
    %2354 = vmatpush1.xpose.msra.mxu0 0.0
    %2355 = vmatprep.subr.mxu0 0.0
    %2356 = vmatpush1.xpose.msra.mxu0 0.0
    %2357 = vmatprep.subr.mxu0 0.0
    %2358 = vmatpush1.xpose.msra.mxu0 0.0
    %2359 = vmatprep.subr.mxu0 0.0
    %2360 = vmatpush1.xpose.msra.mxu0 0.0
    %2361 = vmatprep.subr.mxu0 0.0
    %2362 = vmatpush1.xpose.msra.mxu0 0.0
    %2363 = vmatprep.subr.mxu0 0.0
    %2364 = vmatpush1.xpose.msra.mxu0 0.0
    %2365 = vmatprep.subr.mxu0 0.0
    %2366 = vmatpush1.xpose.msra.mxu0 0.0
    %2367 = vmatprep.subr.mxu0 0.0
    %2368 = vmatpush1.xpose.msra.mxu0 0.0
    %2369 = vmatprep.subr.mxu0 0.0
    %2370 = vmatpush1.xpose.msra.mxu0 0.0
    %2371 = vmatprep.subr.mxu0 0.0
    %2372 = vmatpush1.xpose.msra.mxu0 0.0
    %2373 = vmatprep.subr.mxu0 0.0
    %2374 = vmatpush1.xpose.msra.mxu0 0.0
    %2375 = vmatprep.subr.mxu0 0.0
    %2376 = vmatpush1.xpose.msra.mxu0 0.0
    %2377 = vmatprep.subr.mxu0 0.0
    %2378 = vmatpush1.xpose.msra.mxu0 0.0
    %2379 = vmatprep.subr.mxu0 0.0
    %2380 = vmatpush1.xpose.msra.mxu0 0.0
    %2381 = vmatprep.subr.mxu0 0.0
    %2382 = vmatpush1.xpose.msra.mxu0 0.0
    %2383 = vmatprep.subr.mxu0 0.0
    %2384 = vmatpush1.xpose.msra.mxu0 0.0
    %2385 = vmatprep.subr.mxu0 0.0
    %2386 = vmatpush1.xpose.msra.mxu0 0.0
    %2387 = vmatprep.subr.mxu0 0.0
    %2388 = vmatpush1.xpose.msra.mxu0 0.0
    %2389 = vmatprep.subr.mxu0 0.0
    %2390 = vmatpush1.xpose.msra.mxu0 0.0
    %2391 = vmatprep.subr.mxu0 0.0
    %2392 = vmatpush1.xpose.msra.mxu0 0.0
    %2393 = vmatprep.subr.mxu0 0.0
    %2394 = vmatpush1.xpose.msra.mxu0 0.0
    %2395 = vmatprep.subr.mxu0 0.0
    %2396 = vmatpush1.xpose.msra.mxu0 0.0
    %2397 = vmatprep.subr.mxu0 0.0
    %2398 = vmatpush1.xpose.msra.mxu0 0.0
    %2399 = vmatprep.subr.mxu0 0.0
    %2400 = vmatpush1.xpose.msra.mxu0 0.0
    %2401 = vmatprep.subr.mxu0 0.0
    %2402 = vmatpush1.xpose.msra.mxu0 0.0
    %2403 = vmatprep.subr.mxu0 0.0
    %2404 = vmatpush1.xpose.msra.mxu0 0.0
    %2405 = vmatprep.subr.mxu0 0.0
    %2406 = vmatpush1.xpose.msra.mxu0 0.0
    %2407 = vmatprep.subr.mxu0 0.0
    %2408 = vmatpush1.xpose.msra.mxu0 0.0
    %2409 = vmatprep.mubr.f32.mxu0 0.0
    %2410 = vmatmul.mubr.f32.gmra.mrb[0].mxu0 %v2334
    %v2411 = vpop.f32.mrb[0].mxu0
    %v2412 = vadd.f32 0.0, %v2411
    %v2413 = vpop.f32.mrb[0].mxu0
    %2414 = vmatprep.mubr.f32.mxu0 0.0
    %2415 = vmatmul.mubr.f32.gmra.mrb[0].mxu0 %v2337
    %v2416 = vpop.f32.mrb[0].mxu0
    %v2417 = vadd.f32 0.0, %v2416
    %v2418 = vpop.f32.mrb[0].mxu0
    %2419 = vdwg.mxu0
    %v2420 = vmul.f32 %v2412, 0.25
    %v2421 = vmul.f32 %v2417, 0.25
    %v2422 = vadd.f32 %v2420, %v77
    %v2423 = vadd.f32 %v2421, %v78
    %v2424 = vsel %vm396, %v2422, -inf
    %2425 = vmax.xlane.f32.xlu0 %v2424
    %v2426 = vpop.xlane.xlu0 %2425
    %v2427 = vsel %vm396, %v2423, -inf
    %2428 = vmax.xlane.f32.xlu0 %v2427
    %v2429 = vpop.xlane.xlu0 %2428
    %v2430 = vsub.f32 %v2422, %v2426
    %v2431 = vsub.f32 %v2423, %v2429
    %v2432 = vmul.f32 %v2430, 1.442695
    %v2433 = vpow.pop %v2432
    %v2434 = vmul.f32 %v2431, 1.442695
    %v2435 = vpow.pop %v2434
    %v2436 = vsel %vm396, %v2433, 0.0
    %2437 = vadd.xlane.f32.xlu0 %v2436
    %v2438 = vpop.xlane.xlu0 %2437
    %v2439 = vsel %vm396, %v2435, 0.0
    %2440 = vadd.xlane.f32.xlu0 %v2439
    %v2441 = vpop.xlane.xlu0 %2440
    %v2442 = vrcp.pop %v2438
    %v2443 = vrcp.pop %v2441
    %v2444 = vmul.f32 %v2433, %v2442
    %v2445 = vmul.f32 %v2435, %v2443
    %v2447 = vsel %vm396, %v2444, 0
    %v2450 = vsel %vm396, %v2445, 0
    %2452 = vmatprep.subr.mxu0 0.0
    %2453 = vmatpush1.msra.mxu0 %v2325
    %2454 = vmatprep.subr.mxu0 0.0
    %2455 = vmatpush1.msra.mxu0 %v2330
    %2456 = vmatprep.subr.mxu0 0.0
    %2457 = vmatpush1.msra.mxu0 0.0
    %2458 = vmatprep.subr.mxu0 0.0
    %2459 = vmatpush1.msra.mxu0 0.0
    %2460 = vmatprep.subr.mxu0 0.0
    %2461 = vmatpush1.msra.mxu0 0.0
    %2462 = vmatprep.subr.mxu0 0.0
    %2463 = vmatpush1.msra.mxu0 0.0
    %2464 = vmatprep.subr.mxu0 0.0
    %2465 = vmatpush1.msra.mxu0 0.0
    %2466 = vmatprep.subr.mxu0 0.0
    %2467 = vmatpush1.msra.mxu0 0.0
    %2468 = vmatprep.subr.mxu0 0.0
    %2469 = vmatpush1.msra.mxu0 0.0
    %2470 = vmatprep.subr.mxu0 0.0
    %2471 = vmatpush1.msra.mxu0 0.0
    %2472 = vmatprep.subr.mxu0 0.0
    %2473 = vmatpush1.msra.mxu0 0.0
    %2474 = vmatprep.subr.mxu0 0.0
    %2475 = vmatpush1.msra.mxu0 0.0
    %2476 = vmatprep.subr.mxu0 0.0
    %2477 = vmatpush1.msra.mxu0 0.0
    %2478 = vmatprep.subr.mxu0 0.0
    %2479 = vmatpush1.msra.mxu0 0.0
    %2480 = vmatprep.subr.mxu0 0.0
    %2481 = vmatpush1.msra.mxu0 0.0
    %2482 = vmatprep.subr.mxu0 0.0
    %2483 = vmatpush1.msra.mxu0 0.0
    %2484 = vmatprep.subr.mxu0 0.0
    %2485 = vmatpush1.msra.mxu0 0.0
    %2486 = vmatprep.subr.mxu0 0.0
    %2487 = vmatpush1.msra.mxu0 0.0
    %2488 = vmatprep.subr.mxu0 0.0
    %2489 = vmatpush1.msra.mxu0 0.0
    %2490 = vmatprep.subr.mxu0 0.0
    %2491 = vmatpush1.msra.mxu0 0.0
    %2492 = vmatprep.subr.mxu0 0.0
    %2493 = vmatpush1.msra.mxu0 0.0
    %2494 = vmatprep.subr.mxu0 0.0
    %2495 = vmatpush1.msra.mxu0 0.0
    %2496 = vmatprep.subr.mxu0 0.0
    %2497 = vmatpush1.msra.mxu0 0.0
    %2498 = vmatprep.subr.mxu0 0.0
    %2499 = vmatpush1.msra.mxu0 0.0
    %2500 = vmatprep.subr.mxu0 0.0
    %2501 = vmatpush1.msra.mxu0 0.0
    %2502 = vmatprep.subr.mxu0 0.0
    %2503 = vmatpush1.msra.mxu0 0.0
    %2504 = vmatprep.subr.mxu0 0.0
    %2505 = vmatpush1.msra.mxu0 0.0
    %2506 = vmatprep.subr.mxu0 0.0
    %2507 = vmatpush1.msra.mxu0 0.0
    %2508 = vmatprep.subr.mxu0 0.0
    %2509 = vmatpush1.msra.mxu0 0.0
    %2510 = vmatprep.subr.mxu0 0.0
    %2511 = vmatpush1.msra.mxu0 0.0
    %2512 = vmatprep.subr.mxu0 0.0
    %2513 = vmatpush1.msra.mxu0 0.0
    %2514 = vmatprep.subr.mxu0 0.0
    %2515 = vmatpush1.msra.mxu0 0.0
    %2516 = vmatprep.mubr.f32.mxu0 0.0
    %2517 = vmatmul.mubr.f32.gmra.mrb[0].mxu0 %v2447
    %v2518 = vpop.f32.mrb[0].mxu0
    %v2519 = vadd.f32 0.0, %v2518
    %v2520 = vpop.f32.mrb[0].mxu0
    %2521 = vmatprep.mubr.f32.mxu0 0.0
    %2522 = vmatmul.mubr.f32.gmra.mrb[0].mxu0 %v2450
    %v2523 = vpop.f32.mrb[0].mxu0
    %v2524 = vadd.f32 0.0, %v2523
    %v2525 = vpop.f32.mrb[0].mxu0
    %2526 = vdwg.mxu0
    %s2527 = scalar_lea.vmem %s11, 48
    %v2528 = vld [vmem:[%s2527] sm:$0xff]
    %v2529 = vld [vmem:[%s2527 + $0x8] sm:$0xff]
    %v2531 = vsel %vm396, %v2519, 0
    %v2534 = vsel %vm396, %v2524, 0
    %2536 = vmatprep.subr.mxu0 0.0
    %2537 = vmatpush1.msra.mxu0 %v2528
    %2538 = vmatprep.subr.mxu0 0.0
    %2539 = vmatpush1.msra.mxu0 %v2529
    %2540 = vmatprep.subr.mxu0 0.0
    %2541 = vmatpush1.msra.mxu0 0.0
    %2542 = vmatprep.subr.mxu0 0.0
    %2543 = vmatpush1.msra.mxu0 0.0
    %2544 = vmatprep.subr.mxu0 0.0
    %2545 = vmatpush1.msra.mxu0 0.0
    %2546 = vmatprep.subr.mxu0 0.0
    %2547 = vmatpush1.msra.mxu0 0.0
    %2548 = vmatprep.subr.mxu0 0.0
    %2549 = vmatpush1.msra.mxu0 0.0
    %2550 = vmatprep.subr.mxu0 0.0
    %2551 = vmatpush1.msra.mxu0 0.0
    %2552 = vmatprep.subr.mxu0 0.0
    %2553 = vmatpush1.msra.mxu0 0.0
    %2554 = vmatprep.subr.mxu0 0.0
    %2555 = vmatpush1.msra.mxu0 0.0
    %2556 = vmatprep.subr.mxu0 0.0
    %2557 = vmatpush1.msra.mxu0 0.0
    %2558 = vmatprep.subr.mxu0 0.0
    %2559 = vmatpush1.msra.mxu0 0.0
    %2560 = vmatprep.subr.mxu0 0.0
    %2561 = vmatpush1.msra.mxu0 0.0
    %2562 = vmatprep.subr.mxu0 0.0
    %2563 = vmatpush1.msra.mxu0 0.0
    %2564 = vmatprep.subr.mxu0 0.0
    %2565 = vmatpush1.msra.mxu0 0.0
    %2566 = vmatprep.subr.mxu0 0.0
    %2567 = vmatpush1.msra.mxu0 0.0
    %2568 = vmatprep.subr.mxu0 0.0
    %2569 = vmatpush1.msra.mxu0 0.0
    %2570 = vmatprep.subr.mxu0 0.0
    %2571 = vmatpush1.msra.mxu0 0.0
    %2572 = vmatprep.subr.mxu0 0.0
    %2573 = vmatpush1.msra.mxu0 0.0
    %2574 = vmatprep.subr.mxu0 0.0
    %2575 = vmatpush1.msra.mxu0 0.0
    %2576 = vmatprep.subr.mxu0 0.0
    %2577 = vmatpush1.msra.mxu0 0.0
    %2578 = vmatprep.subr.mxu0 0.0
    %2579 = vmatpush1.msra.mxu0 0.0
    %2580 = vmatprep.subr.mxu0 0.0
    %2581 = vmatpush1.msra.mxu0 0.0
    %2582 = vmatprep.subr.mxu0 0.0
    %2583 = vmatpush1.msra.mxu0 0.0
    %2584 = vmatprep.subr.mxu0 0.0
    %2585 = vmatpush1.msra.mxu0 0.0
    %2586 = vmatprep.subr.mxu0 0.0
    %2587 = vmatpush1.msra.mxu0 0.0
    %2588 = vmatprep.subr.mxu0 0.0
    %2589 = vmatpush1.msra.mxu0 0.0
    %2590 = vmatprep.subr.mxu0 0.0
    %2591 = vmatpush1.msra.mxu0 0.0
    %2592 = vmatprep.subr.mxu0 0.0
    %2593 = vmatpush1.msra.mxu0 0.0
    %2594 = vmatprep.subr.mxu0 0.0
    %2595 = vmatpush1.msra.mxu0 0.0
    %2596 = vmatprep.subr.mxu0 0.0
    %2597 = vmatpush1.msra.mxu0 0.0
    %2598 = vmatprep.subr.mxu0 0.0
    %2599 = vmatpush1.msra.mxu0 0.0
    %2600 = vmatprep.mubr.f32.mxu0 0.0
    %2601 = vmatmul.mubr.f32.gmra.mrb[0].mxu0 %v2531
    %v2602 = vpop.f32.mrb[0].mxu0
    %v2603 = vadd.f32 0.0, %v2602
    %v2604 = vpop.f32.mrb[0].mxu0
    %2605 = vmatprep.mubr.f32.mxu0 0.0
    %2606 = vmatmul.mubr.f32.gmra.mrb[0].mxu0 %v2534
    %v2607 = vpop.f32.mrb[0].mxu0
    %v2608 = vadd.f32 0.0, %v2607
    %v2609 = vpop.f32.mrb[0].mxu0
    %2610 = vdwg.mxu0
    %v2611 = vadd.f32 %v2067, %v2603
    %v2612 = vadd.f32 %v2068, %v2608
    %v2613 = vadd.f32 %v2611, %v1509
    %v2614 = vadd.f32 %v2612, %v1510
    %s2615 = scalar_lea.vmem %s13, 1
    %v2616 = vld [vmem:[%s2615] sm:$0x1]
    %s2617 = scalar_lea.vmem %s14, 1
    %v2618 = vld [vmem:[%s2617] sm:$0x1]
    %v2619 = vsel %vm81, %v2613, 0.0
    %2620 = vadd.xlane.f32.xlu0 %v2619
    %v2621 = vpop.xlane.xlu0 %2620
    %v2622 = vsel %vm81, %v2614, 0.0
    %2623 = vadd.xlane.f32.xlu0 %v2622
    %v2624 = vpop.xlane.xlu0 %2623
    %v2625 = vmul.f32 %v2621, %v88
    %v2626 = vmul.f32 %v2624, %v88
    %v2627 = vsub.f32 %v2613, %v2625
    %v2628 = vsub.f32 %v2614, %v2626
    %v2629 = vmul.f32 %v2627, %v2627
    %v2630 = vmul.f32 %v2628, %v2628
    %v2631 = vsel %vm81, %v2629, 0.0
    %2632 = vadd.xlane.f32.xlu0 %v2631
    %v2633 = vpop.xlane.xlu0 %2632
    %v2634 = vsel %vm81, %v2630, 0.0
    %2635 = vadd.xlane.f32.xlu0 %v2634
    %v2636 = vpop.xlane.xlu0 %2635
    %v2637 = vmul.f32 %v2633, %v88
    %v2638 = vmul.f32 %v2636, %v88
    %v2639 = vadd.f32 %v2637, 1e-12
    %v2640 = vadd.f32 %v2638, 1e-12
    %v2641 = vrsqrt.pop %v2639
    %v2642 = vrsqrt.pop %v2640
    %v2643 = vmul.f32 %v2627, %v2641
    %v2644 = vmul.f32 %v2628, %v2642
    %v2646 = vlaneseq
    %v2647 = vshrl.u32 %v2646, 7
    %v2648 = vsub.s32 0, %v2647
    %v2649 = vrot.slane %v2616, %v2648
    %v2651 = vmul.f32 %v2643, %v2649
    %v2652 = vmul.f32 %v2644, %v2649
    %v2654 = vlaneseq
    %v2655 = vshrl.u32 %v2654, 7
    %v2656 = vsub.s32 0, %v2655
    %v2657 = vrot.slane %v2618, %v2656
    %v2659 = vadd.f32 %v2651, %v2657
    %v2660 = vadd.f32 %v2652, %v2657
    %s2661 = scalar_lea.vmem %s15, 32
    %v2662 = vld [vmem:[%s2661] sm:$0xff]
    %v2663 = vld [vmem:[%s2661 + $0x8] sm:$0xff]
    %v2664 = vld [vmem:[%s2661 + $0x10] sm:$0xff]
    %v2665 = vld [vmem:[%s2661 + $0x18] sm:$0xff]
    %s2666 = scalar_lea.vmem %s16, 1
    %v2667 = vld [vmem:[%s2666] sm:$0x1]
    %v2669 = vlaneseq
    %v2670 = vshrl.u32 %v2669, 7
    %v2671 = vsub.s32 0, %v2670
    %v2672 = vrot.slane %v2667, %v2671
    %v2675 = vsel %vm81, %v2659, 0
    %v2678 = vsel %vm81, %v2660, 0
    %2680 = vmatprep.subr.mxu0 0.0
    %2681 = vmatpush1.msra.mxu0 %v2662
    %2682 = vmatprep.subr.mxu0 0.0
    %2683 = vmatpush1.msra.mxu0 %v2663
    %2684 = vmatprep.subr.mxu0 0.0
    %2685 = vmatpush1.msra.mxu0 %v2664
    %2686 = vmatprep.subr.mxu0 0.0
    %2687 = vmatpush1.msra.mxu0 %v2665
    %2688 = vmatprep.subr.mxu0 0.0
    %2689 = vmatpush1.msra.mxu0 0.0
    %2690 = vmatprep.subr.mxu0 0.0
    %2691 = vmatpush1.msra.mxu0 0.0
    %2692 = vmatprep.subr.mxu0 0.0
    %2693 = vmatpush1.msra.mxu0 0.0
    %2694 = vmatprep.subr.mxu0 0.0
    %2695 = vmatpush1.msra.mxu0 0.0
    %2696 = vmatprep.subr.mxu0 0.0
    %2697 = vmatpush1.msra.mxu0 0.0
    %2698 = vmatprep.subr.mxu0 0.0
    %2699 = vmatpush1.msra.mxu0 0.0
    %2700 = vmatprep.subr.mxu0 0.0
    %2701 = vmatpush1.msra.mxu0 0.0
    %2702 = vmatprep.subr.mxu0 0.0
    %2703 = vmatpush1.msra.mxu0 0.0
    %2704 = vmatprep.subr.mxu0 0.0
    %2705 = vmatpush1.msra.mxu0 0.0
    %2706 = vmatprep.subr.mxu0 0.0
    %2707 = vmatpush1.msra.mxu0 0.0
    %2708 = vmatprep.subr.mxu0 0.0
    %2709 = vmatpush1.msra.mxu0 0.0
    %2710 = vmatprep.subr.mxu0 0.0
    %2711 = vmatpush1.msra.mxu0 0.0
    %2712 = vmatprep.subr.mxu0 0.0
    %2713 = vmatpush1.msra.mxu0 0.0
    %2714 = vmatprep.subr.mxu0 0.0
    %2715 = vmatpush1.msra.mxu0 0.0
    %2716 = vmatprep.subr.mxu0 0.0
    %2717 = vmatpush1.msra.mxu0 0.0
    %2718 = vmatprep.subr.mxu0 0.0
    %2719 = vmatpush1.msra.mxu0 0.0
    %2720 = vmatprep.subr.mxu0 0.0
    %2721 = vmatpush1.msra.mxu0 0.0
    %2722 = vmatprep.subr.mxu0 0.0
    %2723 = vmatpush1.msra.mxu0 0.0
    %2724 = vmatprep.subr.mxu0 0.0
    %2725 = vmatpush1.msra.mxu0 0.0
    %2726 = vmatprep.subr.mxu0 0.0
    %2727 = vmatpush1.msra.mxu0 0.0
    %2728 = vmatprep.subr.mxu0 0.0
    %2729 = vmatpush1.msra.mxu0 0.0
    %2730 = vmatprep.subr.mxu0 0.0
    %2731 = vmatpush1.msra.mxu0 0.0
    %2732 = vmatprep.subr.mxu0 0.0
    %2733 = vmatpush1.msra.mxu0 0.0
    %2734 = vmatprep.subr.mxu0 0.0
    %2735 = vmatpush1.msra.mxu0 0.0
    %2736 = vmatprep.subr.mxu0 0.0
    %2737 = vmatpush1.msra.mxu0 0.0
    %2738 = vmatprep.subr.mxu0 0.0
    %2739 = vmatpush1.msra.mxu0 0.0
    %2740 = vmatprep.subr.mxu0 0.0
    %2741 = vmatpush1.msra.mxu0 0.0
    %2742 = vmatprep.subr.mxu0 0.0
    %2743 = vmatpush1.msra.mxu0 0.0
    %2744 = vmatprep.mubr.f32.mxu0 0.0
    %2745 = vmatmul.mubr.f32.gmra.mrb[0].mxu0 %v2675
    %v2746 = vpop.f32.mrb[0].mxu0
    %v2747 = vadd.f32 %v2672, %v2746
    %v2748 = vpop.f32.mrb[0].mxu0
    %2749 = vmatprep.mubr.f32.mxu0 0.0
    %2750 = vmatmul.mubr.f32.gmra.mrb[0].mxu0 %v2678
    %v2751 = vpop.f32.mrb[0].mxu0
    %v2752 = vadd.f32 %v2672, %v2751
    %v2753 = vpop.f32.mrb[0].mxu0
    %2754 = vdwg.mxu0
    %v2755 = vmul.f32 %v2747, 0.5
    %v2756 = vmul.f32 %v2752, 0.5
    %v2757 = vmul.f32 %v2747, 0.70710677
    %v2758 = vmul.f32 %v2752, 0.70710677
    %v2759 = verf.f32.pop %v2757
    %v2760 = verf.f32.pop %v2758
    %v2761 = vadd.f32 %v2759, 1.0
    %v2762 = vadd.f32 %v2760, 1.0
    %v2763 = vmul.f32 %v2755, %v2761
    %v2764 = vmul.f32 %v2756, %v2762
    %s2765 = scalar_lea.vmem %s17, 64
    %v2766 = vld [vmem:[%s2765] sm:$0xff]
    %v2767 = vld [vmem:[%s2765 + $0x8] sm:$0xff]
    %v2768 = vld [vmem:[%s2765 + $0x10] sm:$0xff]
    %v2769 = vld [vmem:[%s2765 + $0x18] sm:$0xff]
    %v2770 = vld [vmem:[%s2765 + $0x20] sm:$0xff]
    %v2771 = vld [vmem:[%s2765 + $0x28] sm:$0xff]
    %v2772 = vld [vmem:[%s2765 + $0x30] sm:$0xff]
    %v2773 = vld [vmem:[%s2765 + $0x38] sm:$0xff]
    %s2774 = scalar_lea.vmem %s18, 1
    %v2775 = vld [vmem:[%s2774] sm:$0x1]
    %v2777 = vlaneseq
    %v2778 = vshrl.u32 %v2777, 7
    %v2779 = vsub.s32 0, %v2778
    %v2780 = vrot.slane %v2775, %v2779
    %v2783 = vsel %vm1383, %v2763, 0
    %v2786 = vsel %vm1383, %v2764, 0
    %2788 = vmatprep.subr.mxu0 0.0
    %2789 = vmatpush1.msra.mxu0 %v2766
    %2790 = vmatprep.subr.mxu0 0.0
    %2791 = vmatpush1.msra.mxu0 %v2767
    %2792 = vmatprep.subr.mxu0 0.0
    %2793 = vmatpush1.msra.mxu0 %v2768
    %2794 = vmatprep.subr.mxu0 0.0
    %2795 = vmatpush1.msra.mxu0 %v2769
    %2796 = vmatprep.subr.mxu0 0.0
    %2797 = vmatpush1.msra.mxu0 %v2770
    %2798 = vmatprep.subr.mxu0 0.0
    %2799 = vmatpush1.msra.mxu0 %v2771
    %2800 = vmatprep.subr.mxu0 0.0
    %2801 = vmatpush1.msra.mxu0 %v2772
    %2802 = vmatprep.subr.mxu0 0.0
    %2803 = vmatpush1.msra.mxu0 %v2773
    %2804 = vmatprep.subr.mxu0 0.0
    %2805 = vmatpush1.msra.mxu0 0.0
    %2806 = vmatprep.subr.mxu0 0.0
    %2807 = vmatpush1.msra.mxu0 0.0
    %2808 = vmatprep.subr.mxu0 0.0
    %2809 = vmatpush1.msra.mxu0 0.0
    %2810 = vmatprep.subr.mxu0 0.0
    %2811 = vmatpush1.msra.mxu0 0.0
    %2812 = vmatprep.subr.mxu0 0.0
    %2813 = vmatpush1.msra.mxu0 0.0
    %2814 = vmatprep.subr.mxu0 0.0
    %2815 = vmatpush1.msra.mxu0 0.0
    %2816 = vmatprep.subr.mxu0 0.0
    %2817 = vmatpush1.msra.mxu0 0.0
    %2818 = vmatprep.subr.mxu0 0.0
    %2819 = vmatpush1.msra.mxu0 0.0
    %2820 = vmatprep.subr.mxu0 0.0
    %2821 = vmatpush1.msra.mxu0 0.0
    %2822 = vmatprep.subr.mxu0 0.0
    %2823 = vmatpush1.msra.mxu0 0.0
    %2824 = vmatprep.subr.mxu0 0.0
    %2825 = vmatpush1.msra.mxu0 0.0
    %2826 = vmatprep.subr.mxu0 0.0
    %2827 = vmatpush1.msra.mxu0 0.0
    %2828 = vmatprep.subr.mxu0 0.0
    %2829 = vmatpush1.msra.mxu0 0.0
    %2830 = vmatprep.subr.mxu0 0.0
    %2831 = vmatpush1.msra.mxu0 0.0
    %2832 = vmatprep.subr.mxu0 0.0
    %2833 = vmatpush1.msra.mxu0 0.0
    %2834 = vmatprep.subr.mxu0 0.0
    %2835 = vmatpush1.msra.mxu0 0.0
    %2836 = vmatprep.subr.mxu0 0.0
    %2837 = vmatpush1.msra.mxu0 0.0
    %2838 = vmatprep.subr.mxu0 0.0
    %2839 = vmatpush1.msra.mxu0 0.0
    %2840 = vmatprep.subr.mxu0 0.0
    %2841 = vmatpush1.msra.mxu0 0.0
    %2842 = vmatprep.subr.mxu0 0.0
    %2843 = vmatpush1.msra.mxu0 0.0
    %2844 = vmatprep.subr.mxu0 0.0
    %2845 = vmatpush1.msra.mxu0 0.0
    %2846 = vmatprep.subr.mxu0 0.0
    %2847 = vmatpush1.msra.mxu0 0.0
    %2848 = vmatprep.subr.mxu0 0.0
    %2849 = vmatpush1.msra.mxu0 0.0
    %2850 = vmatprep.subr.mxu0 0.0
    %2851 = vmatpush1.msra.mxu0 0.0
    %2852 = vmatprep.mubr.f32.mxu0 0.0
    %2853 = vmatmul.mubr.f32.gmra.mrb[0].mxu0 %v2783
    %v2854 = vpop.f32.mrb[0].mxu0
    %v2855 = vadd.f32 %v2780, %v2854
    %v2856 = vpop.f32.mrb[0].mxu0
    %2857 = vmatprep.mubr.f32.mxu0 0.0
    %2858 = vmatmul.mubr.f32.gmra.mrb[0].mxu0 %v2786
    %v2859 = vpop.f32.mrb[0].mxu0
    %v2860 = vadd.f32 %v2780, %v2859
    %v2861 = vpop.f32.mrb[0].mxu0
    %2862 = vdwg.mxu0
    %v2863 = vadd.f32 %v2855, %v2659
    %v2864 = vadd.f32 %v2860, %v2660
    %s2865 = scalar_lea.vmem %s19, 1
    %v2866 = vld [vmem:[%s2865] sm:$0x1]
    %s2867 = scalar_lea.vmem %s20, 1
    %v2868 = vld [vmem:[%s2867] sm:$0x1]
    %v2869 = vsel %vm81, %v2863, 0.0
    %2870 = vadd.xlane.f32.xlu0 %v2869
    %v2871 = vpop.xlane.xlu0 %2870
    %v2872 = vsel %vm81, %v2864, 0.0
    %2873 = vadd.xlane.f32.xlu0 %v2872
    %v2874 = vpop.xlane.xlu0 %2873
    %v2875 = vmul.f32 %v2871, %v88
    %v2876 = vmul.f32 %v2874, %v88
    %v2877 = vsub.f32 %v2863, %v2875
    %v2878 = vsub.f32 %v2864, %v2876
    %v2879 = vmul.f32 %v2877, %v2877
    %v2880 = vmul.f32 %v2878, %v2878
    %v2881 = vsel %vm81, %v2879, 0.0
    %2882 = vadd.xlane.f32.xlu0 %v2881
    %v2883 = vpop.xlane.xlu0 %2882
    %v2884 = vsel %vm81, %v2880, 0.0
    %2885 = vadd.xlane.f32.xlu0 %v2884
    %v2886 = vpop.xlane.xlu0 %2885
    %v2887 = vmul.f32 %v2883, %v88
    %v2888 = vmul.f32 %v2886, %v88
    %v2889 = vadd.f32 %v2887, 1e-12
    %v2890 = vadd.f32 %v2888, 1e-12
    %v2891 = vrsqrt.pop %v2889
    %v2892 = vrsqrt.pop %v2890
    %v2893 = vmul.f32 %v2877, %v2891
    %v2894 = vmul.f32 %v2878, %v2892
    %v2896 = vlaneseq
    %v2897 = vshrl.u32 %v2896, 7
    %v2898 = vsub.s32 0, %v2897
    %v2899 = vrot.slane %v2866, %v2898
    %v2901 = vmul.f32 %v2893, %v2899
    %v2902 = vmul.f32 %v2894, %v2899
    %v2904 = vlaneseq
    %v2905 = vshrl.u32 %v2904, 7
    %v2906 = vsub.s32 0, %v2905
    %v2907 = vrot.slane %v2868, %v2906
    %v2909 = vadd.f32 %v2901, %v2907
    %v2910 = vadd.f32 %v2902, %v2907
    %v2911 = vld [vmem:[%s2] sm:$0x3]
    %v2913 = vsel %vm396, %v2911, 0
    %2915 = vmatprep.subr.mxu0 0.0
    %2916 = vmatpush1.msra.mxu0 %v2909
    %2917 = vmatprep.subr.mxu0 0.0
    %2918 = vmatpush1.msra.mxu0 %v2910
    %2919 = vmatprep.subr.mxu0 0.0
    %2920 = vmatpush1.msra.mxu0 0.0
    %2921 = vmatprep.subr.mxu0 0.0
    %2922 = vmatpush1.msra.mxu0 0.0
    %2923 = vmatprep.subr.mxu0 0.0
    %2924 = vmatpush1.msra.mxu0 0.0
    %2925 = vmatprep.subr.mxu0 0.0
    %2926 = vmatpush1.msra.mxu0 0.0
    %2927 = vmatprep.subr.mxu0 0.0
    %2928 = vmatpush1.msra.mxu0 0.0
    %2929 = vmatprep.subr.mxu0 0.0
    %2930 = vmatpush1.msra.mxu0 0.0
    %2931 = vmatprep.subr.mxu0 0.0
    %2932 = vmatpush1.msra.mxu0 0.0
    %2933 = vmatprep.subr.mxu0 0.0
    %2934 = vmatpush1.msra.mxu0 0.0
    %2935 = vmatprep.subr.mxu0 0.0
    %2936 = vmatpush1.msra.mxu0 0.0
    %2937 = vmatprep.subr.mxu0 0.0
    %2938 = vmatpush1.msra.mxu0 0.0
    %2939 = vmatprep.subr.mxu0 0.0
    %2940 = vmatpush1.msra.mxu0 0.0
    %2941 = vmatprep.subr.mxu0 0.0
    %2942 = vmatpush1.msra.mxu0 0.0
    %2943 = vmatprep.subr.mxu0 0.0
    %2944 = vmatpush1.msra.mxu0 0.0
    %2945 = vmatprep.subr.mxu0 0.0
    %2946 = vmatpush1.msra.mxu0 0.0
    %2947 = vmatprep.subr.mxu0 0.0
    %2948 = vmatpush1.msra.mxu0 0.0
    %2949 = vmatprep.subr.mxu0 0.0
    %2950 = vmatpush1.msra.mxu0 0.0
    %2951 = vmatprep.subr.mxu0 0.0
    %2952 = vmatpush1.msra.mxu0 0.0
    %2953 = vmatprep.subr.mxu0 0.0
    %2954 = vmatpush1.msra.mxu0 0.0
    %2955 = vmatprep.subr.mxu0 0.0
    %2956 = vmatpush1.msra.mxu0 0.0
    %2957 = vmatprep.subr.mxu0 0.0
    %2958 = vmatpush1.msra.mxu0 0.0
    %2959 = vmatprep.subr.mxu0 0.0
    %2960 = vmatpush1.msra.mxu0 0.0
    %2961 = vmatprep.subr.mxu0 0.0
    %2962 = vmatpush1.msra.mxu0 0.0
    %2963 = vmatprep.subr.mxu0 0.0
    %2964 = vmatpush1.msra.mxu0 0.0
    %2965 = vmatprep.subr.mxu0 0.0
    %2966 = vmatpush1.msra.mxu0 0.0
    %2967 = vmatprep.subr.mxu0 0.0
    %2968 = vmatpush1.msra.mxu0 0.0
    %2969 = vmatprep.subr.mxu0 0.0
    %2970 = vmatpush1.msra.mxu0 0.0
    %2971 = vmatprep.subr.mxu0 0.0
    %2972 = vmatpush1.msra.mxu0 0.0
    %2973 = vmatprep.subr.mxu0 0.0
    %2974 = vmatpush1.msra.mxu0 0.0
    %2975 = vmatprep.subr.mxu0 0.0
    %2976 = vmatpush1.msra.mxu0 0.0
    %2977 = vmatprep.subr.mxu0 0.0
    %2978 = vmatpush1.msra.mxu0 0.0
    %2979 = vmatprep.mubr.f32.mxu0 0.0
    %2980 = vmatmul.mubr.f32.gmra.mrb[0].mxu0 %v2913
    %v2981 = vpop.f32.mrb[0].mxu0
    %v2982 = vadd.f32 0.0, %v2981
    %v2983 = vpop.f32.mrb[0].mxu0
    %2984 = vdwg.mxu0
    %v2985 = vld [vmem:[%s21] sm:$0xff]
    %v2986 = vld [vmem:[%s21 + $0x8] sm:$0xff]
    %v2987 = vld [vmem:[%s21 + $0x10] sm:$0xff]
    %v2988 = vld [vmem:[%s21 + $0x18] sm:$0xff]
    %v2989 = vld [vmem:[%s22] sm:$0x1]
    %v2991 = vlaneseq
    %v2992 = vshrl.u32 %v2991, 7
    %v2993 = vsub.s32 0, %v2992
    %v2994 = vrot.slane %v2989, %v2993
    %v2997 = vsel %vm81, %v2982, 0
    %2999 = vmatprep.subr.mxu0 0.0
    %3000 = vmatpush1.msra.mxu0 %v2985
    %3001 = vmatprep.subr.mxu0 0.0
    %3002 = vmatpush1.msra.mxu0 %v2986
    %3003 = vmatprep.subr.mxu0 0.0
    %3004 = vmatpush1.msra.mxu0 %v2987
    %3005 = vmatprep.subr.mxu0 0.0
    %3006 = vmatpush1.msra.mxu0 %v2988
    %3007 = vmatprep.subr.mxu0 0.0
    %3008 = vmatpush1.msra.mxu0 0.0
    %3009 = vmatprep.subr.mxu0 0.0
    %3010 = vmatpush1.msra.mxu0 0.0
    %3011 = vmatprep.subr.mxu0 0.0
    %3012 = vmatpush1.msra.mxu0 0.0
    %3013 = vmatprep.subr.mxu0 0.0
    %3014 = vmatpush1.msra.mxu0 0.0
    %3015 = vmatprep.subr.mxu0 0.0
    %3016 = vmatpush1.msra.mxu0 0.0
    %3017 = vmatprep.subr.mxu0 0.0
    %3018 = vmatpush1.msra.mxu0 0.0
    %3019 = vmatprep.subr.mxu0 0.0
    %3020 = vmatpush1.msra.mxu0 0.0
    %3021 = vmatprep.subr.mxu0 0.0
    %3022 = vmatpush1.msra.mxu0 0.0
    %3023 = vmatprep.subr.mxu0 0.0
    %3024 = vmatpush1.msra.mxu0 0.0
    %3025 = vmatprep.subr.mxu0 0.0
    %3026 = vmatpush1.msra.mxu0 0.0
    %3027 = vmatprep.subr.mxu0 0.0
    %3028 = vmatpush1.msra.mxu0 0.0
    %3029 = vmatprep.subr.mxu0 0.0
    %3030 = vmatpush1.msra.mxu0 0.0
    %3031 = vmatprep.subr.mxu0 0.0
    %3032 = vmatpush1.msra.mxu0 0.0
    %3033 = vmatprep.subr.mxu0 0.0
    %3034 = vmatpush1.msra.mxu0 0.0
    %3035 = vmatprep.subr.mxu0 0.0
    %3036 = vmatpush1.msra.mxu0 0.0
    %3037 = vmatprep.subr.mxu0 0.0
    %3038 = vmatpush1.msra.mxu0 0.0
    %3039 = vmatprep.subr.mxu0 0.0
    %3040 = vmatpush1.msra.mxu0 0.0
    %3041 = vmatprep.subr.mxu0 0.0
    %3042 = vmatpush1.msra.mxu0 0.0
    %3043 = vmatprep.subr.mxu0 0.0
    %3044 = vmatpush1.msra.mxu0 0.0
    %3045 = vmatprep.subr.mxu0 0.0
    %3046 = vmatpush1.msra.mxu0 0.0
    %3047 = vmatprep.subr.mxu0 0.0
    %3048 = vmatpush1.msra.mxu0 0.0
    %3049 = vmatprep.subr.mxu0 0.0
    %3050 = vmatpush1.msra.mxu0 0.0
    %3051 = vmatprep.subr.mxu0 0.0
    %3052 = vmatpush1.msra.mxu0 0.0
    %3053 = vmatprep.subr.mxu0 0.0
    %3054 = vmatpush1.msra.mxu0 0.0
    %3055 = vmatprep.subr.mxu0 0.0
    %3056 = vmatpush1.msra.mxu0 0.0
    %3057 = vmatprep.subr.mxu0 0.0
    %3058 = vmatpush1.msra.mxu0 0.0
    %3059 = vmatprep.subr.mxu0 0.0
    %3060 = vmatpush1.msra.mxu0 0.0
    %3061 = vmatprep.subr.mxu0 0.0
    %3062 = vmatpush1.msra.mxu0 0.0
    %3063 = vmatprep.mubr.f32.mxu0 0.0
    %3064 = vmatmul.mubr.f32.gmra.mrb[0].mxu0 %v2997
    %v3065 = vpop.f32.mrb[0].mxu0
    %v3066 = vadd.f32 %v2994, %v3065
    %v3067 = vpop.f32.mrb[0].mxu0
    %3068 = vdwg.mxu0
    %v3069 = vtanh.pop %v3066
    %vm3070 = vcmask 254976
    %3071 = vst.msk [vmem:[#allocation2] sm:$0x3] %vm3070, %v3069
    // Predicated region
    $region94: #{bert_forward.1} parent=1 // pred_check
      _
    $region95: #{bert_forward.1} parent=1 // pred_check_branch
      %3073 = sbr.rel (0) target = $region97
    $region96: #{bert_forward.1} parent=1 // pred_region
      %s3075 = ssub.s32 32, 32
      %3076 = vsyncadd [#allocation3], %s3075
      %s3078 = sshll.u32 [#allocation2], 4
      %s3079 = int_to_ptr.vmem [resolvable:$true] %s3078
      %3081 = dma.vmem_to_hbm [thread:$0]  %s3079, 32, %s23, [#allocation3]
    $region97: #{bert_forward.1} parent=1 // pred_fallthru
      _
    // Predicated region
    $region98: #{bert_forward.1} parent=1 // pred_check
      _
    $region99: #{bert_forward.1} parent=1 // pred_check_branch
      %3083 = sbr.rel (0) target = $region101
    $region100: #{bert_forward.1} parent=1 // pred_region
      %3084 = dma.done [#allocation3], 32
    $region101: #{bert_forward.1} parent=1 // pred_fallthru
      _
    %3085 = vsyncpa [#allocation3], 1

</llo_original>
